<compile_context>
chip_gen: v5e
topology: v5e:2x2
jax: 0.10.0
libtpu: 0.0.40
codegen_flags: <defaults>
</compile_context>

<pallas_src>
import numpy as np
import jax
import jax.numpy as jnp
from jax.experimental import pallas as pl
from jax.experimental.pallas import tpu as pltpu

# ---------------- small, TPU-friendly config ----------------
B = 16                          # batch (multiple of the 8-row batch tile)
B_TILE = 8                      # batch tile per grid step (= f32 sublane tile)
T = 8                           # sequence length (== max_len)
D_L, D_A, D_V = 16, 8, 8        # input dims  (config['input_dims'])
DH_L, DH_A, DH_V = 32, 16, 16   # hidden dims (config['h_dims'])
DH_ALL = DH_L + DH_A + DH_V     # 64 (fused hidden/cell width, layout [l|a|v])
Z_DIM = 32                      # config['z_dim']
K = 4                           # config['K']
FINAL_DIMS = 16                 # config['final_dims']
CAT_SHAPE = DH_L + DH_V + DH_A  # config['cat_shape'] = 64
Z_FC1 = 32                      # config['z_fc1']
Z_FC2 = 32                      # config['z_fc2']
D_IN = D_L + D_A + D_V          # 32
D_AV = D_A + D_V                # 16

GATE_COLS = 512                 # LSTHM gates: i|f|o|g each in its own 128-lane group (lanes 0:64 used)
CROSS_COLS = 512                # cross-share: factor k in lane group k (lanes 0:96 used)
ZG2_COLS = 256                  # z_hat pre-act at lanes 0:32, gamma pre-act at lanes 128:160

# ---------------- packed weight-slab layout (row offsets multiples of 8, col starts 128-aligned) ----
SLAB_COLS = 512
R_WX = 0        # rows   0: 32  LSTHM x-part   (x_l 0:16 | x_a 16:24 | x_v 24:32)   cols 0:512
R_WH = 32       # rows  32: 96  LSTHM h-part   (h_l 32:64 | h_a 64:80 | h_v 80:96)  cols 0:512
R_WZ = 96       # rows  96:128  LSTHM z-part                                        cols 0:512
R_CROSS = 128   # rows 128:192  fused CrossShareUnit1+2                             cols 0:512
R_ZG = 192      # rows 192:256  ZG1 cols 0:64 | ZG2 cols 128:384 | gate rows 192:208 cols 384:400
C_ZG1 = 0
C_ZG2 = 128
C_GATE = 384
R_HEAD = 256    # rows 256:288  Map_pred: n1 cols 0:16 (32 rows), n2 cols 128:129 (16 rows)
C_PW1 = 0
C_PW2 = 128
R_B_LSTHM = 288   # row 288 cols 0:512
R_B_GATE = 289    # row 289 cols 0:16
R_B_ZG1 = 290     # row 290 cols 0:64
R_B_ZG2 = 291     # row 291 cols 0:256 (z_hat bias 0:32, gamma bias 128:160)
R_PB1 = 292       # row 292 cols 0:16
R_PB2 = 293       # row 293 cols 0:1
SLAB_ROWS = 296   # padded to a multiple of 8


# ---------------- shared math helpers (reference) ----------------
def _sigmoid(x):
    return jax.nn.sigmoid(x)


def _softmax_lastdim(x):
    m = jnp.max(x, axis=-1, keepdims=True)
    e = jnp.exp(x - m)
    return e / jnp.sum(e, axis=-1, keepdims=True)


def _lsthm_step(x_t, c, h, z, wx, wh, wz, b, dh):
    """LSTHM cell: LSTM gates driven by input x, previous h, and hybrid input z."""
    gates = (jnp.dot(x_t, wx, preferred_element_type=jnp.float32)
             + jnp.dot(h, wh, preferred_element_type=jnp.float32)
             + jnp.dot(z, wz, preferred_element_type=jnp.float32)
             + b)
    i = _sigmoid(gates[:, 0 * dh:1 * dh])
    f = _sigmoid(gates[:, 1 * dh:2 * dh])
    o = _sigmoid(gates[:, 2 * dh:3 * dh])
    g = jnp.tanh(gates[:, 3 * dh:4 * dh])
    c_new = f * c + i * g
    h_new = o * jnp.tanh(c_new)
    return c_new, h_new


def _cross_share(h1, h2, w1, w2, k, d1, d2):
    """K-factor bilinear cross-modal feature attention (reference formulation)."""
    s1 = jnp.zeros((h1.shape[0], d1), jnp.float32)
    s2 = jnp.zeros((h2.shape[0], d2), jnp.float32)
    for kk in range(k):
        s1 = s1 + jnp.tanh(jnp.dot(h2, w1[kk * d2:(kk + 1) * d2, :],
                                   preferred_element_type=jnp.float32))
        s2 = s2 + jnp.tanh(jnp.dot(h1, w2[kk * d1:(kk + 1) * d1, :],
                                   preferred_element_type=jnp.float32))
    att1 = _softmax_lastdim(s1 / k)
    att2 = _softmax_lastdim(s2 / k)
    return h1 * att1, h2 * att2, att1, att2


# ---------------- Pallas kernel ----------------
def net_kernel(x_ref, w_ref, y_ref, gx_ref):
    # x_ref: (T*BT, 32) for this batch tile (t-major, b-minor)
    # w_ref: (SLAB_ROWS, 512) packed weight slab
    # y_ref: (BT, 1)
    # gx_ref: (T*BT, 512) VMEM scratch for the precomputed x-dependent gate terms
    BT = y_ref.shape[0]
    Tn = x_ref.shape[0] // BT

    # ---- loop-invariant bias broadcasts (hoisted) ----
    b_zg1 = jnp.broadcast_to(w_ref[R_B_ZG1:R_B_ZG1 + 1, 0:CAT_SHAPE], (BT, CAT_SHAPE))
    b_zg2 = jnp.broadcast_to(w_ref[R_B_ZG2:R_B_ZG2 + 1, 0:ZG2_COLS], (BT, ZG2_COLS))

    # ---- precompute everything that depends only on x (off the serial critical path) ----
    x_l = x_ref[:, 0:D_L]                       # (T*BT, 16)
    x_av = x_ref[:, D_L:D_IN]                   # (T*BT, 16) = [x_a | x_v]
    b_gate = jnp.broadcast_to(w_ref[R_B_GATE:R_B_GATE + 1, 0:D_AV], (Tn * BT, D_AV))
    g_av = jax.nn.sigmoid(
        jnp.dot(x_av, w_ref[R_ZG:R_ZG + D_AV, C_GATE:C_GATE + D_AV],
                preferred_element_type=jnp.float32) + b_gate)
    xg = jnp.concatenate([x_l, x_av * g_av], axis=-1)          # (T*BT, 32) gated input
    b_lsthm = jnp.broadcast_to(w_ref[R_B_LSTHM:R_B_LSTHM + 1, 0:GATE_COLS],
                               (Tn * BT, GATE_COLS))
    # x-part of the fused 3-way LSTHM (all timesteps at once) + bias folded in
    gx_ref[...] = (jnp.dot(xg, w_ref[R_WX:R_WX + D_IN, 0:GATE_COLS],
                           preferred_element_type=jnp.float32) + b_lsthm)

    # recurrent state stays in vregs as (unrolled) loop carries
    c_all = jnp.zeros((BT, DH_ALL), jnp.float32)   # [c_l | c_a | c_v]
    h_all = jnp.zeros((BT, DH_ALL), jnp.float32)   # [h_l | h_a | h_v]
    z = jnp.zeros((BT, Z_DIM), jnp.float32)

    inv_k = jnp.float32(1.0 / K)

    for t in range(Tn):   # fully unrolled at trace time
        gx_t = gx_ref[t * BT:(t + 1) * BT, :]      # precomputed x@Wx + bias  (BT, 512)

        # fused 3-way LSTHM, recurrent part only: (BT,64)@(64,512) + (BT,32)@(32,512)
        gates = (gx_t
                 + jnp.dot(h_all, w_ref[R_WH:R_WH + DH_ALL, 0:GATE_COLS],
                           preferred_element_type=jnp.float32)
                 + jnp.dot(z, w_ref[R_WZ:R_WZ + Z_DIM, 0:GATE_COLS],
                           preferred_element_type=jnp.float32))
        # each gate group is 128-lane aligned with c_all/h_all -> pure-VPU cell update
        i_g = jax.nn.sigmoid(gates[:, 0:64])
        f_g = jax.nn.sigmoid(gates[:, 128:192])
        o_g = jax.nn.sigmoid(gates[:, 256:320])
        g_g = jnp.tanh(gates[:, 384:448])
        c_all = f_g * c_all + i_g * g_g
        h_all = o_g * jnp.tanh(c_all)

        # fused CrossShareUnit 1 & 2: one (BT,64)@(64,512); K-sum = 3 full-vreg adds
        tc = jnp.tanh(jnp.dot(h_all, w_ref[R_CROSS:R_CROSS + DH_ALL, 0:CROSS_COLS],
                              preferred_element_type=jnp.float32))   # (BT, 512)
        s = (tc[:, 0:128] + tc[:, 128:256] + tc[:, 256:384] + tc[:, 384:512]) * inv_k
        # blocks: s_l1 0:32 | s_a 32:48 | s_v 48:64 | s_l2 64:96  (0:64 aligned with h_all)
        # logits are means of tanh outputs (|.| <= 1): exp is safe without max-subtraction
        e_head = jnp.exp(s[:, 0:64])
        e_l2 = jnp.exp(s[:, 64:96])
        r_l1 = pl.reciprocal(jnp.sum(e_head[:, 0:32], axis=-1, keepdims=True), approx=True)
        r_a = pl.reciprocal(jnp.sum(e_head[:, 32:48], axis=-1, keepdims=True), approx=True)
        r_v = pl.reciprocal(jnp.sum(e_head[:, 48:64], axis=-1, keepdims=True), approx=True)
        r_l2 = pl.reciprocal(jnp.sum(e_l2, axis=-1, keepdims=True), approx=True)
        att_l = e_head[:, 0:32] * (0.7 * r_l1) + e_l2 * (0.3 * r_l2)
        att_a = e_head[:, 32:48] * r_a
        att_v = e_head[:, 48:64] * r_v
        # hidden in [l|a|v] order (ZG1 weight rows are permuted accordingly at pack time)
        hc = h_all * jnp.concatenate([att_l, att_a, att_v], axis=-1)

        # fused Z_Hat / gamma MLPs (dropout = identity in eval)
        fc1 = jnp.dot(hc, w_ref[R_ZG:R_ZG + CAT_SHAPE, C_ZG1:C_ZG1 + CAT_SHAPE],
                      preferred_element_type=jnp.float32) + b_zg1
        fc2 = jnp.dot(fc1, w_ref[R_ZG:R_ZG + CAT_SHAPE, C_ZG2:C_ZG2 + ZG2_COLS],
                      preferred_element_type=jnp.float32) + b_zg2
        # z_hat pre-act at lanes 0:32, gamma pre-act at lanes 128:160 (both lane-offset 0)
        z = jax.nn.sigmoid(fc2[:, 128:160]) * jnp.tanh(fc2[:, 0:32])

    # Map_pred head on the final Z
    p_b1 = jnp.broadcast_to(w_ref[R_PB1:R_PB1 + 1, 0:FINAL_DIMS], (BT, FINAL_DIMS))
    p_b2 = jnp.broadcast_to(w_ref[R_PB2:R_PB2 + 1, 0:1], (BT, 1))
    y1 = jnp.maximum(
        jnp.dot(z, w_ref[R_HEAD:R_HEAD + Z_DIM, C_PW1:C_PW1 + FINAL_DIMS],
                preferred_element_type=jnp.float32) + p_b1, 0.0)
    y_ref[...] = (jnp.dot(y1, w_ref[R_HEAD:R_HEAD + FINAL_DIMS, C_PW2:C_PW2 + 1],
                          preferred_element_type=jnp.float32) + p_b2).astype(y_ref.dtype)


# ---------------- host-side weight packing ----------------
def pack_params(params):
    (gv_w, gv_b, ga_w, ga_b,
     wl_x, wl_h, wl_z, wl_b,
     wa_x, wa_h, wa_z, wa_b,
     wv_x, wv_h, wv_z, wv_b,
     cs1_wl, cs1_wv, cs2_wl, cs2_wa,
     zh_w1, zh_b1, zh_w2, zh_b2,
     gm_w1, gm_b1, gm_w2, gm_b2,
     p_w1, p_b1, p_w2, p_b2) = [np.asarray(p, np.float32) for p in params]

    slab = np.zeros((SLAB_ROWS, SLAB_COLS), np.float32)

    # --- fused LSTHM weight: rows = [x_l|x_a|x_v | h_l|h_a|h_v | z]; gate group g (i,f,o,g)
    #     at cols g*128, modality payload [l|a|v] in lanes 0:64 of the group ---
    def put_lsthm(wx, wh, wz, wb, dh, rx0, rh0, lane0):
        for gi in range(4):                      # i, f, o, g
            c0 = gi * 128 + lane0
            slab[rx0:rx0 + wx.shape[0], c0:c0 + dh] = wx[:, gi * dh:(gi + 1) * dh]
            slab[rh0:rh0 + dh,          c0:c0 + dh] = wh[:, gi * dh:(gi + 1) * dh]
            slab[R_WZ:R_WZ + Z_DIM,     c0:c0 + dh] = wz[:, gi * dh:(gi + 1) * dh]
            slab[R_B_LSTHM, c0:c0 + dh] = wb[0, gi * dh:(gi + 1) * dh]

    put_lsthm(wl_x, wl_h, wl_z, wl_b, DH_L, 0,  R_WH,      0)    # language
    put_lsthm(wa_x, wa_h, wa_z, wa_b, DH_A, 16, R_WH + 32, 32)   # acoustic
    put_lsthm(wv_x, wv_h, wv_z, wv_b, DH_V, 24, R_WH + 48, 48)   # visual

    # --- fused CrossShareUnit weight: rows = h_all = [h_l|h_a|h_v]; factor k at cols k*128,
    #     per-factor payload [s_l1 0:32 | s_a 32:48 | s_v 48:64 | s_l2 64:96] ---
    for k in range(K):
        base = k * 128
        slab[R_CROSS + 48:R_CROSS + 64, base + 0:base + 32] = cs1_wl[k * DH_V:(k + 1) * DH_V, :]   # h_v -> s_l1
        slab[R_CROSS + 0:R_CROSS + 32,  base + 32:base + 48] = cs2_wa[k * DH_L:(k + 1) * DH_L, :]  # h_l -> s_a
        slab[R_CROSS + 0:R_CROSS + 32,  base + 48:base + 64] = cs1_wv[k * DH_L:(k + 1) * DH_L, :]  # h_l -> s_v
        slab[R_CROSS + 32:R_CROSS + 48, base + 64:base + 96] = cs2_wl[k * DH_A:(k + 1) * DH_A, :]  # h_a -> s_l2

    # --- fused Z_Hat / gamma fc1 (rows permuted: kernel h_cat is [l|a|v], torch is [l|v|a]) ---
    perm = np.concatenate([np.arange(0, 32), np.arange(48, 64), np.arange(32, 48)])
    slab[R_ZG:R_ZG + CAT_SHAPE, C_ZG1:C_ZG1 + Z_FC1] = zh_w1[perm]
    slab[R_ZG:R_ZG + CAT_SHAPE, C_ZG1 + Z_FC1:C_ZG1 + 64] = gm_w1[perm]
    slab[R_B_ZG1, 0:Z_FC1] = zh_b1[0]
    slab[R_B_ZG1, Z_FC1:64] = gm_b1[0]
    # --- fc2: z_hat output at lanes 0:32, gamma output at lanes 128:160 of the ZG2 block ---
    slab[R_ZG:R_ZG + Z_FC1,        C_ZG2 + 0:C_ZG2 + Z_DIM] = zh_w2
    slab[R_ZG + Z_FC1:R_ZG + 64,   C_ZG2 + 128:C_ZG2 + 128 + Z_DIM] = gm_w2
    slab[R_B_ZG2, 0:Z_DIM] = zh_b2[0]
    slab[R_B_ZG2, 128:128 + Z_DIM] = gm_b2[0]

    # --- block-diagonal Acoustic|Vision input gate ---
    slab[R_ZG:R_ZG + D_A,        C_GATE:C_GATE + D_A] = ga_w
    slab[R_ZG + D_A:R_ZG + D_AV, C_GATE + D_A:C_GATE + D_AV] = gv_w
    slab[R_B_GATE, 0:D_A] = ga_b[0]
    slab[R_B_GATE, D_A:D_AV] = gv_b[0]

    # --- Map_pred head ---
    slab[R_HEAD:R_HEAD + Z_DIM,      C_PW1:C_PW1 + FINAL_DIMS] = p_w1
    slab[R_HEAD:R_HEAD + FINAL_DIMS, C_PW2:C_PW2 + 1] = p_w2
    slab[R_PB1, 0:FINAL_DIMS] = p_b1[0]
    slab[R_PB2, 0:1] = p_b2[0]

    return jnp.asarray(slab)


# ---------------- wrapper ----------------
def net_forward(x, wslab):
    Bx, Tx, Dx = x.shape
    assert Bx % B_TILE == 0
    nb = Bx // B_TILE
    # host-side relayout: (B,T,D) -> (nb*T*B_TILE, D), tile-major / t-major / b-minor, so
    # each batch-tile is one contiguous BlockSpec block and each timestep within it is one
    # contiguous sublane-aligned row group.
    x_r = x.reshape(nb, B_TILE, Tx, Dx).transpose(0, 2, 1, 3).reshape(nb * Tx * B_TILE, Dx)

    grid_spec = pltpu.PrefetchScalarGridSpec(
        num_scalar_prefetch=0,
        grid=(nb,),
        in_specs=[pl.BlockSpec((Tx * B_TILE, Dx), lambda i: (i, 0)),
                  # constant index -> the weight slab is DMA'd once, not per batch tile
                  pl.BlockSpec((SLAB_ROWS, SLAB_COLS), lambda i: (0, 0))],
        out_specs=pl.BlockSpec((B_TILE, 1), lambda i: (i, 0)),
        scratch_shapes=[pltpu.VMEM((Tx * B_TILE, SLAB_COLS), jnp.float32)],
    )
    y2 = pl.pallas_call(
        net_kernel,
        out_shape=jax.ShapeDtypeStruct((Bx, 1), jnp.float32),
        grid_spec=grid_spec,
        compiler_params=pltpu.CompilerParams(dimension_semantics=("parallel",)),
    )(x_r, wslab)
    return y2.reshape(-1)   # torch.reshape(y2, [-1])


# ---------------- plain-JAX reference (for correctness check) ----------------
def net_reference(x, params):
    (gv_w, gv_b, ga_w, ga_b,
     wl_x, wl_h, wl_z, wl_b,
     wa_x, wa_h, wa_z, wa_b,
     wv_x, wv_h, wv_z, wv_b,
     cs1_wl, cs1_wv, cs2_wl, cs2_wa,
     zh_w1, zh_b1, zh_w2, zh_b2,
     gm_w1, gm_b1, gm_w2, gm_b2,
     p_w1, p_b1, p_w2, p_b2) = params
    Bx, Tx, _ = x.shape
    c_l = jnp.zeros((Bx, DH_L)); c_a = jnp.zeros((Bx, DH_A)); c_v = jnp.zeros((Bx, DH_V))
    h_l = jnp.zeros((Bx, DH_L)); h_a = jnp.zeros((Bx, DH_A)); h_v = jnp.zeros((Bx, DH_V))
    z = jnp.zeros((Bx, Z_DIM))
    for t in range(Tx):
        x_t = x[:, t, :]
        x_l = x_t[:, :D_L]
        x_a = x_t[:, D_L:D_L + D_A]
        x_v = x_t[:, D_L + D_A:]
        x_v_g = x_v * _sigmoid(x_v @ gv_w + gv_b)
        x_a_g = x_a * _sigmoid(x_a @ ga_w + ga_b)
        c_v, h_v = _lsthm_step(x_v_g, c_v, h_v, z, wv_x, wv_h, wv_z, wv_b, DH_V)
        c_a, h_a = _lsthm_step(x_a_g, c_a, h_a, z, wa_x, wa_h, wa_z, wa_b, DH_A)
        c_l, h_l = _lsthm_step(x_l, c_l, h_l, z, wl_x, wl_h, wl_z, wl_b, DH_L)
        l_hid1, v_hid, _, _ = _cross_share(h_l, h_v, cs1_wl, cs1_wv, K, DH_L, DH_V)
        l_hid2, a_hid, _, _ = _cross_share(h_l, h_a, cs2_wl, cs2_wa, K, DH_L, DH_A)
        l_hid = 0.7 * l_hid1 + 0.3 * l_hid2
        h_cat = jnp.concatenate([l_hid, v_hid, a_hid], axis=-1)
        z_hat = jnp.tanh((h_cat @ zh_w1 + zh_b1) @ zh_w2 + zh_b2)
        gamma = _sigmoid((h_cat @ gm_w1 + gm_b1) @ gm_w2 + gm_b2)
        z = gamma * z_hat
    y1 = jnp.maximum(z @ p_w1 + p_b1, 0.0)
    return (y1 @ p_w2 + p_b2).reshape(-1)


# ---------------- deterministic parameter init ----------------
def init_params(key):
    shapes = [
        (D_V, D_V), (1, D_V),                                                 # VisionGate
        (D_A, D_A), (1, D_A),                                                 # AcousticGate
        (D_L, 4 * DH_L), (DH_L, 4 * DH_L), (Z_DIM, 4 * DH_L), (1, 4 * DH_L),  # wordLSTHM
        (D_A, 4 * DH_A), (DH_A, 4 * DH_A), (Z_DIM, 4 * DH_A), (1, 4 * DH_A),  # covarepLSTHM
        (D_V, 4 * DH_V), (DH_V, 4 * DH_V), (Z_DIM, 4 * DH_V), (1, 4 * DH_V),  # facetLSTHM
        (K * DH_V, DH_L), (K * DH_L, DH_V),                                   # crossshareunit1
        (K * DH_A, DH_L), (K * DH_L, DH_A),                                   # crossshareunit2
        (CAT_SHAPE, Z_FC1), (1, Z_FC1), (Z_FC1, Z_DIM), (1, Z_DIM),           # Z_Hat fc1/fc2
        (CAT_SHAPE, Z_FC2), (1, Z_FC2), (Z_FC2, Z_DIM), (1, Z_DIM),           # gamma fc1/fc2
        (Z_DIM, FINAL_DIMS), (1, FINAL_DIMS), (FINAL_DIMS, 1), (1, 1),        # Map_pred n1/n2
    ]
    keys = jax.random.split(key, len(shapes))
    return [0.2 * jax.random.normal(k, s, dtype=jnp.float32) for k, s in zip(keys, shapes)]


if __name__ == "__main__":
    key = jax.random.PRNGKey(0)
    kx, kp = jax.random.split(key)
    x = jax.random.normal(kx, (B, T, D_IN), dtype=jnp.float32)
    params = init_params(kp)
    wslab = pack_params(params)

    y = net_forward(x, wslab)
    jax.block_until_ready(y)

    y_ref = net_reference(x, params)
    # 5e-3 tolerance: pl.reciprocal(approx=True) in the softmax normalization introduces
    # ~1e-3-level relative perturbations that propagate (bounded) through the recurrence.
    np.testing.assert_allclose(np.asarray(y), np.asarray(y_ref), rtol=5e-3, atol=5e-3)

    print("KERNEL_OK")
</pallas_src>

<mosaic_0001>
module attributes {stable_mosaic.version = 11 : i64} {
  func.func @net_kernel(%arg0: i32, %arg1: memref<64x32xf32, #tpu.memory_space<vmem>>, %arg2: memref<296x512xf32, #tpu.memory_space<vmem>>, %arg3: memref<8x1xf32, #tpu.memory_space<vmem>>, %arg4: memref<64x512xf32, #tpu.memory_space<vmem>>) attributes {dimension_semantics = [#tpu.dimension_semantics<parallel>], iteration_bounds = array<i64: 2>, scalar_prefetch = 0 : i64, scratch_operands = 1 : i64, tpu.core_type = #tpu.core_type<tc>, window_params = [{transform_indices = @transform_0, window_bounds = array<i64: 64, 32>}, {pipeline_mode = #tpu.pipeline_mode<synchronous>, transform_indices = @transform_1, window_bounds = array<i64: 296, 512>}, {transform_indices = @transform_2, window_bounds = array<i64: 8, 1>}]} {
    %c290 = arith.constant 290 : index
    %c0 = arith.constant 0 : index
    %0 = vector.load %arg2[%c290, %c0] : memref<296x512xf32, #tpu.memory_space<vmem>>, vector<1x64xf32>
    %1 = vector.shape_cast %0 : vector<1x64xf32> to vector<1x64xf32>
    %2 = vector.broadcast %1 : vector<1x64xf32> to vector<8x64xf32>
    %c291 = arith.constant 291 : index
    %c0_0 = arith.constant 0 : index
    %3 = vector.load %arg2[%c291, %c0_0] : memref<296x512xf32, #tpu.memory_space<vmem>>, vector<1x256xf32>
    %4 = vector.shape_cast %3 : vector<1x256xf32> to vector<1x256xf32>
    %5 = vector.broadcast %4 : vector<1x256xf32> to vector<8x256xf32>
    %c0_1 = arith.constant 0 : index
    %c0_2 = arith.constant 0 : index
    %6 = vector.load %arg1[%c0_1, %c0_2] : memref<64x32xf32, #tpu.memory_space<vmem>>, vector<64x16xf32>
    %c0_3 = arith.constant 0 : index
    %c16 = arith.constant 16 : index
    %7 = vector.load %arg1[%c0_3, %c16] : memref<64x32xf32, #tpu.memory_space<vmem>>, vector<64x16xf32>
    %c289 = arith.constant 289 : index
    %c0_4 = arith.constant 0 : index
    %8 = vector.load %arg2[%c289, %c0_4] : memref<296x512xf32, #tpu.memory_space<vmem>>, vector<1x16xf32>
    %9 = vector.shape_cast %8 : vector<1x16xf32> to vector<1x16xf32>
    %10 = vector.broadcast %9 : vector<1x16xf32> to vector<64x16xf32>
    %c192 = arith.constant 192 : index
    %c384 = arith.constant 384 : index
    %11 = vector.load %arg2[%c192, %c384] : memref<296x512xf32, #tpu.memory_space<vmem>>, vector<16x16xf32>
    %cst = arith.constant dense<0.000000e+00> : vector<64x16xf32>
    %12 = tpu.matmul %7, %11, %cst {dimension_numbers = #tpu.dot_dimension_numbers<[1], [0], [0], [1], [0, 0, 1, 1], [], []>} : vector<64x16xf32>, vector<16x16xf32>, vector<64x16xf32> -> vector<64x16xf32>
    %13 = arith.addf %12, %10 : vector<64x16xf32>
    %14 = arith.negf %13 : vector<64x16xf32>
    %15 = math.exp %14 : vector<64x16xf32>
    %cst_5 = arith.constant 1.000000e+00 : f32
    %16 = vector.broadcast %cst_5 : f32 to vector<64x16xf32>
    %17 = arith.addf %16, %15 : vector<64x16xf32>
    %18 = arith.divf %16, %17 : vector<64x16xf32>
    %19 = arith.mulf %7, %18 : vector<64x16xf32>
    %20 = tpu.concatenate %6, %19 in 1 : vector<64x16xf32>, vector<64x16xf32> -> vector<64x32xf32>
    %c288 = arith.constant 288 : index
    %c0_6 = arith.constant 0 : index
    %21 = vector.load %arg2[%c288, %c0_6] : memref<296x512xf32, #tpu.memory_space<vmem>>, vector<1x512xf32>
    %22 = vector.shape_cast %21 : vector<1x512xf32> to vector<1x512xf32>
    %23 = vector.broadcast %22 : vector<1x512xf32> to vector<64x512xf32>
    %c0_7 = arith.constant 0 : index
    %c0_8 = arith.constant 0 : index
    %24 = vector.load %arg2[%c0_7, %c0_8] : memref<296x512xf32, #tpu.memory_space<vmem>>, vector<32x512xf32>
    %cst_9 = arith.constant dense<0.000000e+00> : vector<64x512xf32>
    %25 = tpu.matmul %20, %24, %cst_9 {dimension_numbers = #tpu.dot_dimension_numbers<[1], [0], [0], [1], [0, 0, 1, 1], [], []>} : vector<64x32xf32>, vector<32x512xf32>, vector<64x512xf32> -> vector<64x512xf32>
    %26 = arith.addf %25, %23 : vector<64x512xf32>
    %c0_10 = arith.constant 0 : index
    %c0_11 = arith.constant 0 : index
    %27 = vector.load %arg4[%c0_10, %c0_11] : memref<64x512xf32, #tpu.memory_space<vmem>>, vector<64x512xf32>
    tpu.vector_store %arg4[%c0_10, %c0_11], %26 {strides = array<i32>} : memref<64x512xf32, #tpu.memory_space<vmem>>, vector<64x512xf32>,
    %cst_12 = arith.constant 0.000000e+00 : f32
    %28 = vector.broadcast %cst_12 : f32 to vector<8x64xf32>
    %cst_13 = arith.constant 0.000000e+00 : f32
    %29 = vector.broadcast %cst_13 : f32 to vector<8x64xf32>
    %cst_14 = arith.constant 0.000000e+00 : f32
    %30 = vector.broadcast %cst_14 : f32 to vector<8x32xf32>
    %c0_15 = arith.constant 0 : index
    %c0_16 = arith.constant 0 : index
    %31 = vector.load %arg4[%c0_15, %c0_16] : memref<64x512xf32, #tpu.memory_space<vmem>>, vector<8x512xf32>
    %c32 = arith.constant 32 : index
    %c0_17 = arith.constant 0 : index
    %32 = vector.load %arg2[%c32, %c0_17] : memref<296x512xf32, #tpu.memory_space<vmem>>, vector<64x512xf32>
    %cst_18 = arith.constant dense<0.000000e+00> : vector<8x512xf32>
    %33 = tpu.matmul %29, %32, %cst_18 {dimension_numbers = #tpu.dot_dimension_numbers<[1], [0], [0], [1], [0, 0, 1, 1], [], []>} : vector<8x64xf32>, vector<64x512xf32>, vector<8x512xf32> -> vector<8x512xf32>
    %34 = arith.addf %31, %33 : vector<8x512xf32>
    %c96 = arith.constant 96 : index
    %c0_19 = arith.constant 0 : index
    %35 = vector.load %arg2[%c96, %c0_19] : memref<296x512xf32, #tpu.memory_space<vmem>>, vector<32x512xf32>
    %cst_20 = arith.constant dense<0.000000e+00> : vector<8x512xf32>
    %36 = tpu.matmul %30, %35, %cst_20 {dimension_numbers = #tpu.dot_dimension_numbers<[1], [0], [0], [1], [0, 0, 1, 1], [], []>} : vector<8x32xf32>, vector<32x512xf32>, vector<8x512xf32> -> vector<8x512xf32>
    %37 = arith.addf %34, %36 : vector<8x512xf32>
    %38 = vector.extract_strided_slice %37 {offsets = [0, 0], sizes = [8, 64], strides = [1, 1]} : vector<8x512xf32> to vector<8x64xf32>
    %39 = arith.negf %38 : vector<8x64xf32>
    %40 = math.exp %39 : vector<8x64xf32>
    %cst_21 = arith.constant 1.000000e+00 : f32
    %41 = vector.broadcast %cst_21 : f32 to vector<8x64xf32>
    %42 = arith.addf %41, %40 : vector<8x64xf32>
    %43 = arith.divf %41, %42 : vector<8x64xf32>
    %44 = vector.extract_strided_slice %37 {offsets = [0, 128], sizes = [8, 64], strides = [1, 1]} : vector<8x512xf32> to vector<8x64xf32>
    %45 = arith.negf %44 : vector<8x64xf32>
    %46 = math.exp %45 : vector<8x64xf32>
    %cst_22 = arith.constant 1.000000e+00 : f32
    %47 = vector.broadcast %cst_22 : f32 to vector<8x64xf32>
    %48 = arith.addf %47, %46 : vector<8x64xf32>
    %49 = arith.divf %47, %48 : vector<8x64xf32>
    %50 = vector.extract_strided_slice %37 {offsets = [0, 256], sizes = [8, 64], strides = [1, 1]} : vector<8x512xf32> to vector<8x64xf32>
    %51 = arith.negf %50 : vector<8x64xf32>
    %52 = math.exp %51 : vector<8x64xf32>
    %cst_23 = arith.constant 1.000000e+00 : f32
    %53 = vector.broadcast %cst_23 : f32 to vector<8x64xf32>
    %54 = arith.addf %53, %52 : vector<8x64xf32>
    %55 = arith.divf %53, %54 : vector<8x64xf32>
    %56 = vector.extract_strided_slice %37 {offsets = [0, 384], sizes = [8, 64], strides = [1, 1]} : vector<8x512xf32> to vector<8x64xf32>
    %57 = math.tanh %56 : vector<8x64xf32>
    %58 = arith.mulf %49, %28 : vector<8x64xf32>
    %59 = arith.mulf %43, %57 : vector<8x64xf32>
    %60 = arith.addf %58, %59 : vector<8x64xf32>
    %61 = math.tanh %60 : vector<8x64xf32>
    %62 = arith.mulf %55, %61 : vector<8x64xf32>
    %c128 = arith.constant 128 : index
    %c0_24 = arith.constant 0 : index
    %63 = vector.load %arg2[%c128, %c0_24] : memref<296x512xf32, #tpu.memory_space<vmem>>, vector<64x512xf32>
    %cst_25 = arith.constant dense<0.000000e+00> : vector<8x512xf32>
    %64 = tpu.matmul %62, %63, %cst_25 {dimension_numbers = #tpu.dot_dimension_numbers<[1], [0], [0], [1], [0, 0, 1, 1], [], []>} : vector<8x64xf32>, vector<64x512xf32>, vector<8x512xf32> -> vector<8x512xf32>
    %65 = math.tanh %64 : vector<8x512xf32>
    %66 = vector.extract_strided_slice %65 {offsets = [0, 0], sizes = [8, 128], strides = [1, 1]} : vector<8x512xf32> to vector<8x128xf32>
    %67 = vector.extract_strided_slice %65 {offsets = [0, 128], sizes = [8, 128], strides = [1, 1]} : vector<8x512xf32> to vector<8x128xf32>
    %68 = arith.addf %66, %67 : vector<8x128xf32>
    %69 = vector.extract_strided_slice %65 {offsets = [0, 256], sizes = [8, 128], strides = [1, 1]} : vector<8x512xf32> to vector<8x128xf32>
    %70 = arith.addf %68, %69 : vector<8x128xf32>
    %71 = vector.extract_strided_slice %65 {offsets = [0, 384], sizes = [8, 128], strides = [1, 1]} : vector<8x512xf32> to vector<8x128xf32>
    %72 = arith.addf %70, %71 : vector<8x128xf32>
    %cst_26 = arith.constant 2.500000e-01 : f32
    %73 = vector.broadcast %cst_26 : f32 to vector<8x128xf32>
    %74 = arith.mulf %72, %73 : vector<8x128xf32>
    %75 = vector.extract_strided_slice %74 {offsets = [0, 0], sizes = [8, 64], strides = [1, 1]} : vector<8x128xf32> to vector<8x64xf32>
    %76 = math.exp %75 : vector<8x64xf32>
    %77 = vector.extract_strided_slice %74 {offsets = [0, 64], sizes = [8, 32], strides = [1, 1]} : vector<8x128xf32> to vector<8x32xf32>
    %78 = math.exp %77 : vector<8x32xf32>
    %79 = vector.extract_strided_slice %76 {offsets = [0, 0], sizes = [8, 32], strides = [1, 1]} : vector<8x64xf32> to vector<8x32xf32>
    %cst_27 = arith.constant dense<0.000000e+00> : vector<8xf32>
    %80 = vector.multi_reduction <add>, %79, %cst_27 [1] : vector<8x32xf32> to vector<8xf32>
    %81 = vector.shape_cast %80 : vector<8xf32> to vector<8x1xf32>
    %82 = tpu.reciprocal %81 {approx = true} : vector<8x1xf32> -> vector<8x1xf32>
    %83 = vector.extract_strided_slice %76 {offsets = [0, 32], sizes = [8, 16], strides = [1, 1]} : vector<8x64xf32> to vector<8x16xf32>
    %cst_28 = arith.constant dense<0.000000e+00> : vector<8xf32>
    %84 = vector.multi_reduction <add>, %83, %cst_28 [1] : vector<8x16xf32> to vector<8xf32>
    %85 = vector.shape_cast %84 : vector<8xf32> to vector<8x1xf32>
    %86 = tpu.reciprocal %85 {approx = true} : vector<8x1xf32> -> vector<8x1xf32>
    %87 = vector.extract_strided_slice %76 {offsets = [0, 48], sizes = [8, 16], strides = [1, 1]} : vector<8x64xf32> to vector<8x16xf32>
    %cst_29 = arith.constant dense<0.000000e+00> : vector<8xf32>
    %88 = vector.multi_reduction <add>, %87, %cst_29 [1] : vector<8x16xf32> to vector<8xf32>
    %89 = vector.shape_cast %88 : vector<8xf32> to vector<8x1xf32>
    %90 = tpu.reciprocal %89 {approx = true} : vector<8x1xf32> -> vector<8x1xf32>
    %cst_30 = arith.constant dense<0.000000e+00> : vector<8xf32>
    %91 = vector.multi_reduction <add>, %78, %cst_30 [1] : vector<8x32xf32> to vector<8xf32>
    %92 = vector.shape_cast %91 : vector<8xf32> to vector<8x1xf32>
    %93 = tpu.reciprocal %92 {approx = true} : vector<8x1xf32> -> vector<8x1xf32>
    %94 = vector.extract_strided_slice %76 {offsets = [0, 0], sizes = [8, 32], strides = [1, 1]} : vector<8x64xf32> to vector<8x32xf32>
    %cst_31 = arith.constant 0.699999988 : f32
    %95 = vector.broadcast %cst_31 : f32 to vector<8x1xf32>
    %96 = arith.mulf %95, %82 : vector<8x1xf32>
    %97 = vector.broadcast %96 : vector<8x1xf32> to vector<8x32xf32>
    %98 = arith.mulf %94, %97 : vector<8x32xf32>
    %cst_32 = arith.constant 3.000000e-01 : f32
    %99 = vector.broadcast %cst_32 : f32 to vector<8x1xf32>
    %100 = arith.mulf %99, %93 : vector<8x1xf32>
    %101 = vector.broadcast %100 : vector<8x1xf32> to vector<8x32xf32>
    %102 = arith.mulf %78, %101 : vector<8x32xf32>
    %103 = arith.addf %98, %102 : vector<8x32xf32>
    %104 = vector.extract_strided_slice %76 {offsets = [0, 32], sizes = [8, 16], strides = [1, 1]} : vector<8x64xf32> to vector<8x16xf32>
    %105 = vector.broadcast %86 : vector<8x1xf32> to vector<8x16xf32>
    %106 = arith.mulf %104, %105 : vector<8x16xf32>
    %107 = vector.extract_strided_slice %76 {offsets = [0, 48], sizes = [8, 16], strides = [1, 1]} : vector<8x64xf32> to vector<8x16xf32>
    %108 = vector.broadcast %90 : vector<8x1xf32> to vector<8x16xf32>
    %109 = arith.mulf %107, %108 : vector<8x16xf32>
    %110 = tpu.concatenate %103, %106, %109 in 1 : vector<8x32xf32>, vector<8x16xf32>, vector<8x16xf32> -> vector<8x64xf32>
    %111 = arith.mulf %62, %110 : vector<8x64xf32>
    %c192_33 = arith.constant 192 : index
    %c0_34 = arith.constant 0 : index
    %112 = vector.load %arg2[%c192_33, %c0_34] : memref<296x512xf32, #tpu.memory_space<vmem>>, vector<64x64xf32>
    %cst_35 = arith.constant dense<0.000000e+00> : vector<8x64xf32>
    %113 = tpu.matmul %111, %112, %cst_35 {dimension_numbers = #tpu.dot_dimension_numbers<[1], [0], [0], [1], [0, 0, 1, 1], [], []>} : vector<8x64xf32>, vector<64x64xf32>, vector<8x64xf32> -> vector<8x64xf32>
    %114 = arith.addf %113, %2 : vector<8x64xf32>
    %c192_36 = arith.constant 192 : index
    %c128_37 = arith.constant 128 : index
    %115 = vector.load %arg2[%c192_36, %c128_37] : memref<296x512xf32, #tpu.memory_space<vmem>>, vector<64x256xf32>
    %cst_38 = arith.constant dense<0.000000e+00> : vector<8x256xf32>
    %116 = tpu.matmul %114, %115, %cst_38 {dimension_numbers = #tpu.dot_dimension_numbers<[1], [0], [0], [1], [0, 0, 1, 1], [], []>} : vector<8x64xf32>, vector<64x256xf32>, vector<8x256xf32> -> vector<8x256xf32>
    %117 = arith.addf %116, %5 : vector<8x256xf32>
    %118 = vector.extract_strided_slice %117 {offsets = [0, 128], sizes = [8, 32], strides = [1, 1]} : vector<8x256xf32> to vector<8x32xf32>
    %119 = arith.negf %118 : vector<8x32xf32>
    %120 = math.exp %119 : vector<8x32xf32>
    %cst_39 = arith.constant 1.000000e+00 : f32
    %121 = vector.broadcast %cst_39 : f32 to vector<8x32xf32>
    %122 = arith.addf %121, %120 : vector<8x32xf32>
    %123 = arith.divf %121, %122 : vector<8x32xf32>
    %124 = vector.extract_strided_slice %117 {offsets = [0, 0], sizes = [8, 32], strides = [1, 1]} : vector<8x256xf32> to vector<8x32xf32>
    %125 = math.tanh %124 : vector<8x32xf32>
    %126 = arith.mulf %123, %125 : vector<8x32xf32>
    %c8 = arith.constant 8 : index
    %c0_40 = arith.constant 0 : index
    %127 = vector.load %arg4[%c8, %c0_40] : memref<64x512xf32, #tpu.memory_space<vmem>>, vector<8x512xf32>
    %c32_41 = arith.constant 32 : index
    %c0_42 = arith.constant 0 : index
    %128 = vector.load %arg2[%c32_41, %c0_42] : memref<296x512xf32, #tpu.memory_space<vmem>>, vector<64x512xf32>
    %cst_43 = arith.constant dense<0.000000e+00> : vector<8x512xf32>
    %129 = tpu.matmul %62, %128, %cst_43 {dimension_numbers = #tpu.dot_dimension_numbers<[1], [0], [0], [1], [0, 0, 1, 1], [], []>} : vector<8x64xf32>, vector<64x512xf32>, vector<8x512xf32> -> vector<8x512xf32>
    %130 = arith.addf %127, %129 : vector<8x512xf32>
    %c96_44 = arith.constant 96 : index
    %c0_45 = arith.constant 0 : index
    %131 = vector.load %arg2[%c96_44, %c0_45] : memref<296x512xf32, #tpu.memory_space<vmem>>, vector<32x512xf32>
    %cst_46 = arith.constant dense<0.000000e+00> : vector<8x512xf32>
    %132 = tpu.matmul %126, %131, %cst_46 {dimension_numbers = #tpu.dot_dimension_numbers<[1], [0], [0], [1], [0, 0, 1, 1], [], []>} : vector<8x32xf32>, vector<32x512xf32>, vector<8x512xf32> -> vector<8x512xf32>
    %133 = arith.addf %130, %132 : vector<8x512xf32>
    %134 = vector.extract_strided_slice %133 {offsets = [0, 0], sizes = [8, 64], strides = [1, 1]} : vector<8x512xf32> to vector<8x64xf32>
    %135 = arith.negf %134 : vector<8x64xf32>
    %136 = math.exp %135 : vector<8x64xf32>
    %cst_47 = arith.constant 1.000000e+00 : f32
    %137 = vector.broadcast %cst_47 : f32 to vector<8x64xf32>
    %138 = arith.addf %137, %136 : vector<8x64xf32>
    %139 = arith.divf %137, %138 : vector<8x64xf32>
    %140 = vector.extract_strided_slice %133 {offsets = [0, 128], sizes = [8, 64], strides = [1, 1]} : vector<8x512xf32> to vector<8x64xf32>
    %141 = arith.negf %140 : vector<8x64xf32>
    %142 = math.exp %141 : vector<8x64xf32>
    %cst_48 = arith.constant 1.000000e+00 : f32
    %143 = vector.broadcast %cst_48 : f32 to vector<8x64xf32>
    %144 = arith.addf %143, %142 : vector<8x64xf32>
    %145 = arith.divf %143, %144 : vector<8x64xf32>
    %146 = vector.extract_strided_slice %133 {offsets = [0, 256], sizes = [8, 64], strides = [1, 1]} : vector<8x512xf32> to vector<8x64xf32>
    %147 = arith.negf %146 : vector<8x64xf32>
    %148 = math.exp %147 : vector<8x64xf32>
    %cst_49 = arith.constant 1.000000e+00 : f32
    %149 = vector.broadcast %cst_49 : f32 to vector<8x64xf32>
    %150 = arith.addf %149, %148 : vector<8x64xf32>
    %151 = arith.divf %149, %150 : vector<8x64xf32>
    %152 = vector.extract_strided_slice %133 {offsets = [0, 384], sizes = [8, 64], strides = [1, 1]} : vector<8x512xf32> to vector<8x64xf32>
    %153 = math.tanh %152 : vector<8x64xf32>
    %154 = arith.mulf %145, %60 : vector<8x64xf32>
    %155 = arith.mulf %139, %153 : vector<8x64xf32>
    %156 = arith.addf %154, %155 : vector<8x64xf32>
    %157 = math.tanh %156 : vector<8x64xf32>
    %158 = arith.mulf %151, %157 : vector<8x64xf32>
    %c128_50 = arith.constant 128 : index
    %c0_51 = arith.constant 0 : index
    %159 = vector.load %arg2[%c128_50, %c0_51] : memref<296x512xf32, #tpu.memory_space<vmem>>, vector<64x512xf32>
    %cst_52 = arith.constant dense<0.000000e+00> : vector<8x512xf32>
    %160 = tpu.matmul %158, %159, %cst_52 {dimension_numbers = #tpu.dot_dimension_numbers<[1], [0], [0], [1], [0, 0, 1, 1], [], []>} : vector<8x64xf32>, vector<64x512xf32>, vector<8x512xf32> -> vector<8x512xf32>
    %161 = math.tanh %160 : vector<8x512xf32>
    %162 = vector.extract_strided_slice %161 {offsets = [0, 0], sizes = [8, 128], strides = [1, 1]} : vector<8x512xf32> to vector<8x128xf32>
    %163 = vector.extract_strided_slice %161 {offsets = [0, 128], sizes = [8, 128], strides = [1, 1]} : vector<8x512xf32> to vector<8x128xf32>
    %164 = arith.addf %162, %163 : vector<8x128xf32>
    %165 = vector.extract_strided_slice %161 {offsets = [0, 256], sizes = [8, 128], strides = [1, 1]} : vector<8x512xf32> to vector<8x128xf32>
    %166 = arith.addf %164, %165 : vector<8x128xf32>
    %167 = vector.extract_strided_slice %161 {offsets = [0, 384], sizes = [8, 128], strides = [1, 1]} : vector<8x512xf32> to vector<8x128xf32>
    %168 = arith.addf %166, %167 : vector<8x128xf32>
    %cst_53 = arith.constant 2.500000e-01 : f32
    %169 = vector.broadcast %cst_53 : f32 to vector<8x128xf32>
    %170 = arith.mulf %168, %169 : vector<8x128xf32>
    %171 = vector.extract_strided_slice %170 {offsets = [0, 0], sizes = [8, 64], strides = [1, 1]} : vector<8x128xf32> to vector<8x64xf32>
    %172 = math.exp %171 : vector<8x64xf32>
    %173 = vector.extract_strided_slice %170 {offsets = [0, 64], sizes = [8, 32], strides = [1, 1]} : vector<8x128xf32> to vector<8x32xf32>
    %174 = math.exp %173 : vector<8x32xf32>
    %175 = vector.extract_strided_slice %172 {offsets = [0, 0], sizes = [8, 32], strides = [1, 1]} : vector<8x64xf32> to vector<8x32xf32>
    %cst_54 = arith.constant dense<0.000000e+00> : vector<8xf32>
    %176 = vector.multi_reduction <add>, %175, %cst_54 [1] : vector<8x32xf32> to vector<8xf32>
    %177 = vector.shape_cast %176 : vector<8xf32> to vector<8x1xf32>
    %178 = tpu.reciprocal %177 {approx = true} : vector<8x1xf32> -> vector<8x1xf32>
    %179 = vector.extract_strided_slice %172 {offsets = [0, 32], sizes = [8, 16], strides = [1, 1]} : vector<8x64xf32> to vector<8x16xf32>
    %cst_55 = arith.constant dense<0.000000e+00> : vector<8xf32>
    %180 = vector.multi_reduction <add>, %179, %cst_55 [1] : vector<8x16xf32> to vector<8xf32>
    %181 = vector.shape_cast %180 : vector<8xf32> to vector<8x1xf32>
    %182 = tpu.reciprocal %181 {approx = true} : vector<8x1xf32> -> vector<8x1xf32>
    %183 = vector.extract_strided_slice %172 {offsets = [0, 48], sizes = [8, 16], strides = [1, 1]} : vector<8x64xf32> to vector<8x16xf32>
    %cst_56 = arith.constant dense<0.000000e+00> : vector<8xf32>
    %184 = vector.multi_reduction <add>, %183, %cst_56 [1] : vector<8x16xf32> to vector<8xf32>
    %185 = vector.shape_cast %184 : vector<8xf32> to vector<8x1xf32>
    %186 = tpu.reciprocal %185 {approx = true} : vector<8x1xf32> -> vector<8x1xf32>
    %cst_57 = arith.constant dense<0.000000e+00> : vector<8xf32>
    %187 = vector.multi_reduction <add>, %174, %cst_57 [1] : vector<8x32xf32> to vector<8xf32>
    %188 = vector.shape_cast %187 : vector<8xf32> to vector<8x1xf32>
    %189 = tpu.reciprocal %188 {approx = true} : vector<8x1xf32> -> vector<8x1xf32>
    %190 = vector.extract_strided_slice %172 {offsets = [0, 0], sizes = [8, 32], strides = [1, 1]} : vector<8x64xf32> to vector<8x32xf32>
    %cst_58 = arith.constant 0.699999988 : f32
    %191 = vector.broadcast %cst_58 : f32 to vector<8x1xf32>
    %192 = arith.mulf %191, %178 : vector<8x1xf32>
    %193 = vector.broadcast %192 : vector<8x1xf32> to vector<8x32xf32>
    %194 = arith.mulf %190, %193 : vector<8x32xf32>
    %cst_59 = arith.constant 3.000000e-01 : f32
    %195 = vector.broadcast %cst_59 : f32 to vector<8x1xf32>
    %196 = arith.mulf %195, %189 : vector<8x1xf32>
    %197 = vector.broadcast %196 : vector<8x1xf32> to vector<8x32xf32>
    %198 = arith.mulf %174, %197 : vector<8x32xf32>
    %199 = arith.addf %194, %198 : vector<8x32xf32>
    %200 = vector.extract_strided_slice %172 {offsets = [0, 32], sizes = [8, 16], strides = [1, 1]} : vector<8x64xf32> to vector<8x16xf32>
    %201 = vector.broadcast %182 : vector<8x1xf32> to vector<8x16xf32>
    %202 = arith.mulf %200, %201 : vector<8x16xf32>
    %203 = vector.extract_strided_slice %172 {offsets = [0, 48], sizes = [8, 16], strides = [1, 1]} : vector<8x64xf32> to vector<8x16xf32>
    %204 = vector.broadcast %186 : vector<8x1xf32> to vector<8x16xf32>
    %205 = arith.mulf %203, %204 : vector<8x16xf32>
    %206 = tpu.concatenate %199, %202, %205 in 1 : vector<8x32xf32>, vector<8x16xf32>, vector<8x16xf32> -> vector<8x64xf32>
    %207 = arith.mulf %158, %206 : vector<8x64xf32>
    %c192_60 = arith.constant 192 : index
    %c0_61 = arith.constant 0 : index
    %208 = vector.load %arg2[%c192_60, %c0_61] : memref<296x512xf32, #tpu.memory_space<vmem>>, vector<64x64xf32>
    %cst_62 = arith.constant dense<0.000000e+00> : vector<8x64xf32>
    %209 = tpu.matmul %207, %208, %cst_62 {dimension_numbers = #tpu.dot_dimension_numbers<[1], [0], [0], [1], [0, 0, 1, 1], [], []>} : vector<8x64xf32>, vector<64x64xf32>, vector<8x64xf32> -> vector<8x64xf32>
    %210 = arith.addf %209, %2 : vector<8x64xf32>
    %c192_63 = arith.constant 192 : index
    %c128_64 = arith.constant 128 : index
    %211 = vector.load %arg2[%c192_63, %c128_64] : memref<296x512xf32, #tpu.memory_space<vmem>>, vector<64x256xf32>
    %cst_65 = arith.constant dense<0.000000e+00> : vector<8x256xf32>
    %212 = tpu.matmul %210, %211, %cst_65 {dimension_numbers = #tpu.dot_dimension_numbers<[1], [0], [0], [1], [0, 0, 1, 1], [], []>} : vector<8x64xf32>, vector<64x256xf32>, vector<8x256xf32> -> vector<8x256xf32>
    %213 = arith.addf %212, %5 : vector<8x256xf32>
    %214 = vector.extract_strided_slice %213 {offsets = [0, 128], sizes = [8, 32], strides = [1, 1]} : vector<8x256xf32> to vector<8x32xf32>
    %215 = arith.negf %214 : vector<8x32xf32>
    %216 = math.exp %215 : vector<8x32xf32>
    %cst_66 = arith.constant 1.000000e+00 : f32
    %217 = vector.broadcast %cst_66 : f32 to vector<8x32xf32>
    %218 = arith.addf %217, %216 : vector<8x32xf32>
    %219 = arith.divf %217, %218 : vector<8x32xf32>
    %220 = vector.extract_strided_slice %213 {offsets = [0, 0], sizes = [8, 32], strides = [1, 1]} : vector<8x256xf32> to vector<8x32xf32>
    %221 = math.tanh %220 : vector<8x32xf32>
    %222 = arith.mulf %219, %221 : vector<8x32xf32>
    %c16_67 = arith.constant 16 : index
    %c0_68 = arith.constant 0 : index
    %223 = vector.load %arg4[%c16_67, %c0_68] : memref<64x512xf32, #tpu.memory_space<vmem>>, vector<8x512xf32>
    %c32_69 = arith.constant 32 : index
    %c0_70 = arith.constant 0 : index
    %224 = vector.load %arg2[%c32_69, %c0_70] : memref<296x512xf32, #tpu.memory_space<vmem>>, vector<64x512xf32>
    %cst_71 = arith.constant dense<0.000000e+00> : vector<8x512xf32>
    %225 = tpu.matmul %158, %224, %cst_71 {dimension_numbers = #tpu.dot_dimension_numbers<[1], [0], [0], [1], [0, 0, 1, 1], [], []>} : vector<8x64xf32>, vector<64x512xf32>, vector<8x512xf32> -> vector<8x512xf32>
    %226 = arith.addf %223, %225 : vector<8x512xf32>
    %c96_72 = arith.constant 96 : index
    %c0_73 = arith.constant 0 : index
    %227 = vector.load %arg2[%c96_72, %c0_73] : memref<296x512xf32, #tpu.memory_space<vmem>>, vector<32x512xf32>
    %cst_74 = arith.constant dense<0.000000e+00> : vector<8x512xf32>
    %228 = tpu.matmul %222, %227, %cst_74 {dimension_numbers = #tpu.dot_dimension_numbers<[1], [0], [0], [1], [0, 0, 1, 1], [], []>} : vector<8x32xf32>, vector<32x512xf32>, vector<8x512xf32> -> vector<8x512xf32>
    %229 = arith.addf %226, %228 : vector<8x512xf32>
    %230 = vector.extract_strided_slice %229 {offsets = [0, 0], sizes = [8, 64], strides = [1, 1]} : vector<8x512xf32> to vector<8x64xf32>
    %231 = arith.negf %230 : vector<8x64xf32>
    %232 = math.exp %231 : vector<8x64xf32>
    %cst_75 = arith.constant 1.000000e+00 : f32
    %233 = vector.broadcast %cst_75 : f32 to vector<8x64xf32>
    %234 = arith.addf %233, %232 : vector<8x64xf32>
    %235 = arith.divf %233, %234 : vector<8x64xf32>
    %236 = vector.extract_strided_slice %229 {offsets = [0, 128], sizes = [8, 64], strides = [1, 1]} : vector<8x512xf32> to vector<8x64xf32>
    %237 = arith.negf %236 : vector<8x64xf32>
    %238 = math.exp %237 : vector<8x64xf32>
    %cst_76 = arith.constant 1.000000e+00 : f32
    %239 = vector.broadcast %cst_76 : f32 to vector<8x64xf32>
    %240 = arith.addf %239, %238 : vector<8x64xf32>
    %241 = arith.divf %239, %240 : vector<8x64xf32>
    %242 = vector.extract_strided_slice %229 {offsets = [0, 256], sizes = [8, 64], strides = [1, 1]} : vector<8x512xf32> to vector<8x64xf32>
    %243 = arith.negf %242 : vector<8x64xf32>
    %244 = math.exp %243 : vector<8x64xf32>
    %cst_77 = arith.constant 1.000000e+00 : f32
    %245 = vector.broadcast %cst_77 : f32 to vector<8x64xf32>
    %246 = arith.addf %245, %244 : vector<8x64xf32>
    %247 = arith.divf %245, %246 : vector<8x64xf32>
    %248 = vector.extract_strided_slice %229 {offsets = [0, 384], sizes = [8, 64], strides = [1, 1]} : vector<8x512xf32> to vector<8x64xf32>
    %249 = math.tanh %248 : vector<8x64xf32>
    %250 = arith.mulf %241, %156 : vector<8x64xf32>
    %251 = arith.mulf %235, %249 : vector<8x64xf32>
    %252 = arith.addf %250, %251 : vector<8x64xf32>
    %253 = math.tanh %252 : vector<8x64xf32>
    %254 = arith.mulf %247, %253 : vector<8x64xf32>
    %c128_78 = arith.constant 128 : index
    %c0_79 = arith.constant 0 : index
    %255 = vector.load %arg2[%c128_78, %c0_79] : memref<296x512xf32, #tpu.memory_space<vmem>>, vector<64x512xf32>
    %cst_80 = arith.constant dense<0.000000e+00> : vector<8x512xf32>
    %256 = tpu.matmul %254, %255, %cst_80 {dimension_numbers = #tpu.dot_dimension_numbers<[1], [0], [0], [1], [0, 0, 1, 1], [], []>} : vector<8x64xf32>, vector<64x512xf32>, vector<8x512xf32> -> vector<8x512xf32>
    %257 = math.tanh %256 : vector<8x512xf32>
    %258 = vector.extract_strided_slice %257 {offsets = [0, 0], sizes = [8, 128], strides = [1, 1]} : vector<8x512xf32> to vector<8x128xf32>
    %259 = vector.extract_strided_slice %257 {offsets = [0, 128], sizes = [8, 128], strides = [1, 1]} : vector<8x512xf32> to vector<8x128xf32>
    %260 = arith.addf %258, %259 : vector<8x128xf32>
    %261 = vector.extract_strided_slice %257 {offsets = [0, 256], sizes = [8, 128], strides = [1, 1]} : vector<8x512xf32> to vector<8x128xf32>
    %262 = arith.addf %260, %261 : vector<8x128xf32>
    %263 = vector.extract_strided_slice %257 {offsets = [0, 384], sizes = [8, 128], strides = [1, 1]} : vector<8x512xf32> to vector<8x128xf32>
    %264 = arith.addf %262, %263 : vector<8x128xf32>
    %cst_81 = arith.constant 2.500000e-01 : f32
    %265 = vector.broadcast %cst_81 : f32 to vector<8x128xf32>
    %266 = arith.mulf %264, %265 : vector<8x128xf32>
    %267 = vector.extract_strided_slice %266 {offsets = [0, 0], sizes = [8, 64], strides = [1, 1]} : vector<8x128xf32> to vector<8x64xf32>
    %268 = math.exp %267 : vector<8x64xf32>
    %269 = vector.extract_strided_slice %266 {offsets = [0, 64], sizes = [8, 32], strides = [1, 1]} : vector<8x128xf32> to vector<8x32xf32>
    %270 = math.exp %269 : vector<8x32xf32>
    %271 = vector.extract_strided_slice %268 {offsets = [0, 0], sizes = [8, 32], strides = [1, 1]} : vector<8x64xf32> to vector<8x32xf32>
    %cst_82 = arith.constant dense<0.000000e+00> : vector<8xf32>
    %272 = vector.multi_reduction <add>, %271, %cst_82 [1] : vector<8x32xf32> to vector<8xf32>
    %273 = vector.shape_cast %272 : vector<8xf32> to vector<8x1xf32>
    %274 = tpu.reciprocal %273 {approx = true} : vector<8x1xf32> -> vector<8x1xf32>
    %275 = vector.extract_strided_slice %268 {offsets = [0, 32], sizes = [8, 16], strides = [1, 1]} : vector<8x64xf32> to vector<8x16xf32>
    %cst_83 = arith.constant dense<0.000000e+00> : vector<8xf32>
    %276 = vector.multi_reduction <add>, %275, %cst_83 [1] : vector<8x16xf32> to vector<8xf32>
    %277 = vector.shape_cast %276 : vector<8xf32> to vector<8x1xf32>
    %278 = tpu.reciprocal %277 {approx = true} : vector<8x1xf32> -> vector<8x1xf32>
    %279 = vector.extract_strided_slice %268 {offsets = [0, 48], sizes = [8, 16], strides = [1, 1]} : vector<8x64xf32> to vector<8x16xf32>
    %cst_84 = arith.constant dense<0.000000e+00> : vector<8xf32>
    %280 = vector.multi_reduction <add>, %279, %cst_84 [1] : vector<8x16xf32> to vector<8xf32>
    %281 = vector.shape_cast %280 : vector<8xf32> to vector<8x1xf32>
    %282 = tpu.reciprocal %281 {approx = true} : vector<8x1xf32> -> vector<8x1xf32>
    %cst_85 = arith.constant dense<0.000000e+00> : vector<8xf32>
    %283 = vector.multi_reduction <add>, %270, %cst_85 [1] : vector<8x32xf32> to vector<8xf32>
    %284 = vector.shape_cast %283 : vector<8xf32> to vector<8x1xf32>
    %285 = tpu.reciprocal %284 {approx = true} : vector<8x1xf32> -> vector<8x1xf32>
    %286 = vector.extract_strided_slice %268 {offsets = [0, 0], sizes = [8, 32], strides = [1, 1]} : vector<8x64xf32> to vector<8x32xf32>
    %cst_86 = arith.constant 0.699999988 : f32
    %287 = vector.broadcast %cst_86 : f32 to vector<8x1xf32>
    %288 = arith.mulf %287, %274 : vector<8x1xf32>
    %289 = vector.broadcast %288 : vector<8x1xf32> to vector<8x32xf32>
    %290 = arith.mulf %286, %289 : vector<8x32xf32>
    %cst_87 = arith.constant 3.000000e-01 : f32
    %291 = vector.broadcast %cst_87 : f32 to vector<8x1xf32>
    %292 = arith.mulf %291, %285 : vector<8x1xf32>
    %293 = vector.broadcast %292 : vector<8x1xf32> to vector<8x32xf32>
    %294 = arith.mulf %270, %293 : vector<8x32xf32>
    %295 = arith.addf %290, %294 : vector<8x32xf32>
    %296 = vector.extract_strided_slice %268 {offsets = [0, 32], sizes = [8, 16], strides = [1, 1]} : vector<8x64xf32> to vector<8x16xf32>
    %297 = vector.broadcast %278 : vector<8x1xf32> to vector<8x16xf32>
    %298 = arith.mulf %296, %297 : vector<8x16xf32>
    %299 = vector.extract_strided_slice %268 {offsets = [0, 48], sizes = [8, 16], strides = [1, 1]} : vector<8x64xf32> to vector<8x16xf32>
    %300 = vector.broadcast %282 : vector<8x1xf32> to vector<8x16xf32>
    %301 = arith.mulf %299, %300 : vector<8x16xf32>
    %302 = tpu.concatenate %295, %298, %301 in 1 : vector<8x32xf32>, vector<8x16xf32>, vector<8x16xf32> -> vector<8x64xf32>
    %303 = arith.mulf %254, %302 : vector<8x64xf32>
    %c192_88 = arith.constant 192 : index
    %c0_89 = arith.constant 0 : index
    %304 = vector.load %arg2[%c192_88, %c0_89] : memref<296x512xf32, #tpu.memory_space<vmem>>, vector<64x64xf32>
    %cst_90 = arith.constant dense<0.000000e+00> : vector<8x64xf32>
    %305 = tpu.matmul %303, %304, %cst_90 {dimension_numbers = #tpu.dot_dimension_numbers<[1], [0], [0], [1], [0, 0, 1, 1], [], []>} : vector<8x64xf32>, vector<64x64xf32>, vector<8x64xf32> -> vector<8x64xf32>
    %306 = arith.addf %305, %2 : vector<8x64xf32>
    %c192_91 = arith.constant 192 : index
    %c128_92 = arith.constant 128 : index
    %307 = vector.load %arg2[%c192_91, %c128_92] : memref<296x512xf32, #tpu.memory_space<vmem>>, vector<64x256xf32>
    %cst_93 = arith.constant dense<0.000000e+00> : vector<8x256xf32>
    %308 = tpu.matmul %306, %307, %cst_93 {dimension_numbers = #tpu.dot_dimension_numbers<[1], [0], [0], [1], [0, 0, 1, 1], [], []>} : vector<8x64xf32>, vector<64x256xf32>, vector<8x256xf32> -> vector<8x256xf32>
    %309 = arith.addf %308, %5 : vector<8x256xf32>
    %310 = vector.extract_strided_slice %309 {offsets = [0, 128], sizes = [8, 32], strides = [1, 1]} : vector<8x256xf32> to vector<8x32xf32>
    %311 = arith.negf %310 : vector<8x32xf32>
    %312 = math.exp %311 : vector<8x32xf32>
    %cst_94 = arith.constant 1.000000e+00 : f32
    %313 = vector.broadcast %cst_94 : f32 to vector<8x32xf32>
    %314 = arith.addf %313, %312 : vector<8x32xf32>
    %315 = arith.divf %313, %314 : vector<8x32xf32>
    %316 = vector.extract_strided_slice %309 {offsets = [0, 0], sizes = [8, 32], strides = [1, 1]} : vector<8x256xf32> to vector<8x32xf32>
    %317 = math.tanh %316 : vector<8x32xf32>
    %318 = arith.mulf %315, %317 : vector<8x32xf32>
    %c24 = arith.constant 24 : index
    %c0_95 = arith.constant 0 : index
    %319 = vector.load %arg4[%c24, %c0_95] : memref<64x512xf32, #tpu.memory_space<vmem>>, vector<8x512xf32>
    %c32_96 = arith.constant 32 : index
    %c0_97 = arith.constant 0 : index
    %320 = vector.load %arg2[%c32_96, %c0_97] : memref<296x512xf32, #tpu.memory_space<vmem>>, vector<64x512xf32>
    %cst_98 = arith.constant dense<0.000000e+00> : vector<8x512xf32>
    %321 = tpu.matmul %254, %320, %cst_98 {dimension_numbers = #tpu.dot_dimension_numbers<[1], [0], [0], [1], [0, 0, 1, 1], [], []>} : vector<8x64xf32>, vector<64x512xf32>, vector<8x512xf32> -> vector<8x512xf32>
    %322 = arith.addf %319, %321 : vector<8x512xf32>
    %c96_99 = arith.constant 96 : index
    %c0_100 = arith.constant 0 : index
    %323 = vector.load %arg2[%c96_99, %c0_100] : memref<296x512xf32, #tpu.memory_space<vmem>>, vector<32x512xf32>
    %cst_101 = arith.constant dense<0.000000e+00> : vector<8x512xf32>
    %324 = tpu.matmul %318, %323, %cst_101 {dimension_numbers = #tpu.dot_dimension_numbers<[1], [0], [0], [1], [0, 0, 1, 1], [], []>} : vector<8x32xf32>, vector<32x512xf32>, vector<8x512xf32> -> vector<8x512xf32>
    %325 = arith.addf %322, %324 : vector<8x512xf32>
    %326 = vector.extract_strided_slice %325 {offsets = [0, 0], sizes = [8, 64], strides = [1, 1]} : vector<8x512xf32> to vector<8x64xf32>
    %327 = arith.negf %326 : vector<8x64xf32>
    %328 = math.exp %327 : vector<8x64xf32>
    %cst_102 = arith.constant 1.000000e+00 : f32
    %329 = vector.broadcast %cst_102 : f32 to vector<8x64xf32>
    %330 = arith.addf %329, %328 : vector<8x64xf32>
    %331 = arith.divf %329, %330 : vector<8x64xf32>
    %332 = vector.extract_strided_slice %325 {offsets = [0, 128], sizes = [8, 64], strides = [1, 1]} : vector<8x512xf32> to vector<8x64xf32>
    %333 = arith.negf %332 : vector<8x64xf32>
    %334 = math.exp %333 : vector<8x64xf32>
    %cst_103 = arith.constant 1.000000e+00 : f32
    %335 = vector.broadcast %cst_103 : f32 to vector<8x64xf32>
    %336 = arith.addf %335, %334 : vector<8x64xf32>
    %337 = arith.divf %335, %336 : vector<8x64xf32>
    %338 = vector.extract_strided_slice %325 {offsets = [0, 256], sizes = [8, 64], strides = [1, 1]} : vector<8x512xf32> to vector<8x64xf32>
    %339 = arith.negf %338 : vector<8x64xf32>
    %340 = math.exp %339 : vector<8x64xf32>
    %cst_104 = arith.constant 1.000000e+00 : f32
    %341 = vector.broadcast %cst_104 : f32 to vector<8x64xf32>
    %342 = arith.addf %341, %340 : vector<8x64xf32>
    %343 = arith.divf %341, %342 : vector<8x64xf32>
    %344 = vector.extract_strided_slice %325 {offsets = [0, 384], sizes = [8, 64], strides = [1, 1]} : vector<8x512xf32> to vector<8x64xf32>
    %345 = math.tanh %344 : vector<8x64xf32>
    %346 = arith.mulf %337, %252 : vector<8x64xf32>
    %347 = arith.mulf %331, %345 : vector<8x64xf32>
    %348 = arith.addf %346, %347 : vector<8x64xf32>
    %349 = math.tanh %348 : vector<8x64xf32>
    %350 = arith.mulf %343, %349 : vector<8x64xf32>
    %c128_105 = arith.constant 128 : index
    %c0_106 = arith.constant 0 : index
    %351 = vector.load %arg2[%c128_105, %c0_106] : memref<296x512xf32, #tpu.memory_space<vmem>>, vector<64x512xf32>
    %cst_107 = arith.constant dense<0.000000e+00> : vector<8x512xf32>
    %352 = tpu.matmul %350, %351, %cst_107 {dimension_numbers = #tpu.dot_dimension_numbers<[1], [0], [0], [1], [0, 0, 1, 1], [], []>} : vector<8x64xf32>, vector<64x512xf32>, vector<8x512xf32> -> vector<8x512xf32>
    %353 = math.tanh %352 : vector<8x512xf32>
    %354 = vector.extract_strided_slice %353 {offsets = [0, 0], sizes = [8, 128], strides = [1, 1]} : vector<8x512xf32> to vector<8x128xf32>
    %355 = vector.extract_strided_slice %353 {offsets = [0, 128], sizes = [8, 128], strides = [1, 1]} : vector<8x512xf32> to vector<8x128xf32>
    %356 = arith.addf %354, %355 : vector<8x128xf32>
    %357 = vector.extract_strided_slice %353 {offsets = [0, 256], sizes = [8, 128], strides = [1, 1]} : vector<8x512xf32> to vector<8x128xf32>
    %358 = arith.addf %356, %357 : vector<8x128xf32>
    %359 = vector.extract_strided_slice %353 {offsets = [0, 384], sizes = [8, 128], strides = [1, 1]} : vector<8x512xf32> to vector<8x128xf32>
    %360 = arith.addf %358, %359 : vector<8x128xf32>
    %cst_108 = arith.constant 2.500000e-01 : f32
    %361 = vector.broadcast %cst_108 : f32 to vector<8x128xf32>
    %362 = arith.mulf %360, %361 : vector<8x128xf32>
    %363 = vector.extract_strided_slice %362 {offsets = [0, 0], sizes = [8, 64], strides = [1, 1]} : vector<8x128xf32> to vector<8x64xf32>
    %364 = math.exp %363 : vector<8x64xf32>
    %365 = vector.extract_strided_slice %362 {offsets = [0, 64], sizes = [8, 32], strides = [1, 1]} : vector<8x128xf32> to vector<8x32xf32>
    %366 = math.exp %365 : vector<8x32xf32>
    %367 = vector.extract_strided_slice %364 {offsets = [0, 0], sizes = [8, 32], strides = [1, 1]} : vector<8x64xf32> to vector<8x32xf32>
    %cst_109 = arith.constant dense<0.000000e+00> : vector<8xf32>
    %368 = vector.multi_reduction <add>, %367, %cst_109 [1] : vector<8x32xf32> to vector<8xf32>
    %369 = vector.shape_cast %368 : vector<8xf32> to vector<8x1xf32>
    %370 = tpu.reciprocal %369 {approx = true} : vector<8x1xf32> -> vector<8x1xf32>
    %371 = vector.extract_strided_slice %364 {offsets = [0, 32], sizes = [8, 16], strides = [1, 1]} : vector<8x64xf32> to vector<8x16xf32>
    %cst_110 = arith.constant dense<0.000000e+00> : vector<8xf32>
    %372 = vector.multi_reduction <add>, %371, %cst_110 [1] : vector<8x16xf32> to vector<8xf32>
    %373 = vector.shape_cast %372 : vector<8xf32> to vector<8x1xf32>
    %374 = tpu.reciprocal %373 {approx = true} : vector<8x1xf32> -> vector<8x1xf32>
    %375 = vector.extract_strided_slice %364 {offsets = [0, 48], sizes = [8, 16], strides = [1, 1]} : vector<8x64xf32> to vector<8x16xf32>
    %cst_111 = arith.constant dense<0.000000e+00> : vector<8xf32>
    %376 = vector.multi_reduction <add>, %375, %cst_111 [1] : vector<8x16xf32> to vector<8xf32>
    %377 = vector.shape_cast %376 : vector<8xf32> to vector<8x1xf32>
    %378 = tpu.reciprocal %377 {approx = true} : vector<8x1xf32> -> vector<8x1xf32>
    %cst_112 = arith.constant dense<0.000000e+00> : vector<8xf32>
    %379 = vector.multi_reduction <add>, %366, %cst_112 [1] : vector<8x32xf32> to vector<8xf32>
    %380 = vector.shape_cast %379 : vector<8xf32> to vector<8x1xf32>
    %381 = tpu.reciprocal %380 {approx = true} : vector<8x1xf32> -> vector<8x1xf32>
    %382 = vector.extract_strided_slice %364 {offsets = [0, 0], sizes = [8, 32], strides = [1, 1]} : vector<8x64xf32> to vector<8x32xf32>
    %cst_113 = arith.constant 0.699999988 : f32
    %383 = vector.broadcast %cst_113 : f32 to vector<8x1xf32>
    %384 = arith.mulf %383, %370 : vector<8x1xf32>
    %385 = vector.broadcast %384 : vector<8x1xf32> to vector<8x32xf32>
    %386 = arith.mulf %382, %385 : vector<8x32xf32>
    %cst_114 = arith.constant 3.000000e-01 : f32
    %387 = vector.broadcast %cst_114 : f32 to vector<8x1xf32>
    %388 = arith.mulf %387, %381 : vector<8x1xf32>
    %389 = vector.broadcast %388 : vector<8x1xf32> to vector<8x32xf32>
    %390 = arith.mulf %366, %389 : vector<8x32xf32>
    %391 = arith.addf %386, %390 : vector<8x32xf32>
    %392 = vector.extract_strided_slice %364 {offsets = [0, 32], sizes = [8, 16], strides = [1, 1]} : vector<8x64xf32> to vector<8x16xf32>
    %393 = vector.broadcast %374 : vector<8x1xf32> to vector<8x16xf32>
    %394 = arith.mulf %392, %393 : vector<8x16xf32>
    %395 = vector.extract_strided_slice %364 {offsets = [0, 48], sizes = [8, 16], strides = [1, 1]} : vector<8x64xf32> to vector<8x16xf32>
    %396 = vector.broadcast %378 : vector<8x1xf32> to vector<8x16xf32>
    %397 = arith.mulf %395, %396 : vector<8x16xf32>
    %398 = tpu.concatenate %391, %394, %397 in 1 : vector<8x32xf32>, vector<8x16xf32>, vector<8x16xf32> -> vector<8x64xf32>
    %399 = arith.mulf %350, %398 : vector<8x64xf32>
    %c192_115 = arith.constant 192 : index
    %c0_116 = arith.constant 0 : index
    %400 = vector.load %arg2[%c192_115, %c0_116] : memref<296x512xf32, #tpu.memory_space<vmem>>, vector<64x64xf32>
    %cst_117 = arith.constant dense<0.000000e+00> : vector<8x64xf32>
    %401 = tpu.matmul %399, %400, %cst_117 {dimension_numbers = #tpu.dot_dimension_numbers<[1], [0], [0], [1], [0, 0, 1, 1], [], []>} : vector<8x64xf32>, vector<64x64xf32>, vector<8x64xf32> -> vector<8x64xf32>
    %402 = arith.addf %401, %2 : vector<8x64xf32>
    %c192_118 = arith.constant 192 : index
    %c128_119 = arith.constant 128 : index
    %403 = vector.load %arg2[%c192_118, %c128_119] : memref<296x512xf32, #tpu.memory_space<vmem>>, vector<64x256xf32>
    %cst_120 = arith.constant dense<0.000000e+00> : vector<8x256xf32>
    %404 = tpu.matmul %402, %403, %cst_120 {dimension_numbers = #tpu.dot_dimension_numbers<[1], [0], [0], [1], [0, 0, 1, 1], [], []>} : vector<8x64xf32>, vector<64x256xf32>, vector<8x256xf32> -> vector<8x256xf32>
    %405 = arith.addf %404, %5 : vector<8x256xf32>
    %406 = vector.extract_strided_slice %405 {offsets = [0, 128], sizes = [8, 32], strides = [1, 1]} : vector<8x256xf32> to vector<8x32xf32>
    %407 = arith.negf %406 : vector<8x32xf32>
    %408 = math.exp %407 : vector<8x32xf32>
    %cst_121 = arith.constant 1.000000e+00 : f32
    %409 = vector.broadcast %cst_121 : f32 to vector<8x32xf32>
    %410 = arith.addf %409, %408 : vector<8x32xf32>
    %411 = arith.divf %409, %410 : vector<8x32xf32>
    %412 = vector.extract_strided_slice %405 {offsets = [0, 0], sizes = [8, 32], strides = [1, 1]} : vector<8x256xf32> to vector<8x32xf32>
    %413 = math.tanh %412 : vector<8x32xf32>
    %414 = arith.mulf %411, %413 : vector<8x32xf32>
    %c32_122 = arith.constant 32 : index
    %c0_123 = arith.constant 0 : index
    %415 = vector.load %arg4[%c32_122, %c0_123] : memref<64x512xf32, #tpu.memory_space<vmem>>, vector<8x512xf32>
    %c32_124 = arith.constant 32 : index
    %c0_125 = arith.constant 0 : index
    %416 = vector.load %arg2[%c32_124, %c0_125] : memref<296x512xf32, #tpu.memory_space<vmem>>, vector<64x512xf32>
    %cst_126 = arith.constant dense<0.000000e+00> : vector<8x512xf32>
    %417 = tpu.matmul %350, %416, %cst_126 {dimension_numbers = #tpu.dot_dimension_numbers<[1], [0], [0], [1], [0, 0, 1, 1], [], []>} : vector<8x64xf32>, vector<64x512xf32>, vector<8x512xf32> -> vector<8x512xf32>
    %418 = arith.addf %415, %417 : vector<8x512xf32>
    %c96_127 = arith.constant 96 : index
    %c0_128 = arith.constant 0 : index
    %419 = vector.load %arg2[%c96_127, %c0_128] : memref<296x512xf32, #tpu.memory_space<vmem>>, vector<32x512xf32>
    %cst_129 = arith.constant dense<0.000000e+00> : vector<8x512xf32>
    %420 = tpu.matmul %414, %419, %cst_129 {dimension_numbers = #tpu.dot_dimension_numbers<[1], [0], [0], [1], [0, 0, 1, 1], [], []>} : vector<8x32xf32>, vector<32x512xf32>, vector<8x512xf32> -> vector<8x512xf32>
    %421 = arith.addf %418, %420 : vector<8x512xf32>
    %422 = vector.extract_strided_slice %421 {offsets = [0, 0], sizes = [8, 64], strides = [1, 1]} : vector<8x512xf32> to vector<8x64xf32>
    %423 = arith.negf %422 : vector<8x64xf32>
    %424 = math.exp %423 : vector<8x64xf32>
    %cst_130 = arith.constant 1.000000e+00 : f32
    %425 = vector.broadcast %cst_130 : f32 to vector<8x64xf32>
    %426 = arith.addf %425, %424 : vector<8x64xf32>
    %427 = arith.divf %425, %426 : vector<8x64xf32>
    %428 = vector.extract_strided_slice %421 {offsets = [0, 128], sizes = [8, 64], strides = [1, 1]} : vector<8x512xf32> to vector<8x64xf32>
    %429 = arith.negf %428 : vector<8x64xf32>
    %430 = math.exp %429 : vector<8x64xf32>
    %cst_131 = arith.constant 1.000000e+00 : f32
    %431 = vector.broadcast %cst_131 : f32 to vector<8x64xf32>
    %432 = arith.addf %431, %430 : vector<8x64xf32>
    %433 = arith.divf %431, %432 : vector<8x64xf32>
    %434 = vector.extract_strided_slice %421 {offsets = [0, 256], sizes = [8, 64], strides = [1, 1]} : vector<8x512xf32> to vector<8x64xf32>
    %435 = arith.negf %434 : vector<8x64xf32>
    %436 = math.exp %435 : vector<8x64xf32>
    %cst_132 = arith.constant 1.000000e+00 : f32
    %437 = vector.broadcast %cst_132 : f32 to vector<8x64xf32>
    %438 = arith.addf %437, %436 : vector<8x64xf32>
    %439 = arith.divf %437, %438 : vector<8x64xf32>
    %440 = vector.extract_strided_slice %421 {offsets = [0, 384], sizes = [8, 64], strides = [1, 1]} : vector<8x512xf32> to vector<8x64xf32>
    %441 = math.tanh %440 : vector<8x64xf32>
    %442 = arith.mulf %433, %348 : vector<8x64xf32>
    %443 = arith.mulf %427, %441 : vector<8x64xf32>
    %444 = arith.addf %442, %443 : vector<8x64xf32>
    %445 = math.tanh %444 : vector<8x64xf32>
    %446 = arith.mulf %439, %445 : vector<8x64xf32>
    %c128_133 = arith.constant 128 : index
    %c0_134 = arith.constant 0 : index
    %447 = vector.load %arg2[%c128_133, %c0_134] : memref<296x512xf32, #tpu.memory_space<vmem>>, vector<64x512xf32>
    %cst_135 = arith.constant dense<0.000000e+00> : vector<8x512xf32>
    %448 = tpu.matmul %446, %447, %cst_135 {dimension_numbers = #tpu.dot_dimension_numbers<[1], [0], [0], [1], [0, 0, 1, 1], [], []>} : vector<8x64xf32>, vector<64x512xf32>, vector<8x512xf32> -> vector<8x512xf32>
    %449 = math.tanh %448 : vector<8x512xf32>
    %450 = vector.extract_strided_slice %449 {offsets = [0, 0], sizes = [8, 128], strides = [1, 1]} : vector<8x512xf32> to vector<8x128xf32>
    %451 = vector.extract_strided_slice %449 {offsets = [0, 128], sizes = [8, 128], strides = [1, 1]} : vector<8x512xf32> to vector<8x128xf32>
    %452 = arith.addf %450, %451 : vector<8x128xf32>
    %453 = vector.extract_strided_slice %449 {offsets = [0, 256], sizes = [8, 128], strides = [1, 1]} : vector<8x512xf32> to vector<8x128xf32>
    %454 = arith.addf %452, %453 : vector<8x128xf32>
    %455 = vector.extract_strided_slice %449 {offsets = [0, 384], sizes = [8, 128], strides = [1, 1]} : vector<8x512xf32> to vector<8x128xf32>
    %456 = arith.addf %454, %455 : vector<8x128xf32>
    %cst_136 = arith.constant 2.500000e-01 : f32
    %457 = vector.broadcast %cst_136 : f32 to vector<8x128xf32>
    %458 = arith.mulf %456, %457 : vector<8x128xf32>
    %459 = vector.extract_strided_slice %458 {offsets = [0, 0], sizes = [8, 64], strides = [1, 1]} : vector<8x128xf32> to vector<8x64xf32>
    %460 = math.exp %459 : vector<8x64xf32>
    %461 = vector.extract_strided_slice %458 {offsets = [0, 64], sizes = [8, 32], strides = [1, 1]} : vector<8x128xf32> to vector<8x32xf32>
    %462 = math.exp %461 : vector<8x32xf32>
    %463 = vector.extract_strided_slice %460 {offsets = [0, 0], sizes = [8, 32], strides = [1, 1]} : vector<8x64xf32> to vector<8x32xf32>
    %cst_137 = arith.constant dense<0.000000e+00> : vector<8xf32>
    %464 = vector.multi_reduction <add>, %463, %cst_137 [1] : vector<8x32xf32> to vector<8xf32>
    %465 = vector.shape_cast %464 : vector<8xf32> to vector<8x1xf32>
    %466 = tpu.reciprocal %465 {approx = true} : vector<8x1xf32> -> vector<8x1xf32>
    %467 = vector.extract_strided_slice %460 {offsets = [0, 32], sizes = [8, 16], strides = [1, 1]} : vector<8x64xf32> to vector<8x16xf32>
    %cst_138 = arith.constant dense<0.000000e+00> : vector<8xf32>
    %468 = vector.multi_reduction <add>, %467, %cst_138 [1] : vector<8x16xf32> to vector<8xf32>
    %469 = vector.shape_cast %468 : vector<8xf32> to vector<8x1xf32>
    %470 = tpu.reciprocal %469 {approx = true} : vector<8x1xf32> -> vector<8x1xf32>
    %471 = vector.extract_strided_slice %460 {offsets = [0, 48], sizes = [8, 16], strides = [1, 1]} : vector<8x64xf32> to vector<8x16xf32>
    %cst_139 = arith.constant dense<0.000000e+00> : vector<8xf32>
    %472 = vector.multi_reduction <add>, %471, %cst_139 [1] : vector<8x16xf32> to vector<8xf32>
    %473 = vector.shape_cast %472 : vector<8xf32> to vector<8x1xf32>
    %474 = tpu.reciprocal %473 {approx = true} : vector<8x1xf32> -> vector<8x1xf32>
    %cst_140 = arith.constant dense<0.000000e+00> : vector<8xf32>
    %475 = vector.multi_reduction <add>, %462, %cst_140 [1] : vector<8x32xf32> to vector<8xf32>
    %476 = vector.shape_cast %475 : vector<8xf32> to vector<8x1xf32>
    %477 = tpu.reciprocal %476 {approx = true} : vector<8x1xf32> -> vector<8x1xf32>
    %478 = vector.extract_strided_slice %460 {offsets = [0, 0], sizes = [8, 32], strides = [1, 1]} : vector<8x64xf32> to vector<8x32xf32>
    %cst_141 = arith.constant 0.699999988 : f32
    %479 = vector.broadcast %cst_141 : f32 to vector<8x1xf32>
    %480 = arith.mulf %479, %466 : vector<8x1xf32>
    %481 = vector.broadcast %480 : vector<8x1xf32> to vector<8x32xf32>
    %482 = arith.mulf %478, %481 : vector<8x32xf32>
    %cst_142 = arith.constant 3.000000e-01 : f32
    %483 = vector.broadcast %cst_142 : f32 to vector<8x1xf32>
    %484 = arith.mulf %483, %477 : vector<8x1xf32>
    %485 = vector.broadcast %484 : vector<8x1xf32> to vector<8x32xf32>
    %486 = arith.mulf %462, %485 : vector<8x32xf32>
    %487 = arith.addf %482, %486 : vector<8x32xf32>
    %488 = vector.extract_strided_slice %460 {offsets = [0, 32], sizes = [8, 16], strides = [1, 1]} : vector<8x64xf32> to vector<8x16xf32>
    %489 = vector.broadcast %470 : vector<8x1xf32> to vector<8x16xf32>
    %490 = arith.mulf %488, %489 : vector<8x16xf32>
    %491 = vector.extract_strided_slice %460 {offsets = [0, 48], sizes = [8, 16], strides = [1, 1]} : vector<8x64xf32> to vector<8x16xf32>
    %492 = vector.broadcast %474 : vector<8x1xf32> to vector<8x16xf32>
    %493 = arith.mulf %491, %492 : vector<8x16xf32>
    %494 = tpu.concatenate %487, %490, %493 in 1 : vector<8x32xf32>, vector<8x16xf32>, vector<8x16xf32> -> vector<8x64xf32>
    %495 = arith.mulf %446, %494 : vector<8x64xf32>
    %c192_143 = arith.constant 192 : index
    %c0_144 = arith.constant 0 : index
    %496 = vector.load %arg2[%c192_143, %c0_144] : memref<296x512xf32, #tpu.memory_space<vmem>>, vector<64x64xf32>
    %cst_145 = arith.constant dense<0.000000e+00> : vector<8x64xf32>
    %497 = tpu.matmul %495, %496, %cst_145 {dimension_numbers = #tpu.dot_dimension_numbers<[1], [0], [0], [1], [0, 0, 1, 1], [], []>} : vector<8x64xf32>, vector<64x64xf32>, vector<8x64xf32> -> vector<8x64xf32>
    %498 = arith.addf %497, %2 : vector<8x64xf32>
    %c192_146 = arith.constant 192 : index
    %c128_147 = arith.constant 128 : index
    %499 = vector.load %arg2[%c192_146, %c128_147] : memref<296x512xf32, #tpu.memory_space<vmem>>, vector<64x256xf32>
    %cst_148 = arith.constant dense<0.000000e+00> : vector<8x256xf32>
    %500 = tpu.matmul %498, %499, %cst_148 {dimension_numbers = #tpu.dot_dimension_numbers<[1], [0], [0], [1], [0, 0, 1, 1], [], []>} : vector<8x64xf32>, vector<64x256xf32>, vector<8x256xf32> -> vector<8x256xf32>
    %501 = arith.addf %500, %5 : vector<8x256xf32>
    %502 = vector.extract_strided_slice %501 {offsets = [0, 128], sizes = [8, 32], strides = [1, 1]} : vector<8x256xf32> to vector<8x32xf32>
    %503 = arith.negf %502 : vector<8x32xf32>
    %504 = math.exp %503 : vector<8x32xf32>
    %cst_149 = arith.constant 1.000000e+00 : f32
    %505 = vector.broadcast %cst_149 : f32 to vector<8x32xf32>
    %506 = arith.addf %505, %504 : vector<8x32xf32>
    %507 = arith.divf %505, %506 : vector<8x32xf32>
    %508 = vector.extract_strided_slice %501 {offsets = [0, 0], sizes = [8, 32], strides = [1, 1]} : vector<8x256xf32> to vector<8x32xf32>
    %509 = math.tanh %508 : vector<8x32xf32>
    %510 = arith.mulf %507, %509 : vector<8x32xf32>
    %c40 = arith.constant 40 : index
    %c0_150 = arith.constant 0 : index
    %511 = vector.load %arg4[%c40, %c0_150] : memref<64x512xf32, #tpu.memory_space<vmem>>, vector<8x512xf32>
    %c32_151 = arith.constant 32 : index
    %c0_152 = arith.constant 0 : index
    %512 = vector.load %arg2[%c32_151, %c0_152] : memref<296x512xf32, #tpu.memory_space<vmem>>, vector<64x512xf32>
    %cst_153 = arith.constant dense<0.000000e+00> : vector<8x512xf32>
    %513 = tpu.matmul %446, %512, %cst_153 {dimension_numbers = #tpu.dot_dimension_numbers<[1], [0], [0], [1], [0, 0, 1, 1], [], []>} : vector<8x64xf32>, vector<64x512xf32>, vector<8x512xf32> -> vector<8x512xf32>
    %514 = arith.addf %511, %513 : vector<8x512xf32>
    %c96_154 = arith.constant 96 : index
    %c0_155 = arith.constant 0 : index
    %515 = vector.load %arg2[%c96_154, %c0_155] : memref<296x512xf32, #tpu.memory_space<vmem>>, vector<32x512xf32>
    %cst_156 = arith.constant dense<0.000000e+00> : vector<8x512xf32>
    %516 = tpu.matmul %510, %515, %cst_156 {dimension_numbers = #tpu.dot_dimension_numbers<[1], [0], [0], [1], [0, 0, 1, 1], [], []>} : vector<8x32xf32>, vector<32x512xf32>, vector<8x512xf32> -> vector<8x512xf32>
    %517 = arith.addf %514, %516 : vector<8x512xf32>
    %518 = vector.extract_strided_slice %517 {offsets = [0, 0], sizes = [8, 64], strides = [1, 1]} : vector<8x512xf32> to vector<8x64xf32>
    %519 = arith.negf %518 : vector<8x64xf32>
    %520 = math.exp %519 : vector<8x64xf32>
    %cst_157 = arith.constant 1.000000e+00 : f32
    %521 = vector.broadcast %cst_157 : f32 to vector<8x64xf32>
    %522 = arith.addf %521, %520 : vector<8x64xf32>
    %523 = arith.divf %521, %522 : vector<8x64xf32>
    %524 = vector.extract_strided_slice %517 {offsets = [0, 128], sizes = [8, 64], strides = [1, 1]} : vector<8x512xf32> to vector<8x64xf32>
    %525 = arith.negf %524 : vector<8x64xf32>
    %526 = math.exp %525 : vector<8x64xf32>
    %cst_158 = arith.constant 1.000000e+00 : f32
    %527 = vector.broadcast %cst_158 : f32 to vector<8x64xf32>
    %528 = arith.addf %527, %526 : vector<8x64xf32>
    %529 = arith.divf %527, %528 : vector<8x64xf32>
    %530 = vector.extract_strided_slice %517 {offsets = [0, 256], sizes = [8, 64], strides = [1, 1]} : vector<8x512xf32> to vector<8x64xf32>
    %531 = arith.negf %530 : vector<8x64xf32>
    %532 = math.exp %531 : vector<8x64xf32>
    %cst_159 = arith.constant 1.000000e+00 : f32
    %533 = vector.broadcast %cst_159 : f32 to vector<8x64xf32>
    %534 = arith.addf %533, %532 : vector<8x64xf32>
    %535 = arith.divf %533, %534 : vector<8x64xf32>
    %536 = vector.extract_strided_slice %517 {offsets = [0, 384], sizes = [8, 64], strides = [1, 1]} : vector<8x512xf32> to vector<8x64xf32>
    %537 = math.tanh %536 : vector<8x64xf32>
    %538 = arith.mulf %529, %444 : vector<8x64xf32>
    %539 = arith.mulf %523, %537 : vector<8x64xf32>
    %540 = arith.addf %538, %539 : vector<8x64xf32>
    %541 = math.tanh %540 : vector<8x64xf32>
    %542 = arith.mulf %535, %541 : vector<8x64xf32>
    %c128_160 = arith.constant 128 : index
    %c0_161 = arith.constant 0 : index
    %543 = vector.load %arg2[%c128_160, %c0_161] : memref<296x512xf32, #tpu.memory_space<vmem>>, vector<64x512xf32>
    %cst_162 = arith.constant dense<0.000000e+00> : vector<8x512xf32>
    %544 = tpu.matmul %542, %543, %cst_162 {dimension_numbers = #tpu.dot_dimension_numbers<[1], [0], [0], [1], [0, 0, 1, 1], [], []>} : vector<8x64xf32>, vector<64x512xf32>, vector<8x512xf32> -> vector<8x512xf32>
    %545 = math.tanh %544 : vector<8x512xf32>
    %546 = vector.extract_strided_slice %545 {offsets = [0, 0], sizes = [8, 128], strides = [1, 1]} : vector<8x512xf32> to vector<8x128xf32>
    %547 = vector.extract_strided_slice %545 {offsets = [0, 128], sizes = [8, 128], strides = [1, 1]} : vector<8x512xf32> to vector<8x128xf32>
    %548 = arith.addf %546, %547 : vector<8x128xf32>
    %549 = vector.extract_strided_slice %545 {offsets = [0, 256], sizes = [8, 128], strides = [1, 1]} : vector<8x512xf32> to vector<8x128xf32>
    %550 = arith.addf %548, %549 : vector<8x128xf32>
    %551 = vector.extract_strided_slice %545 {offsets = [0, 384], sizes = [8, 128], strides = [1, 1]} : vector<8x512xf32> to vector<8x128xf32>
    %552 = arith.addf %550, %551 : vector<8x128xf32>
    %cst_163 = arith.constant 2.500000e-01 : f32
    %553 = vector.broadcast %cst_163 : f32 to vector<8x128xf32>
    %554 = arith.mulf %552, %553 : vector<8x128xf32>
    %555 = vector.extract_strided_slice %554 {offsets = [0, 0], sizes = [8, 64], strides = [1, 1]} : vector<8x128xf32> to vector<8x64xf32>
    %556 = math.exp %555 : vector<8x64xf32>
    %557 = vector.extract_strided_slice %554 {offsets = [0, 64], sizes = [8, 32], strides = [1, 1]} : vector<8x128xf32> to vector<8x32xf32>
    %558 = math.exp %557 : vector<8x32xf32>
    %559 = vector.extract_strided_slice %556 {offsets = [0, 0], sizes = [8, 32], strides = [1, 1]} : vector<8x64xf32> to vector<8x32xf32>
    %cst_164 = arith.constant dense<0.000000e+00> : vector<8xf32>
    %560 = vector.multi_reduction <add>, %559, %cst_164 [1] : vector<8x32xf32> to vector<8xf32>
    %561 = vector.shape_cast %560 : vector<8xf32> to vector<8x1xf32>
    %562 = tpu.reciprocal %561 {approx = true} : vector<8x1xf32> -> vector<8x1xf32>
    %563 = vector.extract_strided_slice %556 {offsets = [0, 32], sizes = [8, 16], strides = [1, 1]} : vector<8x64xf32> to vector<8x16xf32>
    %cst_165 = arith.constant dense<0.000000e+00> : vector<8xf32>
    %564 = vector.multi_reduction <add>, %563, %cst_165 [1] : vector<8x16xf32> to vector<8xf32>
    %565 = vector.shape_cast %564 : vector<8xf32> to vector<8x1xf32>
    %566 = tpu.reciprocal %565 {approx = true} : vector<8x1xf32> -> vector<8x1xf32>
    %567 = vector.extract_strided_slice %556 {offsets = [0, 48], sizes = [8, 16], strides = [1, 1]} : vector<8x64xf32> to vector<8x16xf32>
    %cst_166 = arith.constant dense<0.000000e+00> : vector<8xf32>
    %568 = vector.multi_reduction <add>, %567, %cst_166 [1] : vector<8x16xf32> to vector<8xf32>
    %569 = vector.shape_cast %568 : vector<8xf32> to vector<8x1xf32>
    %570 = tpu.reciprocal %569 {approx = true} : vector<8x1xf32> -> vector<8x1xf32>
    %cst_167 = arith.constant dense<0.000000e+00> : vector<8xf32>
    %571 = vector.multi_reduction <add>, %558, %cst_167 [1] : vector<8x32xf32> to vector<8xf32>
    %572 = vector.shape_cast %571 : vector<8xf32> to vector<8x1xf32>
    %573 = tpu.reciprocal %572 {approx = true} : vector<8x1xf32> -> vector<8x1xf32>
    %574 = vector.extract_strided_slice %556 {offsets = [0, 0], sizes = [8, 32], strides = [1, 1]} : vector<8x64xf32> to vector<8x32xf32>
    %cst_168 = arith.constant 0.699999988 : f32
    %575 = vector.broadcast %cst_168 : f32 to vector<8x1xf32>
    %576 = arith.mulf %575, %562 : vector<8x1xf32>
    %577 = vector.broadcast %576 : vector<8x1xf32> to vector<8x32xf32>
    %578 = arith.mulf %574, %577 : vector<8x32xf32>
    %cst_169 = arith.constant 3.000000e-01 : f32
    %579 = vector.broadcast %cst_169 : f32 to vector<8x1xf32>
    %580 = arith.mulf %579, %573 : vector<8x1xf32>
    %581 = vector.broadcast %580 : vector<8x1xf32> to vector<8x32xf32>
    %582 = arith.mulf %558, %581 : vector<8x32xf32>
    %583 = arith.addf %578, %582 : vector<8x32xf32>
    %584 = vector.extract_strided_slice %556 {offsets = [0, 32], sizes = [8, 16], strides = [1, 1]} : vector<8x64xf32> to vector<8x16xf32>
    %585 = vector.broadcast %566 : vector<8x1xf32> to vector<8x16xf32>
    %586 = arith.mulf %584, %585 : vector<8x16xf32>
    %587 = vector.extract_strided_slice %556 {offsets = [0, 48], sizes = [8, 16], strides = [1, 1]} : vector<8x64xf32> to vector<8x16xf32>
    %588 = vector.broadcast %570 : vector<8x1xf32> to vector<8x16xf32>
    %589 = arith.mulf %587, %588 : vector<8x16xf32>
    %590 = tpu.concatenate %583, %586, %589 in 1 : vector<8x32xf32>, vector<8x16xf32>, vector<8x16xf32> -> vector<8x64xf32>
    %591 = arith.mulf %542, %590 : vector<8x64xf32>
    %c192_170 = arith.constant 192 : index
    %c0_171 = arith.constant 0 : index
    %592 = vector.load %arg2[%c192_170, %c0_171] : memref<296x512xf32, #tpu.memory_space<vmem>>, vector<64x64xf32>
    %cst_172 = arith.constant dense<0.000000e+00> : vector<8x64xf32>
    %593 = tpu.matmul %591, %592, %cst_172 {dimension_numbers = #tpu.dot_dimension_numbers<[1], [0], [0], [1], [0, 0, 1, 1], [], []>} : vector<8x64xf32>, vector<64x64xf32>, vector<8x64xf32> -> vector<8x64xf32>
    %594 = arith.addf %593, %2 : vector<8x64xf32>
    %c192_173 = arith.constant 192 : index
    %c128_174 = arith.constant 128 : index
    %595 = vector.load %arg2[%c192_173, %c128_174] : memref<296x512xf32, #tpu.memory_space<vmem>>, vector<64x256xf32>
    %cst_175 = arith.constant dense<0.000000e+00> : vector<8x256xf32>
    %596 = tpu.matmul %594, %595, %cst_175 {dimension_numbers = #tpu.dot_dimension_numbers<[1], [0], [0], [1], [0, 0, 1, 1], [], []>} : vector<8x64xf32>, vector<64x256xf32>, vector<8x256xf32> -> vector<8x256xf32>
    %597 = arith.addf %596, %5 : vector<8x256xf32>
    %598 = vector.extract_strided_slice %597 {offsets = [0, 128], sizes = [8, 32], strides = [1, 1]} : vector<8x256xf32> to vector<8x32xf32>
    %599 = arith.negf %598 : vector<8x32xf32>
    %600 = math.exp %599 : vector<8x32xf32>
    %cst_176 = arith.constant 1.000000e+00 : f32
    %601 = vector.broadcast %cst_176 : f32 to vector<8x32xf32>
    %602 = arith.addf %601, %600 : vector<8x32xf32>
    %603 = arith.divf %601, %602 : vector<8x32xf32>
    %604 = vector.extract_strided_slice %597 {offsets = [0, 0], sizes = [8, 32], strides = [1, 1]} : vector<8x256xf32> to vector<8x32xf32>
    %605 = math.tanh %604 : vector<8x32xf32>
    %606 = arith.mulf %603, %605 : vector<8x32xf32>
    %c48 = arith.constant 48 : index
    %c0_177 = arith.constant 0 : index
    %607 = vector.load %arg4[%c48, %c0_177] : memref<64x512xf32, #tpu.memory_space<vmem>>, vector<8x512xf32>
    %c32_178 = arith.constant 32 : index
    %c0_179 = arith.constant 0 : index
    %608 = vector.load %arg2[%c32_178, %c0_179] : memref<296x512xf32, #tpu.memory_space<vmem>>, vector<64x512xf32>
    %cst_180 = arith.constant dense<0.000000e+00> : vector<8x512xf32>
    %609 = tpu.matmul %542, %608, %cst_180 {dimension_numbers = #tpu.dot_dimension_numbers<[1], [0], [0], [1], [0, 0, 1, 1], [], []>} : vector<8x64xf32>, vector<64x512xf32>, vector<8x512xf32> -> vector<8x512xf32>
    %610 = arith.addf %607, %609 : vector<8x512xf32>
    %c96_181 = arith.constant 96 : index
    %c0_182 = arith.constant 0 : index
    %611 = vector.load %arg2[%c96_181, %c0_182] : memref<296x512xf32, #tpu.memory_space<vmem>>, vector<32x512xf32>
    %cst_183 = arith.constant dense<0.000000e+00> : vector<8x512xf32>
    %612 = tpu.matmul %606, %611, %cst_183 {dimension_numbers = #tpu.dot_dimension_numbers<[1], [0], [0], [1], [0, 0, 1, 1], [], []>} : vector<8x32xf32>, vector<32x512xf32>, vector<8x512xf32> -> vector<8x512xf32>
    %613 = arith.addf %610, %612 : vector<8x512xf32>
    %614 = vector.extract_strided_slice %613 {offsets = [0, 0], sizes = [8, 64], strides = [1, 1]} : vector<8x512xf32> to vector<8x64xf32>
    %615 = arith.negf %614 : vector<8x64xf32>
    %616 = math.exp %615 : vector<8x64xf32>
    %cst_184 = arith.constant 1.000000e+00 : f32
    %617 = vector.broadcast %cst_184 : f32 to vector<8x64xf32>
    %618 = arith.addf %617, %616 : vector<8x64xf32>
    %619 = arith.divf %617, %618 : vector<8x64xf32>
    %620 = vector.extract_strided_slice %613 {offsets = [0, 128], sizes = [8, 64], strides = [1, 1]} : vector<8x512xf32> to vector<8x64xf32>
    %621 = arith.negf %620 : vector<8x64xf32>
    %622 = math.exp %621 : vector<8x64xf32>
    %cst_185 = arith.constant 1.000000e+00 : f32
    %623 = vector.broadcast %cst_185 : f32 to vector<8x64xf32>
    %624 = arith.addf %623, %622 : vector<8x64xf32>
    %625 = arith.divf %623, %624 : vector<8x64xf32>
    %626 = vector.extract_strided_slice %613 {offsets = [0, 256], sizes = [8, 64], strides = [1, 1]} : vector<8x512xf32> to vector<8x64xf32>
    %627 = arith.negf %626 : vector<8x64xf32>
    %628 = math.exp %627 : vector<8x64xf32>
    %cst_186 = arith.constant 1.000000e+00 : f32
    %629 = vector.broadcast %cst_186 : f32 to vector<8x64xf32>
    %630 = arith.addf %629, %628 : vector<8x64xf32>
    %631 = arith.divf %629, %630 : vector<8x64xf32>
    %632 = vector.extract_strided_slice %613 {offsets = [0, 384], sizes = [8, 64], strides = [1, 1]} : vector<8x512xf32> to vector<8x64xf32>
    %633 = math.tanh %632 : vector<8x64xf32>
    %634 = arith.mulf %625, %540 : vector<8x64xf32>
    %635 = arith.mulf %619, %633 : vector<8x64xf32>
    %636 = arith.addf %634, %635 : vector<8x64xf32>
    %637 = math.tanh %636 : vector<8x64xf32>
    %638 = arith.mulf %631, %637 : vector<8x64xf32>
    %c128_187 = arith.constant 128 : index
    %c0_188 = arith.constant 0 : index
    %639 = vector.load %arg2[%c128_187, %c0_188] : memref<296x512xf32, #tpu.memory_space<vmem>>, vector<64x512xf32>
    %cst_189 = arith.constant dense<0.000000e+00> : vector<8x512xf32>
    %640 = tpu.matmul %638, %639, %cst_189 {dimension_numbers = #tpu.dot_dimension_numbers<[1], [0], [0], [1], [0, 0, 1, 1], [], []>} : vector<8x64xf32>, vector<64x512xf32>, vector<8x512xf32> -> vector<8x512xf32>
    %641 = math.tanh %640 : vector<8x512xf32>
    %642 = vector.extract_strided_slice %641 {offsets = [0, 0], sizes = [8, 128], strides = [1, 1]} : vector<8x512xf32> to vector<8x128xf32>
    %643 = vector.extract_strided_slice %641 {offsets = [0, 128], sizes = [8, 128], strides = [1, 1]} : vector<8x512xf32> to vector<8x128xf32>
    %644 = arith.addf %642, %643 : vector<8x128xf32>
    %645 = vector.extract_strided_slice %641 {offsets = [0, 256], sizes = [8, 128], strides = [1, 1]} : vector<8x512xf32> to vector<8x128xf32>
    %646 = arith.addf %644, %645 : vector<8x128xf32>
    %647 = vector.extract_strided_slice %641 {offsets = [0, 384], sizes = [8, 128], strides = [1, 1]} : vector<8x512xf32> to vector<8x128xf32>
    %648 = arith.addf %646, %647 : vector<8x128xf32>
    %cst_190 = arith.constant 2.500000e-01 : f32
    %649 = vector.broadcast %cst_190 : f32 to vector<8x128xf32>
    %650 = arith.mulf %648, %649 : vector<8x128xf32>
    %651 = vector.extract_strided_slice %650 {offsets = [0, 0], sizes = [8, 64], strides = [1, 1]} : vector<8x128xf32> to vector<8x64xf32>
    %652 = math.exp %651 : vector<8x64xf32>
    %653 = vector.extract_strided_slice %650 {offsets = [0, 64], sizes = [8, 32], strides = [1, 1]} : vector<8x128xf32> to vector<8x32xf32>
    %654 = math.exp %653 : vector<8x32xf32>
    %655 = vector.extract_strided_slice %652 {offsets = [0, 0], sizes = [8, 32], strides = [1, 1]} : vector<8x64xf32> to vector<8x32xf32>
    %cst_191 = arith.constant dense<0.000000e+00> : vector<8xf32>
    %656 = vector.multi_reduction <add>, %655, %cst_191 [1] : vector<8x32xf32> to vector<8xf32>
    %657 = vector.shape_cast %656 : vector<8xf32> to vector<8x1xf32>
    %658 = tpu.reciprocal %657 {approx = true} : vector<8x1xf32> -> vector<8x1xf32>
    %659 = vector.extract_strided_slice %652 {offsets = [0, 32], sizes = [8, 16], strides = [1, 1]} : vector<8x64xf32> to vector<8x16xf32>
    %cst_192 = arith.constant dense<0.000000e+00> : vector<8xf32>
    %660 = vector.multi_reduction <add>, %659, %cst_192 [1] : vector<8x16xf32> to vector<8xf32>
    %661 = vector.shape_cast %660 : vector<8xf32> to vector<8x1xf32>
    %662 = tpu.reciprocal %661 {approx = true} : vector<8x1xf32> -> vector<8x1xf32>
    %663 = vector.extract_strided_slice %652 {offsets = [0, 48], sizes = [8, 16], strides = [1, 1]} : vector<8x64xf32> to vector<8x16xf32>
    %cst_193 = arith.constant dense<0.000000e+00> : vector<8xf32>
    %664 = vector.multi_reduction <add>, %663, %cst_193 [1] : vector<8x16xf32> to vector<8xf32>
    %665 = vector.shape_cast %664 : vector<8xf32> to vector<8x1xf32>
    %666 = tpu.reciprocal %665 {approx = true} : vector<8x1xf32> -> vector<8x1xf32>
    %cst_194 = arith.constant dense<0.000000e+00> : vector<8xf32>
    %667 = vector.multi_reduction <add>, %654, %cst_194 [1] : vector<8x32xf32> to vector<8xf32>
    %668 = vector.shape_cast %667 : vector<8xf32> to vector<8x1xf32>
    %669 = tpu.reciprocal %668 {approx = true} : vector<8x1xf32> -> vector<8x1xf32>
    %670 = vector.extract_strided_slice %652 {offsets = [0, 0], sizes = [8, 32], strides = [1, 1]} : vector<8x64xf32> to vector<8x32xf32>
    %cst_195 = arith.constant 0.699999988 : f32
    %671 = vector.broadcast %cst_195 : f32 to vector<8x1xf32>
    %672 = arith.mulf %671, %658 : vector<8x1xf32>
    %673 = vector.broadcast %672 : vector<8x1xf32> to vector<8x32xf32>
    %674 = arith.mulf %670, %673 : vector<8x32xf32>
    %cst_196 = arith.constant 3.000000e-01 : f32
    %675 = vector.broadcast %cst_196 : f32 to vector<8x1xf32>
    %676 = arith.mulf %675, %669 : vector<8x1xf32>
    %677 = vector.broadcast %676 : vector<8x1xf32> to vector<8x32xf32>
    %678 = arith.mulf %654, %677 : vector<8x32xf32>
    %679 = arith.addf %674, %678 : vector<8x32xf32>
    %680 = vector.extract_strided_slice %652 {offsets = [0, 32], sizes = [8, 16], strides = [1, 1]} : vector<8x64xf32> to vector<8x16xf32>
    %681 = vector.broadcast %662 : vector<8x1xf32> to vector<8x16xf32>
    %682 = arith.mulf %680, %681 : vector<8x16xf32>
    %683 = vector.extract_strided_slice %652 {offsets = [0, 48], sizes = [8, 16], strides = [1, 1]} : vector<8x64xf32> to vector<8x16xf32>
    %684 = vector.broadcast %666 : vector<8x1xf32> to vector<8x16xf32>
    %685 = arith.mulf %683, %684 : vector<8x16xf32>
    %686 = tpu.concatenate %679, %682, %685 in 1 : vector<8x32xf32>, vector<8x16xf32>, vector<8x16xf32> -> vector<8x64xf32>
    %687 = arith.mulf %638, %686 : vector<8x64xf32>
    %c192_197 = arith.constant 192 : index
    %c0_198 = arith.constant 0 : index
    %688 = vector.load %arg2[%c192_197, %c0_198] : memref<296x512xf32, #tpu.memory_space<vmem>>, vector<64x64xf32>
    %cst_199 = arith.constant dense<0.000000e+00> : vector<8x64xf32>
    %689 = tpu.matmul %687, %688, %cst_199 {dimension_numbers = #tpu.dot_dimension_numbers<[1], [0], [0], [1], [0, 0, 1, 1], [], []>} : vector<8x64xf32>, vector<64x64xf32>, vector<8x64xf32> -> vector<8x64xf32>
    %690 = arith.addf %689, %2 : vector<8x64xf32>
    %c192_200 = arith.constant 192 : index
    %c128_201 = arith.constant 128 : index
    %691 = vector.load %arg2[%c192_200, %c128_201] : memref<296x512xf32, #tpu.memory_space<vmem>>, vector<64x256xf32>
    %cst_202 = arith.constant dense<0.000000e+00> : vector<8x256xf32>
    %692 = tpu.matmul %690, %691, %cst_202 {dimension_numbers = #tpu.dot_dimension_numbers<[1], [0], [0], [1], [0, 0, 1, 1], [], []>} : vector<8x64xf32>, vector<64x256xf32>, vector<8x256xf32> -> vector<8x256xf32>
    %693 = arith.addf %692, %5 : vector<8x256xf32>
    %694 = vector.extract_strided_slice %693 {offsets = [0, 128], sizes = [8, 32], strides = [1, 1]} : vector<8x256xf32> to vector<8x32xf32>
    %695 = arith.negf %694 : vector<8x32xf32>
    %696 = math.exp %695 : vector<8x32xf32>
    %cst_203 = arith.constant 1.000000e+00 : f32
    %697 = vector.broadcast %cst_203 : f32 to vector<8x32xf32>
    %698 = arith.addf %697, %696 : vector<8x32xf32>
    %699 = arith.divf %697, %698 : vector<8x32xf32>
    %700 = vector.extract_strided_slice %693 {offsets = [0, 0], sizes = [8, 32], strides = [1, 1]} : vector<8x256xf32> to vector<8x32xf32>
    %701 = math.tanh %700 : vector<8x32xf32>
    %702 = arith.mulf %699, %701 : vector<8x32xf32>
    %c56 = arith.constant 56 : index
    %c0_204 = arith.constant 0 : index
    %703 = vector.load %arg4[%c56, %c0_204] : memref<64x512xf32, #tpu.memory_space<vmem>>, vector<8x512xf32>
    %c32_205 = arith.constant 32 : index
    %c0_206 = arith.constant 0 : index
    %704 = vector.load %arg2[%c32_205, %c0_206] : memref<296x512xf32, #tpu.memory_space<vmem>>, vector<64x512xf32>
    %cst_207 = arith.constant dense<0.000000e+00> : vector<8x512xf32>
    %705 = tpu.matmul %638, %704, %cst_207 {dimension_numbers = #tpu.dot_dimension_numbers<[1], [0], [0], [1], [0, 0, 1, 1], [], []>} : vector<8x64xf32>, vector<64x512xf32>, vector<8x512xf32> -> vector<8x512xf32>
    %706 = arith.addf %703, %705 : vector<8x512xf32>
    %c96_208 = arith.constant 96 : index
    %c0_209 = arith.constant 0 : index
    %707 = vector.load %arg2[%c96_208, %c0_209] : memref<296x512xf32, #tpu.memory_space<vmem>>, vector<32x512xf32>
    %cst_210 = arith.constant dense<0.000000e+00> : vector<8x512xf32>
    %708 = tpu.matmul %702, %707, %cst_210 {dimension_numbers = #tpu.dot_dimension_numbers<[1], [0], [0], [1], [0, 0, 1, 1], [], []>} : vector<8x32xf32>, vector<32x512xf32>, vector<8x512xf32> -> vector<8x512xf32>
    %709 = arith.addf %706, %708 : vector<8x512xf32>
    %710 = vector.extract_strided_slice %709 {offsets = [0, 0], sizes = [8, 64], strides = [1, 1]} : vector<8x512xf32> to vector<8x64xf32>
    %711 = arith.negf %710 : vector<8x64xf32>
    %712 = math.exp %711 : vector<8x64xf32>
    %cst_211 = arith.constant 1.000000e+00 : f32
    %713 = vector.broadcast %cst_211 : f32 to vector<8x64xf32>
    %714 = arith.addf %713, %712 : vector<8x64xf32>
    %715 = arith.divf %713, %714 : vector<8x64xf32>
    %716 = vector.extract_strided_slice %709 {offsets = [0, 128], sizes = [8, 64], strides = [1, 1]} : vector<8x512xf32> to vector<8x64xf32>
    %717 = arith.negf %716 : vector<8x64xf32>
    %718 = math.exp %717 : vector<8x64xf32>
    %cst_212 = arith.constant 1.000000e+00 : f32
    %719 = vector.broadcast %cst_212 : f32 to vector<8x64xf32>
    %720 = arith.addf %719, %718 : vector<8x64xf32>
    %721 = arith.divf %719, %720 : vector<8x64xf32>
    %722 = vector.extract_strided_slice %709 {offsets = [0, 256], sizes = [8, 64], strides = [1, 1]} : vector<8x512xf32> to vector<8x64xf32>
    %723 = arith.negf %722 : vector<8x64xf32>
    %724 = math.exp %723 : vector<8x64xf32>
    %cst_213 = arith.constant 1.000000e+00 : f32
    %725 = vector.broadcast %cst_213 : f32 to vector<8x64xf32>
    %726 = arith.addf %725, %724 : vector<8x64xf32>
    %727 = arith.divf %725, %726 : vector<8x64xf32>
    %728 = vector.extract_strided_slice %709 {offsets = [0, 384], sizes = [8, 64], strides = [1, 1]} : vector<8x512xf32> to vector<8x64xf32>
    %729 = math.tanh %728 : vector<8x64xf32>
    %730 = arith.mulf %721, %636 : vector<8x64xf32>
    %731 = arith.mulf %715, %729 : vector<8x64xf32>
    %732 = arith.addf %730, %731 : vector<8x64xf32>
    %733 = math.tanh %732 : vector<8x64xf32>
    %734 = arith.mulf %727, %733 : vector<8x64xf32>
    %c128_214 = arith.constant 128 : index
    %c0_215 = arith.constant 0 : index
    %735 = vector.load %arg2[%c128_214, %c0_215] : memref<296x512xf32, #tpu.memory_space<vmem>>, vector<64x512xf32>
    %cst_216 = arith.constant dense<0.000000e+00> : vector<8x512xf32>
    %736 = tpu.matmul %734, %735, %cst_216 {dimension_numbers = #tpu.dot_dimension_numbers<[1], [0], [0], [1], [0, 0, 1, 1], [], []>} : vector<8x64xf32>, vector<64x512xf32>, vector<8x512xf32> -> vector<8x512xf32>
    %737 = math.tanh %736 : vector<8x512xf32>
    %738 = vector.extract_strided_slice %737 {offsets = [0, 0], sizes = [8, 128], strides = [1, 1]} : vector<8x512xf32> to vector<8x128xf32>
    %739 = vector.extract_strided_slice %737 {offsets = [0, 128], sizes = [8, 128], strides = [1, 1]} : vector<8x512xf32> to vector<8x128xf32>
    %740 = arith.addf %738, %739 : vector<8x128xf32>
    %741 = vector.extract_strided_slice %737 {offsets = [0, 256], sizes = [8, 128], strides = [1, 1]} : vector<8x512xf32> to vector<8x128xf32>
    %742 = arith.addf %740, %741 : vector<8x128xf32>
    %743 = vector.extract_strided_slice %737 {offsets = [0, 384], sizes = [8, 128], strides = [1, 1]} : vector<8x512xf32> to vector<8x128xf32>
    %744 = arith.addf %742, %743 : vector<8x128xf32>
    %cst_217 = arith.constant 2.500000e-01 : f32
    %745 = vector.broadcast %cst_217 : f32 to vector<8x128xf32>
    %746 = arith.mulf %744, %745 : vector<8x128xf32>
    %747 = vector.extract_strided_slice %746 {offsets = [0, 0], sizes = [8, 64], strides = [1, 1]} : vector<8x128xf32> to vector<8x64xf32>
    %748 = math.exp %747 : vector<8x64xf32>
    %749 = vector.extract_strided_slice %746 {offsets = [0, 64], sizes = [8, 32], strides = [1, 1]} : vector<8x128xf32> to vector<8x32xf32>
    %750 = math.exp %749 : vector<8x32xf32>
    %751 = vector.extract_strided_slice %748 {offsets = [0, 0], sizes = [8, 32], strides = [1, 1]} : vector<8x64xf32> to vector<8x32xf32>
    %cst_218 = arith.constant dense<0.000000e+00> : vector<8xf32>
    %752 = vector.multi_reduction <add>, %751, %cst_218 [1] : vector<8x32xf32> to vector<8xf32>
    %753 = vector.shape_cast %752 : vector<8xf32> to vector<8x1xf32>
    %754 = tpu.reciprocal %753 {approx = true} : vector<8x1xf32> -> vector<8x1xf32>
    %755 = vector.extract_strided_slice %748 {offsets = [0, 32], sizes = [8, 16], strides = [1, 1]} : vector<8x64xf32> to vector<8x16xf32>
    %cst_219 = arith.constant dense<0.000000e+00> : vector<8xf32>
    %756 = vector.multi_reduction <add>, %755, %cst_219 [1] : vector<8x16xf32> to vector<8xf32>
    %757 = vector.shape_cast %756 : vector<8xf32> to vector<8x1xf32>
    %758 = tpu.reciprocal %757 {approx = true} : vector<8x1xf32> -> vector<8x1xf32>
    %759 = vector.extract_strided_slice %748 {offsets = [0, 48], sizes = [8, 16], strides = [1, 1]} : vector<8x64xf32> to vector<8x16xf32>
    %cst_220 = arith.constant dense<0.000000e+00> : vector<8xf32>
    %760 = vector.multi_reduction <add>, %759, %cst_220 [1] : vector<8x16xf32> to vector<8xf32>
    %761 = vector.shape_cast %760 : vector<8xf32> to vector<8x1xf32>
    %762 = tpu.reciprocal %761 {approx = true} : vector<8x1xf32> -> vector<8x1xf32>
    %cst_221 = arith.constant dense<0.000000e+00> : vector<8xf32>
    %763 = vector.multi_reduction <add>, %750, %cst_221 [1] : vector<8x32xf32> to vector<8xf32>
    %764 = vector.shape_cast %763 : vector<8xf32> to vector<8x1xf32>
    %765 = tpu.reciprocal %764 {approx = true} : vector<8x1xf32> -> vector<8x1xf32>
    %766 = vector.extract_strided_slice %748 {offsets = [0, 0], sizes = [8, 32], strides = [1, 1]} : vector<8x64xf32> to vector<8x32xf32>
    %cst_222 = arith.constant 0.699999988 : f32
    %767 = vector.broadcast %cst_222 : f32 to vector<8x1xf32>
    %768 = arith.mulf %767, %754 : vector<8x1xf32>
    %769 = vector.broadcast %768 : vector<8x1xf32> to vector<8x32xf32>
    %770 = arith.mulf %766, %769 : vector<8x32xf32>
    %cst_223 = arith.constant 3.000000e-01 : f32
    %771 = vector.broadcast %cst_223 : f32 to vector<8x1xf32>
    %772 = arith.mulf %771, %765 : vector<8x1xf32>
    %773 = vector.broadcast %772 : vector<8x1xf32> to vector<8x32xf32>
    %774 = arith.mulf %750, %773 : vector<8x32xf32>
    %775 = arith.addf %770, %774 : vector<8x32xf32>
    %776 = vector.extract_strided_slice %748 {offsets = [0, 32], sizes = [8, 16], strides = [1, 1]} : vector<8x64xf32> to vector<8x16xf32>
    %777 = vector.broadcast %758 : vector<8x1xf32> to vector<8x16xf32>
    %778 = arith.mulf %776, %777 : vector<8x16xf32>
    %779 = vector.extract_strided_slice %748 {offsets = [0, 48], sizes = [8, 16], strides = [1, 1]} : vector<8x64xf32> to vector<8x16xf32>
    %780 = vector.broadcast %762 : vector<8x1xf32> to vector<8x16xf32>
    %781 = arith.mulf %779, %780 : vector<8x16xf32>
    %782 = tpu.concatenate %775, %778, %781 in 1 : vector<8x32xf32>, vector<8x16xf32>, vector<8x16xf32> -> vector<8x64xf32>
    %783 = arith.mulf %734, %782 : vector<8x64xf32>
    %c192_224 = arith.constant 192 : index
    %c0_225 = arith.constant 0 : index
    %784 = vector.load %arg2[%c192_224, %c0_225] : memref<296x512xf32, #tpu.memory_space<vmem>>, vector<64x64xf32>
    %cst_226 = arith.constant dense<0.000000e+00> : vector<8x64xf32>
    %785 = tpu.matmul %783, %784, %cst_226 {dimension_numbers = #tpu.dot_dimension_numbers<[1], [0], [0], [1], [0, 0, 1, 1], [], []>} : vector<8x64xf32>, vector<64x64xf32>, vector<8x64xf32> -> vector<8x64xf32>
    %786 = arith.addf %785, %2 : vector<8x64xf32>
    %c192_227 = arith.constant 192 : index
    %c128_228 = arith.constant 128 : index
    %787 = vector.load %arg2[%c192_227, %c128_228] : memref<296x512xf32, #tpu.memory_space<vmem>>, vector<64x256xf32>
    %cst_229 = arith.constant dense<0.000000e+00> : vector<8x256xf32>
    %788 = tpu.matmul %786, %787, %cst_229 {dimension_numbers = #tpu.dot_dimension_numbers<[1], [0], [0], [1], [0, 0, 1, 1], [], []>} : vector<8x64xf32>, vector<64x256xf32>, vector<8x256xf32> -> vector<8x256xf32>
    %789 = arith.addf %788, %5 : vector<8x256xf32>
    %790 = vector.extract_strided_slice %789 {offsets = [0, 128], sizes = [8, 32], strides = [1, 1]} : vector<8x256xf32> to vector<8x32xf32>
    %791 = arith.negf %790 : vector<8x32xf32>
    %792 = math.exp %791 : vector<8x32xf32>
    %cst_230 = arith.constant 1.000000e+00 : f32
    %793 = vector.broadcast %cst_230 : f32 to vector<8x32xf32>
    %794 = arith.addf %793, %792 : vector<8x32xf32>
    %795 = arith.divf %793, %794 : vector<8x32xf32>
    %796 = vector.extract_strided_slice %789 {offsets = [0, 0], sizes = [8, 32], strides = [1, 1]} : vector<8x256xf32> to vector<8x32xf32>
    %797 = math.tanh %796 : vector<8x32xf32>
    %798 = arith.mulf %795, %797 : vector<8x32xf32>
    %c292 = arith.constant 292 : index
    %c0_231 = arith.constant 0 : index
    %799 = vector.load %arg2[%c292, %c0_231] : memref<296x512xf32, #tpu.memory_space<vmem>>, vector<1x16xf32>
    %800 = vector.shape_cast %799 : vector<1x16xf32> to vector<1x16xf32>
    %801 = vector.broadcast %800 : vector<1x16xf32> to vector<8x16xf32>
    %c293 = arith.constant 293 : index
    %c0_232 = arith.constant 0 : index
    %802 = vector.load %arg2[%c293, %c0_232] : memref<296x512xf32, #tpu.memory_space<vmem>>, vector<1x1xf32>
    %803 = vector.shape_cast %802 : vector<1x1xf32> to vector<1x1xf32>
    %804 = vector.broadcast %803 : vector<1x1xf32> to vector<8x1xf32>
    %c256 = arith.constant 256 : index
    %c0_233 = arith.constant 0 : index
    %805 = vector.load %arg2[%c256, %c0_233] : memref<296x512xf32, #tpu.memory_space<vmem>>, vector<32x16xf32>
    %cst_234 = arith.constant dense<0.000000e+00> : vector<8x16xf32>
    %806 = tpu.matmul %798, %805, %cst_234 {dimension_numbers = #tpu.dot_dimension_numbers<[1], [0], [0], [1], [0, 0, 1, 1], [], []>} : vector<8x32xf32>, vector<32x16xf32>, vector<8x16xf32> -> vector<8x16xf32>
    %807 = arith.addf %806, %801 : vector<8x16xf32>
    %cst_235 = arith.constant 0.000000e+00 : f32
    %808 = vector.broadcast %cst_235 : f32 to vector<8x16xf32>
    %809 = arith.maximumf %807, %808 : vector<8x16xf32>
    %c256_236 = arith.constant 256 : index
    %c128_237 = arith.constant 128 : index
    %810 = vector.load %arg2[%c256_236, %c128_237] : memref<296x512xf32, #tpu.memory_space<vmem>>, vector<16x1xf32>
    %cst_238 = arith.constant dense<0.000000e+00> : vector<8x1xf32>
    %811 = tpu.matmul %809, %810, %cst_238 {dimension_numbers = #tpu.dot_dimension_numbers<[1], [0], [0], [1], [0, 0, 1, 1], [], []>} : vector<8x16xf32>, vector<16x1xf32>, vector<8x1xf32> -> vector<8x1xf32>
    %812 = arith.addf %811, %804 : vector<8x1xf32>
    %c0_239 = arith.constant 0 : index
    %c0_240 = arith.constant 0 : index
    %813 = vector.load %arg3[%c0_239, %c0_240] : memref<8x1xf32, #tpu.memory_space<vmem>>, vector<8x1xf32>
    tpu.vector_store %arg3[%c0_239, %c0_240], %812 {strides = array<i32>} : memref<8x1xf32, #tpu.memory_space<vmem>>, vector<8x1xf32>,
    return
  }
  func.func @transform_0(%arg0: i32) -> (i32, i32) {
    %c0_i32 = arith.constant 0 : i32
    %c0_i32_0 = arith.constant 0 : i32
    return %arg0, %c0_i32 : i32, i32
  }
  func.func @transform_1(%arg0: i32) -> (i32, i32) {
    %c0_i32 = arith.constant 0 : i32
    %c0_i32_0 = arith.constant 0 : i32
    %c0_i32_1 = arith.constant 0 : i32
    return %c0_i32, %c0_i32_0 : i32, i32
  }
  func.func @transform_2(%arg0: i32) -> (i32, i32) {
    %c0_i32 = arith.constant 0 : i32
    %c0_i32_0 = arith.constant 0 : i32
    return %arg0, %c0_i32 : i32, i32
  }
}

</mosaic_0001>

<llo_original>
// kernel: tpu_custom_call.1
$region0: #{tpu_custom_call.1}
  #allocation0 [shape = 'u32[]', space=smem, size = 0x4, offset = 0x4, fixed_abs, tag = 'smem constant byte address 0x4 - core index']
  #allocation1 [shape = 'u32[72,128]{1,0:T(1,128)}', space=vmem, size = 0x9000, scoped, tag = 'internal scratch']
  #allocation2 [shape = 'f32[64,512]{1,0:T(8,128)}', space=vmem, size = 0x20000, scoped, tag = 'scratch operand']
  %s0 = inlined_call_operand.vmem [shape: f32[128,32], index: 0, kind: input, shape index: {}]
  %s1 = inlined_call_operand.hbm [shape: f32[296,512], index: 1, kind: input, shape index: {}]
  %s2 = inlined_call_operand.vmem [shape: f32[16,1], index: 2, kind: output, shape index: {}]
  %s3 = sld [smem:[#allocation0]]
  $region45: #{tpu_custom_call.1} parent=0
    _
  %s5 = ssub.s32 1, %s3
  %s6 = scalar_select 0, %s5, %s3
  $region1: #{tpu_custom_call.1} parent=0
    #allocation3 [shape = 'u8[606208]{0}', space=vmem, size = 0x94000, scoped, tag = 'input window, operand 1, single buffered']
    #allocation4 [shape = 's32[2]{0}', space=sflag, size = 0x8, scoped, tag = 'scoped memory for tpu_custom_call.1']
    %7 = vsyncpa [#allocation4], 0
    loop: start=0, step=1, limit=4
    $region2: #{tpu_custom_call.1} parent=1 // loop_pre_header
      _
    $region3: #{tpu_custom_call.1} parent=1 // loop_header
      %s9 = sphi 0, %s13
      %p10 = scmp.ge.s32.totalorder %s9, 4
      %s19 = sphi 0, %s21
      %s22 = sphi 0, %s19
      %s23 = sphi 0, %s22
      %s39 = sphi 0, %s23
      %s43 = sphi 0, %s43
      %s45 = sphi 0, %s43
      %s46 = sphi 0, %s45
      %s60 = sphi 0, %s46
      %s66 = sphi 0, %s68
      %s69 = sphi 0, %s66
      %s70 = sphi 0, %s69
      %s86 = sphi 0, %s70
    $region4: #{tpu_custom_call.1} parent=1 // loop_header_branch
      %12 = sbr.rel (%p10) target = $region8
    $region5: #{tpu_custom_call.1} parent=1 // loop_body
      %s14 = ssub.s32 %s9, 1
      %s15 = ssub.s32 %s9, 2
      %s16 = sadd.s32 %s9, 1
      %s17 = ssub.s32 %s9, %s16
      %p18 = scmp.eq.s32.totalorder %s17, 0
      %s20 = sadd.s32 %s19, 1
      %s21 = scalar_select %p18, %s19, %s20
      %p24 = pneg %p18
      %p25 = scmp.eq.s32.totalorder %s9, 1
      %p26 = por %p24, %p25
      %p27 = scmp.ne.s32.totalorder %s19, %s22
      %p28 = scmp.eq.s32.totalorder %s9, 0
      %p29 = por %p27, %p28
      %p30 = scmp.ne.s32.totalorder %s19, %s22
      %p31 = scmp.eq.s32.totalorder %s14, 1
      %p32 = por %p30, %p31
      %p33 = scmp.ne.s32.totalorder %s22, %s23
      %p34 = scmp.eq.s32.totalorder %s14, 0
      %p35 = por %p33, %p34
      %p36 = scmp.ne.s32.totalorder %s22, %s23
      %p37 = scmp.eq.s32.totalorder %s15, 1
      %p38 = por %p36, %p37
      %p40 = scmp.ne.s32.totalorder %s23, %s39
      %p41 = scmp.eq.s32.totalorder %s15, 0
      %p42 = por %p40, %p41
      %s44 = sadd.s32 %s43, 1
      %p47 = scmp.eq.s32.totalorder %s9, 1
      %p48 = scmp.ne.s32.totalorder %s43, %s45
      %p49 = scmp.eq.s32.totalorder %s9, 0
      %p50 = por %p48, %p49
      %p51 = scmp.ne.s32.totalorder %s43, %s45
      %p52 = scmp.eq.s32.totalorder %s14, 1
      %p53 = por %p51, %p52
      %p54 = scmp.ne.s32.totalorder %s45, %s46
      %p55 = scmp.eq.s32.totalorder %s14, 0
      %p56 = por %p54, %p55
      %p57 = scmp.ne.s32.totalorder %s45, %s46
      %p58 = scmp.eq.s32.totalorder %s15, 1
      %p59 = por %p57, %p58
      %p61 = scmp.ne.s32.totalorder %s46, %s60
      %p62 = scmp.eq.s32.totalorder %s15, 0
      %p63 = por %p61, %p62
      %s64 = ssub.s32 %s9, %s16
      %p65 = scmp.eq.s32.totalorder %s64, 0
      %s67 = sadd.s32 %s66, 1
      %s68 = scalar_select %p65, %s66, %s67
      %p71 = pneg %p65
      %p72 = scmp.eq.s32.totalorder %s9, 1
      %p73 = por %p71, %p72
      %p74 = scmp.ne.s32.totalorder %s66, %s69
      %p75 = scmp.eq.s32.totalorder %s9, 0
      %p76 = por %p74, %p75
      %p77 = scmp.ne.s32.totalorder %s66, %s69
      %p78 = scmp.eq.s32.totalorder %s14, 1
      %p79 = por %p77, %p78
      %p80 = scmp.ne.s32.totalorder %s69, %s70
      %p81 = scmp.eq.s32.totalorder %s14, 0
      %p82 = por %p80, %p81
      %p83 = scmp.ne.s32.totalorder %s69, %s70
      %p84 = scmp.eq.s32.totalorder %s15, 1
      %p85 = por %p83, %p84
      %p87 = scmp.ne.s32.totalorder %s70, %s86
      %p88 = scmp.eq.s32.totalorder %s15, 0
      %p89 = por %p87, %p88
      %p90 = scmp.le.s32.totalorder 1, %s9
      %p91 = scmp.lt.s32.totalorder %s9, 3
      %p92 = pnand %p90, %p91
      %p93 = pneg %p92
      // Predicated region
      $region9: #{tpu_custom_call.1} parent=5 // pred_check
        _
      $region10: #{tpu_custom_call.1} parent=5 // pred_check_branch
        %95 = sbr.rel (%p92) target = $region12
      $region11: #{tpu_custom_call.1} parent=5 // pred_region
        %s96 = ssub.s32 %s9, 1
        // Predicated region
        $region13: #{tpu_custom_call.1} parent=11 // pred_check
          %p97 = pneg %p56
        $region14: #{tpu_custom_call.1} parent=11 // pred_check_branch
          %99 = sbr.rel (%p97) target = $region16
        $region15: #{tpu_custom_call.1} parent=11 // pred_region
          %101 = vsyncadd [#allocation4], 0
          %s102 = sshll.u32 %s1, 4
          %s103 = int_to_ptr.hbm [resolvable:$true] %s102
          %s104 = sshll.u32 [#allocation3], 4
          %s105 = int_to_ptr.vmem [resolvable:$true] %s104
          %110 = dma.hbm_to_vmem [thread:$0]  %s103, 18944, %s105, [#allocation4], 512, 512, 32
        $region16: #{tpu_custom_call.1} parent=11 // pred_fallthru
          _
      $region12: #{tpu_custom_call.1} parent=5 // pred_fallthru
        _
      %p111 = scmp.lt.s32.totalorder %s9, 2
      // Predicated region
      $region17: #{tpu_custom_call.1} parent=5 // pred_check
        %p112 = pneg %p111
      $region18: #{tpu_custom_call.1} parent=5 // pred_check_branch
        %114 = sbr.rel (%p112) target = $region20
      $region19: #{tpu_custom_call.1} parent=5 // pred_region
        // Predicated region
        $region21: #{tpu_custom_call.1} parent=19 // pred_check
          %p115 = pneg %p29
        $region22: #{tpu_custom_call.1} parent=19 // pred_check_branch
          %117 = sbr.rel (%p115) target = $region24
        $region23: #{tpu_custom_call.1} parent=19 // pred_region
          %s118 = smul.u32 8, %s9
          %p119 = scmp.lt.s32.totalorder %s118, 15
          %s120 = scalar_select %p119, %s118, 15
          %s121 = smul.addr %s120, 8
          %s122 = scalar_lea.vmem %s0, %s121
          %s123 = smul.u32 8, %s9
        $region24: #{tpu_custom_call.1} parent=19 // pred_fallthru
          _
      $region20: #{tpu_custom_call.1} parent=5 // pred_fallthru
        _
      %p124 = scmp.le.s32.totalorder 1, %s9
      %p125 = scmp.lt.s32.totalorder %s9, 3
      %p126 = pnand %p124, %p125
      %p127 = pneg %p126
      // Predicated region
      $region25: #{tpu_custom_call.1} parent=5 // pred_check
        _
      $region26: #{tpu_custom_call.1} parent=5 // pred_check_branch
        %129 = sbr.rel (%p126) target = $region28
      $region27: #{tpu_custom_call.1} parent=5 // pred_region
        %s130 = ssub.s32 %s9, 1
        // Predicated region
        $region29: #{tpu_custom_call.1} parent=27 // pred_check
          %p131 = pneg %p56
        $region30: #{tpu_custom_call.1} parent=27 // pred_check_branch
          %133 = sbr.rel (%p131) target = $region32
        $region31: #{tpu_custom_call.1} parent=27 // pred_region
          %135 = dma.done [#allocation4], 18944
        $region32: #{tpu_custom_call.1} parent=27 // pred_fallthru
          _
        %s136 = smul.u32 8, %s14
        %p137 = scmp.lt.s32.totalorder %s136, 15
        %s138 = scalar_select %p137, %s136, 15
        %s139 = smul.addr %s138, 8
        %s140 = scalar_lea.vmem %s0, %s139
        %p141 = pneg %p35
        %p142 = pneg %p32
        %p143 = pneg %p56
        %p144 = pneg %p53
        %p145 = pneg %p82
        %p146 = pneg %p79
        %p147 = scmp.lt.s32.totalorder %s14, 1
        %s148 = scalar_select %p147, %s14, 1
        %s149 = smul.addr %s148, 8
        %s150 = scalar_lea.vmem %s2, %s149
        %s151 = smul.u32 8, %s14
        %p152 = scmp.lt.s32.totalorder %s151, 15
        %s153 = scalar_select %p152, %s151, 15
        %s154 = smul.addr %s153, 8
        %s155 = scalar_lea.vmem %s0, %s154
        %s156 = smul.u32 8, %s14
        %p157 = scmp.lt.s32.totalorder %s14, 1
        %s158 = scalar_select %p157, %s14, 1
        %s159 = smul.addr %s158, 8
        %s160 = scalar_lea.vmem %s2, %s159
        %v161 = vld [vmem:[#allocation3 + $0x482] ss:$0 sm:$0xff]
        %s162 = scalar_lea.vmem [#allocation3], 1155
        %v163 = vld [vmem:[%s162] ss:$8 sm:$0x3]
        %v165 = vperm.slane %v163, 0
        %v166 = vperm.slane %v163, 1
        %v169 = vld [vmem:[%s155] sm:$0xff]
        %v170 = vld [vmem:[%s155 + $0x8] sm:$0xff]
        %v171 = vld [vmem:[%s155 + $0x10] sm:$0xff]
        %v172 = vld [vmem:[%s155 + $0x18] sm:$0xff]
        %v173 = vld [vmem:[%s155 + $0x20] sm:$0xff]
        %v174 = vld [vmem:[%s155 + $0x28] sm:$0xff]
        %v175 = vld [vmem:[%s155 + $0x30] sm:$0xff]
        %v176 = vld [vmem:[%s155 + $0x38] sm:$0xff]
        %v177 = vld [vmem:[#allocation3 + $0x481] ss:$0 sm:$0xff]
        %v178 = vld [vmem:[#allocation3 + $0x318] sm:$0xff]
        %v179 = vld [vmem:[#allocation3 + $0x338] sm:$0xff]
        %188 = vrot.lane.b32.xlu0 %v169, 112
        %v189 = vpop.permute.xlu0 %188
        %190 = vrot.lane.b32.xlu0 %v170, 112
        %v191 = vpop.permute.xlu0 %190
        %192 = vrot.lane.b32.xlu0 %v171, 112
        %v193 = vpop.permute.xlu0 %192
        %194 = vrot.lane.b32.xlu0 %v172, 112
        %v195 = vpop.permute.xlu0 %194
        %196 = vrot.lane.b32.xlu0 %v173, 112
        %v197 = vpop.permute.xlu0 %196
        %198 = vrot.lane.b32.xlu0 %v174, 112
        %v199 = vpop.permute.xlu0 %198
        %200 = vrot.lane.b32.xlu0 %v175, 112
        %v201 = vpop.permute.xlu0 %200
        %202 = vrot.lane.b32.xlu0 %v176, 112
        %v203 = vpop.permute.xlu0 %202
        %vm204 = vcmask 130048
        %v205 = vsel %vm204, %v189, 0
        %v207 = vsel %vm204, %v191, 0
        %v209 = vsel %vm204, %v193, 0
        %v211 = vsel %vm204, %v195, 0
        %v213 = vsel %vm204, %v197, 0
        %v215 = vsel %vm204, %v199, 0
        %v217 = vsel %vm204, %v201, 0
        %v219 = vsel %vm204, %v203, 0
        %221 = vmatpush.msra.mxu0 0.0
        %222 = vmatpush.msra.mxu0 0.0
        %223 = vmatpush.msra.mxu0 0.0
        %224 = vmatpush.msra.mxu0 0.0
        %225 = vmatpush.msra.mxu0 0.0
        %226 = vmatpush.msra.mxu0 0.0
        %227 = vmatpush.msra.mxu0 0.0
        %228 = vmatpush.msra.mxu0 0.0
        %229 = vmatpush.msra.mxu0 0.0
        %230 = vmatpush.msra.mxu0 0.0
        %231 = vmatpush.msra.mxu0 0.0
        %232 = vmatpush.msra.mxu0 0.0
        %233 = vmatpush.msra.mxu0 0.0
        %234 = vmatpush.msra.mxu0 0.0
        %235 = vmatpush.msra.mxu0 %v179
        %236 = vmatpush.msra.mxu0 %v178
        %237 = vmatmul.f32.gmra.mxu0 %v205
        %v238 = vpop.f32.mrf.mxu0
        %v239 = vadd.f32 %v177, %v238
        %240 = vmatmul.f32.gmra.mxu0 %v207
        %v241 = vpop.f32.mrf.mxu0
        %v242 = vadd.f32 %v177, %v241
        %243 = vmatmul.f32.gmra.mxu0 %v209
        %v244 = vpop.f32.mrf.mxu0
        %v245 = vadd.f32 %v177, %v244
        %246 = vmatmul.f32.gmra.mxu0 %v211
        %v247 = vpop.f32.mrf.mxu0
        %v248 = vadd.f32 %v177, %v247
        %249 = vmatmul.f32.gmra.mxu0 %v213
        %v250 = vpop.f32.mrf.mxu0
        %v251 = vadd.f32 %v177, %v250
        %252 = vmatmul.f32.gmra.mxu0 %v215
        %v253 = vpop.f32.mrf.mxu0
        %v254 = vadd.f32 %v177, %v253
        %255 = vmatmul.f32.gmra.mxu0 %v217
        %v256 = vpop.f32.mrf.mxu0
        %v257 = vadd.f32 %v177, %v256
        %258 = vmatmul.f32.gmra.mxu0 %v219
        %v259 = vpop.f32.mrf.mxu0
        %v260 = vadd.f32 %v177, %v259
        %261 = vdwg.mxu0
        %v262 = vxor.u32 %v239, 2147483648
        %v263 = vxor.u32 %v242, 2147483648
        %v264 = vxor.u32 %v245, 2147483648
        %v265 = vxor.u32 %v248, 2147483648
        %v266 = vxor.u32 %v251, 2147483648
        %v267 = vxor.u32 %v254, 2147483648
        %v268 = vxor.u32 %v257, 2147483648
        %v269 = vxor.u32 %v260, 2147483648
        %v270 = vmul.f32 %v262, 1.442695
        %v271 = vpow.pop %v270
        %v272 = vmul.f32 %v263, 1.442695
        %v273 = vpow.pop %v272
        %v274 = vmul.f32 %v264, 1.442695
        %v275 = vpow.pop %v274
        %v276 = vmul.f32 %v265, 1.442695
        %v277 = vpow.pop %v276
        %v278 = vmul.f32 %v266, 1.442695
        %v279 = vpow.pop %v278
        %v280 = vmul.f32 %v267, 1.442695
        %v281 = vpow.pop %v280
        %v282 = vmul.f32 %v268, 1.442695
        %v283 = vpow.pop %v282
        %v284 = vmul.f32 %v269, 1.442695
        %v285 = vpow.pop %v284
        %v286 = vadd.f32 %v271, 1.0
        %v287 = vadd.f32 %v273, 1.0
        %v288 = vadd.f32 %v275, 1.0
        %v289 = vadd.f32 %v277, 1.0
        %v290 = vadd.f32 %v279, 1.0
        %v291 = vadd.f32 %v281, 1.0
        %v292 = vadd.f32 %v283, 1.0
        %v293 = vadd.f32 %v285, 1.0
        %v294 = vrcp.pop %v286
        %v295 = vmul.f32 %v286, %v294
        %v296 = vsub.f32 1.0, %v295
        %v297 = vmul.f32 %v294, %v296
        %v298 = vadd.f32 %v294, %v297
        %vm299 = vweird.f32 %v286
        %vm300 = vweird.f32 %v294
        %vm301 = vmor %vm299, %vm300
        %v302 = vsel %vm301, %v294, %v298
        %v303 = vand.u32 2147483647, %v286
        %vm304 = vcmp.eq.f32.partialorder %v303, 8.507059e+37
        %v305 = vand.u32 %v286, 2147483648
        %v306 = vor.u32 1.1754944e-38, %v305
        %v307 = vsel %vm304, %v306, %v302
        %v308 = vmul.f32 1.0, %v307
        %v309 = vrcp.pop %v287
        %v310 = vmul.f32 %v287, %v309
        %v311 = vsub.f32 1.0, %v310
        %v312 = vmul.f32 %v309, %v311
        %v313 = vadd.f32 %v309, %v312
        %vm314 = vweird.f32 %v287
        %vm315 = vweird.f32 %v309
        %vm316 = vmor %vm314, %vm315
        %v317 = vsel %vm316, %v309, %v313
        %v318 = vand.u32 2147483647, %v287
        %vm319 = vcmp.eq.f32.partialorder %v318, 8.507059e+37
        %v320 = vand.u32 %v287, 2147483648
        %v321 = vor.u32 1.1754944e-38, %v320
        %v322 = vsel %vm319, %v321, %v317
        %v323 = vmul.f32 1.0, %v322
        %v324 = vrcp.pop %v288
        %v325 = vmul.f32 %v288, %v324
        %v326 = vsub.f32 1.0, %v325
        %v327 = vmul.f32 %v324, %v326
        %v328 = vadd.f32 %v324, %v327
        %vm329 = vweird.f32 %v288
        %vm330 = vweird.f32 %v324
        %vm331 = vmor %vm329, %vm330
        %v332 = vsel %vm331, %v324, %v328
        %v333 = vand.u32 2147483647, %v288
        %vm334 = vcmp.eq.f32.partialorder %v333, 8.507059e+37
        %v335 = vand.u32 %v288, 2147483648
        %v336 = vor.u32 1.1754944e-38, %v335
        %v337 = vsel %vm334, %v336, %v332
        %v338 = vmul.f32 1.0, %v337
        %v339 = vrcp.pop %v289
        %v340 = vmul.f32 %v289, %v339
        %v341 = vsub.f32 1.0, %v340
        %v342 = vmul.f32 %v339, %v341
        %v343 = vadd.f32 %v339, %v342
        %vm344 = vweird.f32 %v289
        %vm345 = vweird.f32 %v339
        %vm346 = vmor %vm344, %vm345
        %v347 = vsel %vm346, %v339, %v343
        %v348 = vand.u32 2147483647, %v289
        %vm349 = vcmp.eq.f32.partialorder %v348, 8.507059e+37
        %v350 = vand.u32 %v289, 2147483648
        %v351 = vor.u32 1.1754944e-38, %v350
        %v352 = vsel %vm349, %v351, %v347
        %v353 = vmul.f32 1.0, %v352
        %v354 = vrcp.pop %v290
        %v355 = vmul.f32 %v290, %v354
        %v356 = vsub.f32 1.0, %v355
        %v357 = vmul.f32 %v354, %v356
        %v358 = vadd.f32 %v354, %v357
        %vm359 = vweird.f32 %v290
        %vm360 = vweird.f32 %v354
        %vm361 = vmor %vm359, %vm360
        %v362 = vsel %vm361, %v354, %v358
        %v363 = vand.u32 2147483647, %v290
        %vm364 = vcmp.eq.f32.partialorder %v363, 8.507059e+37
        %v365 = vand.u32 %v290, 2147483648
        %v366 = vor.u32 1.1754944e-38, %v365
        %v367 = vsel %vm364, %v366, %v362
        %v368 = vmul.f32 1.0, %v367
        %v369 = vrcp.pop %v291
        %v370 = vmul.f32 %v291, %v369
        %v371 = vsub.f32 1.0, %v370
        %v372 = vmul.f32 %v369, %v371
        %v373 = vadd.f32 %v369, %v372
        %vm374 = vweird.f32 %v291
        %vm375 = vweird.f32 %v369
        %vm376 = vmor %vm374, %vm375
        %v377 = vsel %vm376, %v369, %v373
        %v378 = vand.u32 2147483647, %v291
        %vm379 = vcmp.eq.f32.partialorder %v378, 8.507059e+37
        %v380 = vand.u32 %v291, 2147483648
        %v381 = vor.u32 1.1754944e-38, %v380
        %v382 = vsel %vm379, %v381, %v377
        %v383 = vmul.f32 1.0, %v382
        %v384 = vrcp.pop %v292
        %v385 = vmul.f32 %v292, %v384
        %v386 = vsub.f32 1.0, %v385
        %v387 = vmul.f32 %v384, %v386
        %v388 = vadd.f32 %v384, %v387
        %vm389 = vweird.f32 %v292
        %vm390 = vweird.f32 %v384
        %vm391 = vmor %vm389, %vm390
        %v392 = vsel %vm391, %v384, %v388
        %v393 = vand.u32 2147483647, %v292
        %vm394 = vcmp.eq.f32.partialorder %v393, 8.507059e+37
        %v395 = vand.u32 %v292, 2147483648
        %v396 = vor.u32 1.1754944e-38, %v395
        %v397 = vsel %vm394, %v396, %v392
        %v398 = vmul.f32 1.0, %v397
        %v399 = vrcp.pop %v293
        %v400 = vmul.f32 %v293, %v399
        %v401 = vsub.f32 1.0, %v400
        %v402 = vmul.f32 %v399, %v401
        %v403 = vadd.f32 %v399, %v402
        %vm404 = vweird.f32 %v293
        %vm405 = vweird.f32 %v399
        %vm406 = vmor %vm404, %vm405
        %v407 = vsel %vm406, %v399, %v403
        %v408 = vand.u32 2147483647, %v293
        %vm409 = vcmp.eq.f32.partialorder %v408, 8.507059e+37
        %v410 = vand.u32 %v293, 2147483648
        %v411 = vor.u32 1.1754944e-38, %v410
        %v412 = vsel %vm409, %v411, %v407
        %v413 = vmul.f32 1.0, %v412
        %422 = vrot.lane.b32.xlu0 %v308, 16
        %v423 = vpop.permute.xlu0 %422
        %424 = vrot.lane.b32.xlu0 %v323, 16
        %v425 = vpop.permute.xlu0 %424
        %426 = vrot.lane.b32.xlu0 %v338, 16
        %v427 = vpop.permute.xlu0 %426
        %428 = vrot.lane.b32.xlu0 %v353, 16
        %v429 = vpop.permute.xlu0 %428
        %430 = vrot.lane.b32.xlu0 %v368, 16
        %v431 = vpop.permute.xlu0 %430
        %432 = vrot.lane.b32.xlu0 %v383, 16
        %v433 = vpop.permute.xlu0 %432
        %434 = vrot.lane.b32.xlu0 %v398, 16
        %v435 = vpop.permute.xlu0 %434
        %436 = vrot.lane.b32.xlu0 %v413, 16
        %v437 = vpop.permute.xlu0 %436
        %v446 = vmul.f32 %v169, %v423
        %v447 = vmul.f32 %v170, %v425
        %v448 = vmul.f32 %v171, %v427
        %v449 = vmul.f32 %v172, %v429
        %v450 = vmul.f32 %v173, %v431
        %v451 = vmul.f32 %v174, %v433
        %v452 = vmul.f32 %v175, %v435
        %v453 = vmul.f32 %v176, %v437
        %v454 = vsel %vm204, %v169, %v446
        %v455 = vsel %vm204, %v170, %v447
        %v456 = vsel %vm204, %v171, %v448
        %v457 = vsel %vm204, %v172, %v449
        %v458 = vsel %vm204, %v173, %v450
        %v459 = vsel %vm204, %v174, %v451
        %v460 = vsel %vm204, %v175, %v452
        %v461 = vsel %vm204, %v176, %v453
        %s462 = scalar_lea.vmem [#allocation3], 1152
        %v463 = vld [vmem:[%s462] ss:$8 sm:$0xf]
        %v465 = vperm.slane %v463, 0
        %v466 = vperm.slane %v463, 1
        %v467 = vperm.slane %v463, 2
        %v468 = vperm.slane %v463, 3
        %v473 = vld [vmem:[#allocation3] sm:$0xff]
        %v474 = vld [vmem:[#allocation3 + $0x8] sm:$0xff]
        %v475 = vld [vmem:[#allocation3 + $0x10] sm:$0xff]
        %v476 = vld [vmem:[#allocation3 + $0x18] sm:$0xff]
        %v477 = vld [vmem:[#allocation3 + $0x20] sm:$0xff]
        %v478 = vld [vmem:[#allocation3 + $0x28] sm:$0xff]
        %v479 = vld [vmem:[#allocation3 + $0x30] sm:$0xff]
        %v480 = vld [vmem:[#allocation3 + $0x38] sm:$0xff]
        %v481 = vld [vmem:[#allocation3 + $0x40] sm:$0xff]
        %v482 = vld [vmem:[#allocation3 + $0x48] sm:$0xff]
        %v483 = vld [vmem:[#allocation3 + $0x50] sm:$0xff]
        %v484 = vld [vmem:[#allocation3 + $0x58] sm:$0xff]
        %v485 = vld [vmem:[#allocation3 + $0x60] sm:$0xff]
        %v486 = vld [vmem:[#allocation3 + $0x68] sm:$0xff]
        %v487 = vld [vmem:[#allocation3 + $0x70] sm:$0xff]
        %v488 = vld [vmem:[#allocation3 + $0x78] sm:$0xff]
        %vm489 = vcmask 261120
        %v491 = vsel %vm489, %v454, 0
        %v494 = vsel %vm489, %v455, 0
        %v497 = vsel %vm489, %v456, 0
        %v500 = vsel %vm489, %v457, 0
        %v503 = vsel %vm489, %v458, 0
        %v506 = vsel %vm489, %v459, 0
        %v509 = vsel %vm489, %v460, 0
        %v512 = vsel %vm489, %v461, 0
        %514 = vmatpush.msra.mxu0 0.0
        %515 = vmatpush.msra.mxu0 0.0
        %516 = vmatpush.msra.mxu0 0.0
        %517 = vmatpush.msra.mxu0 0.0
        %518 = vmatpush.msra.mxu0 0.0
        %519 = vmatpush.msra.mxu0 0.0
        %520 = vmatpush.msra.mxu0 0.0
        %521 = vmatpush.msra.mxu0 0.0
        %522 = vmatpush.msra.mxu0 0.0
        %523 = vmatpush.msra.mxu0 0.0
        %524 = vmatpush.msra.mxu0 0.0
        %525 = vmatpush.msra.mxu0 0.0
        %526 = vmatpush.msra.mxu0 %v485
        %527 = vmatpush.msra.mxu0 %v481
        %528 = vmatpush.msra.mxu0 %v477
        %529 = vmatpush.msra.mxu0 %v473
        %530 = vmatmul.f32.gmra.mxu0 %v491
        %v531 = vpop.f32.mrf.mxu0
        %v532 = vadd.f32 %v465, %v531
        %533 = vmatmul.f32.gmra.mxu0 %v494
        %v534 = vpop.f32.mrf.mxu0
        %v535 = vadd.f32 %v465, %v534
        %536 = vmatmul.f32.gmra.mxu0 %v497
        %v537 = vpop.f32.mrf.mxu0
        %v538 = vadd.f32 %v465, %v537
        %539 = vmatmul.f32.gmra.mxu0 %v500
        %v540 = vpop.f32.mrf.mxu0
        %v541 = vadd.f32 %v465, %v540
        %542 = vmatmul.f32.gmra.mxu0 %v503
        %v543 = vpop.f32.mrf.mxu0
        %v544 = vadd.f32 %v465, %v543
        %545 = vmatmul.f32.gmra.mxu0 %v506
        %v546 = vpop.f32.mrf.mxu0
        %v547 = vadd.f32 %v465, %v546
        %548 = vmatmul.f32.gmra.mxu0 %v509
        %v549 = vpop.f32.mrf.mxu0
        %v550 = vadd.f32 %v465, %v549
        %551 = vmatmul.f32.gmra.mxu0 %v512
        %v552 = vpop.f32.mrf.mxu0
        %v553 = vadd.f32 %v465, %v552
        %554 = vdwg.mxu0
        %555 = vmatpush.msra.mxu0 0.0
        %556 = vmatpush.msra.mxu0 0.0
        %557 = vmatpush.msra.mxu0 0.0
        %558 = vmatpush.msra.mxu0 0.0
        %559 = vmatpush.msra.mxu0 0.0
        %560 = vmatpush.msra.mxu0 0.0
        %561 = vmatpush.msra.mxu0 0.0
        %562 = vmatpush.msra.mxu0 0.0
        %563 = vmatpush.msra.mxu0 0.0
        %564 = vmatpush.msra.mxu0 0.0
        %565 = vmatpush.msra.mxu0 0.0
        %566 = vmatpush.msra.mxu0 0.0
        %567 = vmatpush.msra.mxu0 %v486
        %568 = vmatpush.msra.mxu0 %v482
        %569 = vmatpush.msra.mxu0 %v478
        %570 = vmatpush.msra.mxu0 %v474
        %571 = vmatmul.f32.gmra.mxu0 %v491
        %v572 = vpop.f32.mrf.mxu0
        %v573 = vadd.f32 %v466, %v572
        %574 = vmatmul.f32.gmra.mxu0 %v494
        %v575 = vpop.f32.mrf.mxu0
        %v576 = vadd.f32 %v466, %v575
        %577 = vmatmul.f32.gmra.mxu0 %v497
        %v578 = vpop.f32.mrf.mxu0
        %v579 = vadd.f32 %v466, %v578
        %580 = vmatmul.f32.gmra.mxu0 %v500
        %v581 = vpop.f32.mrf.mxu0
        %v582 = vadd.f32 %v466, %v581
        %583 = vmatmul.f32.gmra.mxu0 %v503
        %v584 = vpop.f32.mrf.mxu0
        %v585 = vadd.f32 %v466, %v584
        %586 = vmatmul.f32.gmra.mxu0 %v506
        %v587 = vpop.f32.mrf.mxu0
        %v588 = vadd.f32 %v466, %v587
        %589 = vmatmul.f32.gmra.mxu0 %v509
        %v590 = vpop.f32.mrf.mxu0
        %v591 = vadd.f32 %v466, %v590
        %592 = vmatmul.f32.gmra.mxu0 %v512
        %v593 = vpop.f32.mrf.mxu0
        %v594 = vadd.f32 %v466, %v593
        %595 = vdwg.mxu0
        %596 = vmatpush.msra.mxu0 0.0
        %597 = vmatpush.msra.mxu0 0.0
        %598 = vmatpush.msra.mxu0 0.0
        %599 = vmatpush.msra.mxu0 0.0
        %600 = vmatpush.msra.mxu0 0.0
        %601 = vmatpush.msra.mxu0 0.0
        %602 = vmatpush.msra.mxu0 0.0
        %603 = vmatpush.msra.mxu0 0.0
        %604 = vmatpush.msra.mxu0 0.0
        %605 = vmatpush.msra.mxu0 0.0
        %606 = vmatpush.msra.mxu0 0.0
        %607 = vmatpush.msra.mxu0 0.0
        %608 = vmatpush.msra.mxu0 %v487
        %609 = vmatpush.msra.mxu0 %v483
        %610 = vmatpush.msra.mxu0 %v479
        %611 = vmatpush.msra.mxu0 %v475
        %612 = vmatmul.f32.gmra.mxu0 %v491
        %v613 = vpop.f32.mrf.mxu0
        %v614 = vadd.f32 %v467, %v613
        %615 = vmatmul.f32.gmra.mxu0 %v494
        %v616 = vpop.f32.mrf.mxu0
        %v617 = vadd.f32 %v467, %v616
        %618 = vmatmul.f32.gmra.mxu0 %v497
        %v619 = vpop.f32.mrf.mxu0
        %v620 = vadd.f32 %v467, %v619
        %621 = vmatmul.f32.gmra.mxu0 %v500
        %v622 = vpop.f32.mrf.mxu0
        %v623 = vadd.f32 %v467, %v622
        %624 = vmatmul.f32.gmra.mxu0 %v503
        %v625 = vpop.f32.mrf.mxu0
        %v626 = vadd.f32 %v467, %v625
        %627 = vmatmul.f32.gmra.mxu0 %v506
        %v628 = vpop.f32.mrf.mxu0
        %v629 = vadd.f32 %v467, %v628
        %630 = vmatmul.f32.gmra.mxu0 %v509
        %v631 = vpop.f32.mrf.mxu0
        %v632 = vadd.f32 %v467, %v631
        %633 = vmatmul.f32.gmra.mxu0 %v512
        %v634 = vpop.f32.mrf.mxu0
        %v635 = vadd.f32 %v467, %v634
        %636 = vdwg.mxu0
        %637 = vmatpush.msra.mxu0 0.0
        %638 = vmatpush.msra.mxu0 0.0
        %639 = vmatpush.msra.mxu0 0.0
        %640 = vmatpush.msra.mxu0 0.0
        %641 = vmatpush.msra.mxu0 0.0
        %642 = vmatpush.msra.mxu0 0.0
        %643 = vmatpush.msra.mxu0 0.0
        %644 = vmatpush.msra.mxu0 0.0
        %645 = vmatpush.msra.mxu0 0.0
        %646 = vmatpush.msra.mxu0 0.0
        %647 = vmatpush.msra.mxu0 0.0
        %648 = vmatpush.msra.mxu0 0.0
        %649 = vmatpush.msra.mxu0 %v488
        %650 = vmatpush.msra.mxu0 %v484
        %651 = vmatpush.msra.mxu0 %v480
        %652 = vmatpush.msra.mxu0 %v476
        %653 = vmatmul.f32.gmra.mxu0 %v491
        %v654 = vpop.f32.mrf.mxu0
        %v655 = vadd.f32 %v468, %v654
        %656 = vmatmul.f32.gmra.mxu0 %v494
        %v657 = vpop.f32.mrf.mxu0
        %v658 = vadd.f32 %v468, %v657
        %659 = vmatmul.f32.gmra.mxu0 %v497
        %v660 = vpop.f32.mrf.mxu0
        %v661 = vadd.f32 %v468, %v660
        %662 = vmatmul.f32.gmra.mxu0 %v500
        %v663 = vpop.f32.mrf.mxu0
        %v664 = vadd.f32 %v468, %v663
        %665 = vmatmul.f32.gmra.mxu0 %v503
        %v666 = vpop.f32.mrf.mxu0
        %v667 = vadd.f32 %v468, %v666
        %668 = vmatmul.f32.gmra.mxu0 %v506
        %v669 = vpop.f32.mrf.mxu0
        %v670 = vadd.f32 %v468, %v669
        %671 = vmatmul.f32.gmra.mxu0 %v509
        %v672 = vpop.f32.mrf.mxu0
        %v673 = vadd.f32 %v468, %v672
        %674 = vmatmul.f32.gmra.mxu0 %v512
        %v675 = vpop.f32.mrf.mxu0
        %v676 = vadd.f32 %v468, %v675
        %677 = vdwg.mxu0
        %678 = vst [vmem:[#allocation2] sm:$0xff] %v532
        %679 = vst [vmem:[#allocation2 + $0x8] sm:$0xff] %v573
        %680 = vst [vmem:[#allocation2 + $0x10] sm:$0xff] %v614
        %681 = vst [vmem:[#allocation2 + $0x18] sm:$0xff] %v655
        %682 = vst [vmem:[#allocation2 + $0x20] sm:$0xff] %v535
        %683 = vst [vmem:[#allocation2 + $0x28] sm:$0xff] %v576
        %684 = vst [vmem:[#allocation2 + $0x30] sm:$0xff] %v617
        %685 = vst [vmem:[#allocation2 + $0x38] sm:$0xff] %v658
        %686 = vst [vmem:[#allocation2 + $0x40] sm:$0xff] %v538
        %687 = vst [vmem:[#allocation2 + $0x48] sm:$0xff] %v579
        %688 = vst [vmem:[#allocation2 + $0x50] sm:$0xff] %v620
        %689 = vst [vmem:[#allocation2 + $0x58] sm:$0xff] %v661
        %690 = vst [vmem:[#allocation2 + $0x60] sm:$0xff] %v541
        %691 = vst [vmem:[#allocation2 + $0x68] sm:$0xff] %v582
        %692 = vst [vmem:[#allocation2 + $0x70] sm:$0xff] %v623
        %693 = vst [vmem:[#allocation2 + $0x78] sm:$0xff] %v664
        %694 = vst [vmem:[#allocation2 + $0x80] sm:$0xff] %v544
        %695 = vst [vmem:[#allocation2 + $0x88] sm:$0xff] %v585
        %696 = vst [vmem:[#allocation2 + $0x90] sm:$0xff] %v626
        %697 = vst [vmem:[#allocation2 + $0x98] sm:$0xff] %v667
        %698 = vst [vmem:[#allocation2 + $0xa0] sm:$0xff] %v547
        %699 = vst [vmem:[#allocation2 + $0xa8] sm:$0xff] %v588
        %700 = vst [vmem:[#allocation2 + $0xb0] sm:$0xff] %v629
        %701 = vst [vmem:[#allocation2 + $0xb8] sm:$0xff] %v670
        %702 = vst [vmem:[#allocation2 + $0xc0] sm:$0xff] %v550
        %703 = vst [vmem:[#allocation2 + $0xc8] sm:$0xff] %v591
        %704 = vst [vmem:[#allocation2 + $0xd0] sm:$0xff] %v632
        %705 = vst [vmem:[#allocation2 + $0xd8] sm:$0xff] %v673
        %706 = vst [vmem:[#allocation2 + $0xe0] sm:$0xff] %v553
        %707 = vst [vmem:[#allocation2 + $0xe8] sm:$0xff] %v594
        %708 = vst [vmem:[#allocation2 + $0xf0] sm:$0xff] %v635
        %709 = vst [vmem:[#allocation2 + $0xf8] sm:$0xff] %v676
        %v710 = vld [vmem:[#allocation2] sm:$0xff]
        %v711 = vld [vmem:[#allocation2 + $0x8] sm:$0xff]
        %v712 = vld [vmem:[#allocation2 + $0x10] sm:$0xff]
        %v713 = vld [vmem:[#allocation2 + $0x18] sm:$0xff]
        %v714 = vld [vmem:[#allocation3 + $0x80] sm:$0xff]
        %v715 = vld [vmem:[#allocation3 + $0x88] sm:$0xff]
        %v716 = vld [vmem:[#allocation3 + $0x90] sm:$0xff]
        %v717 = vld [vmem:[#allocation3 + $0x98] sm:$0xff]
        %v718 = vld [vmem:[#allocation3 + $0xa0] sm:$0xff]
        %v719 = vld [vmem:[#allocation3 + $0xa8] sm:$0xff]
        %v720 = vld [vmem:[#allocation3 + $0xb0] sm:$0xff]
        %v721 = vld [vmem:[#allocation3 + $0xb8] sm:$0xff]
        %v722 = vld [vmem:[#allocation3 + $0xc0] sm:$0xff]
        %v723 = vld [vmem:[#allocation3 + $0xc8] sm:$0xff]
        %v724 = vld [vmem:[#allocation3 + $0xd0] sm:$0xff]
        %v725 = vld [vmem:[#allocation3 + $0xd8] sm:$0xff]
        %v726 = vld [vmem:[#allocation3 + $0xe0] sm:$0xff]
        %v727 = vld [vmem:[#allocation3 + $0xe8] sm:$0xff]
        %v728 = vld [vmem:[#allocation3 + $0xf0] sm:$0xff]
        %v729 = vld [vmem:[#allocation3 + $0xf8] sm:$0xff]
        %v730 = vld [vmem:[#allocation3 + $0x100] sm:$0xff]
        %v731 = vld [vmem:[#allocation3 + $0x108] sm:$0xff]
        %v732 = vld [vmem:[#allocation3 + $0x110] sm:$0xff]
        %v733 = vld [vmem:[#allocation3 + $0x118] sm:$0xff]
        %v734 = vld [vmem:[#allocation3 + $0x120] sm:$0xff]
        %v735 = vld [vmem:[#allocation3 + $0x128] sm:$0xff]
        %v736 = vld [vmem:[#allocation3 + $0x130] sm:$0xff]
        %v737 = vld [vmem:[#allocation3 + $0x138] sm:$0xff]
        %v738 = vld [vmem:[#allocation3 + $0x140] sm:$0xff]
        %v739 = vld [vmem:[#allocation3 + $0x148] sm:$0xff]
        %v740 = vld [vmem:[#allocation3 + $0x150] sm:$0xff]
        %v741 = vld [vmem:[#allocation3 + $0x158] sm:$0xff]
        %v742 = vld [vmem:[#allocation3 + $0x160] sm:$0xff]
        %v743 = vld [vmem:[#allocation3 + $0x168] sm:$0xff]
        %v744 = vld [vmem:[#allocation3 + $0x170] sm:$0xff]
        %v745 = vld [vmem:[#allocation3 + $0x178] sm:$0xff]
        %vm746 = vcmask 523264
        %v748 = vsel %vm746, 0.0, 0
        %750 = vmatpush.msra.mxu0 0.0
        %751 = vmatpush.msra.mxu0 0.0
        %752 = vmatpush.msra.mxu0 0.0
        %753 = vmatpush.msra.mxu0 0.0
        %754 = vmatpush.msra.mxu0 0.0
        %755 = vmatpush.msra.mxu0 0.0
        %756 = vmatpush.msra.mxu0 0.0
        %757 = vmatpush.msra.mxu0 0.0
        %758 = vmatpush.msra.mxu0 %v742
        %759 = vmatpush.msra.mxu0 %v738
        %760 = vmatpush.msra.mxu0 %v734
        %761 = vmatpush.msra.mxu0 %v730
        %762 = vmatpush.msra.mxu0 %v726
        %763 = vmatpush.msra.mxu0 %v722
        %764 = vmatpush.msra.mxu0 %v718
        %765 = vmatpush.msra.mxu0 %v714
        %766 = vmatmul.f32.gmra.mxu0 %v748
        %v767 = vpop.f32.mrf.mxu0
        %v768 = vadd.f32 0.0, %v767
        %769 = vdwg.mxu0
        %770 = vmatpush.msra.mxu0 0.0
        %771 = vmatpush.msra.mxu0 0.0
        %772 = vmatpush.msra.mxu0 0.0
        %773 = vmatpush.msra.mxu0 0.0
        %774 = vmatpush.msra.mxu0 0.0
        %775 = vmatpush.msra.mxu0 0.0
        %776 = vmatpush.msra.mxu0 0.0
        %777 = vmatpush.msra.mxu0 0.0
        %778 = vmatpush.msra.mxu0 %v743
        %779 = vmatpush.msra.mxu0 %v739
        %780 = vmatpush.msra.mxu0 %v735
        %781 = vmatpush.msra.mxu0 %v731
        %782 = vmatpush.msra.mxu0 %v727
        %783 = vmatpush.msra.mxu0 %v723
        %784 = vmatpush.msra.mxu0 %v719
        %785 = vmatpush.msra.mxu0 %v715
        %786 = vmatmul.f32.gmra.mxu0 %v748
        %v787 = vpop.f32.mrf.mxu0
        %v788 = vadd.f32 0.0, %v787
        %789 = vdwg.mxu0
        %790 = vmatpush.msra.mxu0 0.0
        %791 = vmatpush.msra.mxu0 0.0
        %792 = vmatpush.msra.mxu0 0.0
        %793 = vmatpush.msra.mxu0 0.0
        %794 = vmatpush.msra.mxu0 0.0
        %795 = vmatpush.msra.mxu0 0.0
        %796 = vmatpush.msra.mxu0 0.0
        %797 = vmatpush.msra.mxu0 0.0
        %798 = vmatpush.msra.mxu0 %v744
        %799 = vmatpush.msra.mxu0 %v740
        %800 = vmatpush.msra.mxu0 %v736
        %801 = vmatpush.msra.mxu0 %v732
        %802 = vmatpush.msra.mxu0 %v728
        %803 = vmatpush.msra.mxu0 %v724
        %804 = vmatpush.msra.mxu0 %v720
        %805 = vmatpush.msra.mxu0 %v716
        %806 = vmatmul.f32.gmra.mxu0 %v748
        %v807 = vpop.f32.mrf.mxu0
        %v808 = vadd.f32 0.0, %v807
        %809 = vdwg.mxu0
        %810 = vmatpush.msra.mxu0 0.0
        %811 = vmatpush.msra.mxu0 0.0
        %812 = vmatpush.msra.mxu0 0.0
        %813 = vmatpush.msra.mxu0 0.0
        %814 = vmatpush.msra.mxu0 0.0
        %815 = vmatpush.msra.mxu0 0.0
        %816 = vmatpush.msra.mxu0 0.0
        %817 = vmatpush.msra.mxu0 0.0
        %818 = vmatpush.msra.mxu0 %v745
        %819 = vmatpush.msra.mxu0 %v741
        %820 = vmatpush.msra.mxu0 %v737
        %821 = vmatpush.msra.mxu0 %v733
        %822 = vmatpush.msra.mxu0 %v729
        %823 = vmatpush.msra.mxu0 %v725
        %824 = vmatpush.msra.mxu0 %v721
        %825 = vmatpush.msra.mxu0 %v717
        %826 = vmatmul.f32.gmra.mxu0 %v748
        %v827 = vpop.f32.mrf.mxu0
        %v828 = vadd.f32 0.0, %v827
        %829 = vdwg.mxu0
        %v830 = vadd.f32 %v710, %v768
        %v831 = vadd.f32 %v711, %v788
        %v832 = vadd.f32 %v712, %v808
        %v833 = vadd.f32 %v713, %v828
        %v834 = vld [vmem:[#allocation3 + $0x180] sm:$0xff]
        %v835 = vld [vmem:[#allocation3 + $0x188] sm:$0xff]
        %v836 = vld [vmem:[#allocation3 + $0x190] sm:$0xff]
        %v837 = vld [vmem:[#allocation3 + $0x198] sm:$0xff]
        %v838 = vld [vmem:[#allocation3 + $0x1a0] sm:$0xff]
        %v839 = vld [vmem:[#allocation3 + $0x1a8] sm:$0xff]
        %v840 = vld [vmem:[#allocation3 + $0x1b0] sm:$0xff]
        %v841 = vld [vmem:[#allocation3 + $0x1b8] sm:$0xff]
        %v842 = vld [vmem:[#allocation3 + $0x1c0] sm:$0xff]
        %v843 = vld [vmem:[#allocation3 + $0x1c8] sm:$0xff]
        %v844 = vld [vmem:[#allocation3 + $0x1d0] sm:$0xff]
        %v845 = vld [vmem:[#allocation3 + $0x1d8] sm:$0xff]
        %v846 = vld [vmem:[#allocation3 + $0x1e0] sm:$0xff]
        %v847 = vld [vmem:[#allocation3 + $0x1e8] sm:$0xff]
        %v848 = vld [vmem:[#allocation3 + $0x1f0] sm:$0xff]
        %v849 = vld [vmem:[#allocation3 + $0x1f8] sm:$0xff]
        %v850 = vsel %vm489, 0.0, 0
        %852 = vmatpush.msra.mxu0 0.0
        %853 = vmatpush.msra.mxu0 0.0
        %854 = vmatpush.msra.mxu0 0.0
        %855 = vmatpush.msra.mxu0 0.0
        %856 = vmatpush.msra.mxu0 0.0
        %857 = vmatpush.msra.mxu0 0.0
        %858 = vmatpush.msra.mxu0 0.0
        %859 = vmatpush.msra.mxu0 0.0
        %860 = vmatpush.msra.mxu0 0.0
        %861 = vmatpush.msra.mxu0 0.0
        %862 = vmatpush.msra.mxu0 0.0
        %863 = vmatpush.msra.mxu0 0.0
        %864 = vmatpush.msra.mxu0 %v846
        %865 = vmatpush.msra.mxu0 %v842
        %866 = vmatpush.msra.mxu0 %v838
        %867 = vmatpush.msra.mxu0 %v834
        %868 = vmatmul.f32.gmra.mxu0 %v850
        %v869 = vpop.f32.mrf.mxu0
        %v870 = vadd.f32 0.0, %v869
        %871 = vdwg.mxu0
        %872 = vmatpush.msra.mxu0 0.0
        %873 = vmatpush.msra.mxu0 0.0
        %874 = vmatpush.msra.mxu0 0.0
        %875 = vmatpush.msra.mxu0 0.0
        %876 = vmatpush.msra.mxu0 0.0
        %877 = vmatpush.msra.mxu0 0.0
        %878 = vmatpush.msra.mxu0 0.0
        %879 = vmatpush.msra.mxu0 0.0
        %880 = vmatpush.msra.mxu0 0.0
        %881 = vmatpush.msra.mxu0 0.0
        %882 = vmatpush.msra.mxu0 0.0
        %883 = vmatpush.msra.mxu0 0.0
        %884 = vmatpush.msra.mxu0 %v847
        %885 = vmatpush.msra.mxu0 %v843
        %886 = vmatpush.msra.mxu0 %v839
        %887 = vmatpush.msra.mxu0 %v835
        %888 = vmatmul.f32.gmra.mxu0 %v850
        %v889 = vpop.f32.mrf.mxu0
        %v890 = vadd.f32 0.0, %v889
        %891 = vdwg.mxu0
        %892 = vmatpush.msra.mxu0 0.0
        %893 = vmatpush.msra.mxu0 0.0
        %894 = vmatpush.msra.mxu0 0.0
        %895 = vmatpush.msra.mxu0 0.0
        %896 = vmatpush.msra.mxu0 0.0
        %897 = vmatpush.msra.mxu0 0.0
        %898 = vmatpush.msra.mxu0 0.0
        %899 = vmatpush.msra.mxu0 0.0
        %900 = vmatpush.msra.mxu0 0.0
        %901 = vmatpush.msra.mxu0 0.0
        %902 = vmatpush.msra.mxu0 0.0
        %903 = vmatpush.msra.mxu0 0.0
        %904 = vmatpush.msra.mxu0 %v848
        %905 = vmatpush.msra.mxu0 %v844
        %906 = vmatpush.msra.mxu0 %v840
        %907 = vmatpush.msra.mxu0 %v836
        %908 = vmatmul.f32.gmra.mxu0 %v850
        %v909 = vpop.f32.mrf.mxu0
        %v910 = vadd.f32 0.0, %v909
        %911 = vdwg.mxu0
        %912 = vmatpush.msra.mxu0 0.0
        %913 = vmatpush.msra.mxu0 0.0
        %914 = vmatpush.msra.mxu0 0.0
        %915 = vmatpush.msra.mxu0 0.0
        %916 = vmatpush.msra.mxu0 0.0
        %917 = vmatpush.msra.mxu0 0.0
        %918 = vmatpush.msra.mxu0 0.0
        %919 = vmatpush.msra.mxu0 0.0
        %920 = vmatpush.msra.mxu0 0.0
        %921 = vmatpush.msra.mxu0 0.0
        %922 = vmatpush.msra.mxu0 0.0
        %923 = vmatpush.msra.mxu0 0.0
        %924 = vmatpush.msra.mxu0 %v849
        %925 = vmatpush.msra.mxu0 %v845
        %926 = vmatpush.msra.mxu0 %v841
        %927 = vmatpush.msra.mxu0 %v837
        %928 = vmatmul.f32.gmra.mxu0 %v850
        %v929 = vpop.f32.mrf.mxu0
        %v930 = vadd.f32 0.0, %v929
        %931 = vdwg.mxu0
        %v932 = vadd.f32 %v830, %v870
        %v933 = vadd.f32 %v831, %v890
        %v934 = vadd.f32 %v832, %v910
        %v935 = vadd.f32 %v833, %v930
        %v936 = vxor.u32 %v932, 2147483648
        %v937 = vmul.f32 %v936, 1.442695
        %v938 = vpow.pop %v937
        %v939 = vadd.f32 %v938, 1.0
        %v940 = vrcp.pop %v939
        %v941 = vmul.f32 %v939, %v940
        %v942 = vsub.f32 1.0, %v941
        %v943 = vmul.f32 %v940, %v942
        %v944 = vadd.f32 %v940, %v943
        %vm945 = vweird.f32 %v939
        %vm946 = vweird.f32 %v940
        %vm947 = vmor %vm945, %vm946
        %v948 = vsel %vm947, %v940, %v944
        %v949 = vand.u32 2147483647, %v939
        %vm950 = vcmp.eq.f32.partialorder %v949, 8.507059e+37
        %v951 = vand.u32 %v939, 2147483648
        %v952 = vor.u32 1.1754944e-38, %v951
        %v953 = vsel %vm950, %v952, %v948
        %v954 = vmul.f32 1.0, %v953
        %v955 = vxor.u32 %v933, 2147483648
        %v956 = vmul.f32 %v955, 1.442695
        %v957 = vpow.pop %v956
        %v958 = vadd.f32 %v957, 1.0
        %v959 = vrcp.pop %v958
        %v960 = vmul.f32 %v958, %v959
        %v961 = vsub.f32 1.0, %v960
        %v962 = vmul.f32 %v959, %v961
        %v963 = vadd.f32 %v959, %v962
        %vm964 = vweird.f32 %v958
        %vm965 = vweird.f32 %v959
        %vm966 = vmor %vm964, %vm965
        %v967 = vsel %vm966, %v959, %v963
        %v968 = vand.u32 2147483647, %v958
        %vm969 = vcmp.eq.f32.partialorder %v968, 8.507059e+37
        %v970 = vand.u32 %v958, 2147483648
        %v971 = vor.u32 1.1754944e-38, %v970
        %v972 = vsel %vm969, %v971, %v967
        %v973 = vmul.f32 1.0, %v972
        %v974 = vxor.u32 %v934, 2147483648
        %v975 = vmul.f32 %v974, 1.442695
        %v976 = vpow.pop %v975
        %v977 = vadd.f32 %v976, 1.0
        %v978 = vrcp.pop %v977
        %v979 = vmul.f32 %v977, %v978
        %v980 = vsub.f32 1.0, %v979
        %v981 = vmul.f32 %v978, %v980
        %v982 = vadd.f32 %v978, %v981
        %vm983 = vweird.f32 %v977
        %vm984 = vweird.f32 %v978
        %vm985 = vmor %vm983, %vm984
        %v986 = vsel %vm985, %v978, %v982
        %v987 = vand.u32 2147483647, %v977
        %vm988 = vcmp.eq.f32.partialorder %v987, 8.507059e+37
        %v989 = vand.u32 %v977, 2147483648
        %v990 = vor.u32 1.1754944e-38, %v989
        %v991 = vsel %vm988, %v990, %v986
        %v992 = vmul.f32 1.0, %v991
        %v993 = vtanh.pop %v935
        %v994 = vmul.f32 %v973, 0.0
        %v995 = vmul.f32 %v954, %v993
        %v996 = vadd.f32 %v994, %v995
        %v997 = vtanh.pop %v996
        %v998 = vmul.f32 %v992, %v997
        %v999 = vld [vmem:[#allocation3 + $0x200] sm:$0xff]
        %v1000 = vld [vmem:[#allocation3 + $0x208] sm:$0xff]
        %v1001 = vld [vmem:[#allocation3 + $0x210] sm:$0xff]
        %v1002 = vld [vmem:[#allocation3 + $0x218] sm:$0xff]
        %v1003 = vld [vmem:[#allocation3 + $0x220] sm:$0xff]
        %v1004 = vld [vmem:[#allocation3 + $0x228] sm:$0xff]
        %v1005 = vld [vmem:[#allocation3 + $0x230] sm:$0xff]
        %v1006 = vld [vmem:[#allocation3 + $0x238] sm:$0xff]
        %v1007 = vld [vmem:[#allocation3 + $0x240] sm:$0xff]
        %v1008 = vld [vmem:[#allocation3 + $0x248] sm:$0xff]
        %v1009 = vld [vmem:[#allocation3 + $0x250] sm:$0xff]
        %v1010 = vld [vmem:[#allocation3 + $0x258] sm:$0xff]
        %v1011 = vld [vmem:[#allocation3 + $0x260] sm:$0xff]
        %v1012 = vld [vmem:[#allocation3 + $0x268] sm:$0xff]
        %v1013 = vld [vmem:[#allocation3 + $0x270] sm:$0xff]
        %v1014 = vld [vmem:[#allocation3 + $0x278] sm:$0xff]
        %v1015 = vld [vmem:[#allocation3 + $0x280] sm:$0xff]
        %v1016 = vld [vmem:[#allocation3 + $0x288] sm:$0xff]
        %v1017 = vld [vmem:[#allocation3 + $0x290] sm:$0xff]
        %v1018 = vld [vmem:[#allocation3 + $0x298] sm:$0xff]
        %v1019 = vld [vmem:[#allocation3 + $0x2a0] sm:$0xff]
        %v1020 = vld [vmem:[#allocation3 + $0x2a8] sm:$0xff]
        %v1021 = vld [vmem:[#allocation3 + $0x2b0] sm:$0xff]
        %v1022 = vld [vmem:[#allocation3 + $0x2b8] sm:$0xff]
        %v1023 = vld [vmem:[#allocation3 + $0x2c0] sm:$0xff]
        %v1024 = vld [vmem:[#allocation3 + $0x2c8] sm:$0xff]
        %v1025 = vld [vmem:[#allocation3 + $0x2d0] sm:$0xff]
        %v1026 = vld [vmem:[#allocation3 + $0x2d8] sm:$0xff]
        %v1027 = vld [vmem:[#allocation3 + $0x2e0] sm:$0xff]
        %v1028 = vld [vmem:[#allocation3 + $0x2e8] sm:$0xff]
        %v1029 = vld [vmem:[#allocation3 + $0x2f0] sm:$0xff]
        %v1030 = vld [vmem:[#allocation3 + $0x2f8] sm:$0xff]
        %v1032 = vsel %vm746, %v998, 0
        %1034 = vmatpush.msra.mxu0 0.0
        %1035 = vmatpush.msra.mxu0 0.0
        %1036 = vmatpush.msra.mxu0 0.0
        %1037 = vmatpush.msra.mxu0 0.0
        %1038 = vmatpush.msra.mxu0 0.0
        %1039 = vmatpush.msra.mxu0 0.0
        %1040 = vmatpush.msra.mxu0 0.0
        %1041 = vmatpush.msra.mxu0 0.0
        %1042 = vmatpush.msra.mxu0 %v1027
        %1043 = vmatpush.msra.mxu0 %v1023
        %1044 = vmatpush.msra.mxu0 %v1019
        %1045 = vmatpush.msra.mxu0 %v1015
        %1046 = vmatpush.msra.mxu0 %v1011
        %1047 = vmatpush.msra.mxu0 %v1007
        %1048 = vmatpush.msra.mxu0 %v1003
        %1049 = vmatpush.msra.mxu0 %v999
        %1050 = vmatmul.f32.gmra.mxu0 %v1032
        %v1051 = vpop.f32.mrf.mxu0
        %v1052 = vadd.f32 0.0, %v1051
        %1053 = vdwg.mxu0
        %1054 = vmatpush.msra.mxu0 0.0
        %1055 = vmatpush.msra.mxu0 0.0
        %1056 = vmatpush.msra.mxu0 0.0
        %1057 = vmatpush.msra.mxu0 0.0
        %1058 = vmatpush.msra.mxu0 0.0
        %1059 = vmatpush.msra.mxu0 0.0
        %1060 = vmatpush.msra.mxu0 0.0
        %1061 = vmatpush.msra.mxu0 0.0
        %1062 = vmatpush.msra.mxu0 %v1028
        %1063 = vmatpush.msra.mxu0 %v1024
        %1064 = vmatpush.msra.mxu0 %v1020
        %1065 = vmatpush.msra.mxu0 %v1016
        %1066 = vmatpush.msra.mxu0 %v1012
        %1067 = vmatpush.msra.mxu0 %v1008
        %1068 = vmatpush.msra.mxu0 %v1004
        %1069 = vmatpush.msra.mxu0 %v1000
        %1070 = vmatmul.f32.gmra.mxu0 %v1032
        %v1071 = vpop.f32.mrf.mxu0
        %v1072 = vadd.f32 0.0, %v1071
        %1073 = vdwg.mxu0
        %1074 = vmatpush.msra.mxu0 0.0
        %1075 = vmatpush.msra.mxu0 0.0
        %1076 = vmatpush.msra.mxu0 0.0
        %1077 = vmatpush.msra.mxu0 0.0
        %1078 = vmatpush.msra.mxu0 0.0
        %1079 = vmatpush.msra.mxu0 0.0
        %1080 = vmatpush.msra.mxu0 0.0
        %1081 = vmatpush.msra.mxu0 0.0
        %1082 = vmatpush.msra.mxu0 %v1029
        %1083 = vmatpush.msra.mxu0 %v1025
        %1084 = vmatpush.msra.mxu0 %v1021
        %1085 = vmatpush.msra.mxu0 %v1017
        %1086 = vmatpush.msra.mxu0 %v1013
        %1087 = vmatpush.msra.mxu0 %v1009
        %1088 = vmatpush.msra.mxu0 %v1005
        %1089 = vmatpush.msra.mxu0 %v1001
        %1090 = vmatmul.f32.gmra.mxu0 %v1032
        %v1091 = vpop.f32.mrf.mxu0
        %v1092 = vadd.f32 0.0, %v1091
        %1093 = vdwg.mxu0
        %1094 = vmatpush.msra.mxu0 0.0
        %1095 = vmatpush.msra.mxu0 0.0
        %1096 = vmatpush.msra.mxu0 0.0
        %1097 = vmatpush.msra.mxu0 0.0
        %1098 = vmatpush.msra.mxu0 0.0
        %1099 = vmatpush.msra.mxu0 0.0
        %1100 = vmatpush.msra.mxu0 0.0
        %1101 = vmatpush.msra.mxu0 0.0
        %1102 = vmatpush.msra.mxu0 %v1030
        %1103 = vmatpush.msra.mxu0 %v1026
        %1104 = vmatpush.msra.mxu0 %v1022
        %1105 = vmatpush.msra.mxu0 %v1018
        %1106 = vmatpush.msra.mxu0 %v1014
        %1107 = vmatpush.msra.mxu0 %v1010
        %1108 = vmatpush.msra.mxu0 %v1006
        %1109 = vmatpush.msra.mxu0 %v1002
        %1110 = vmatmul.f32.gmra.mxu0 %v1032
        %v1111 = vpop.f32.mrf.mxu0
        %v1112 = vadd.f32 0.0, %v1111
        %1113 = vdwg.mxu0
        %v1114 = vtanh.pop %v1052
        %v1115 = vtanh.pop %v1072
        %v1116 = vtanh.pop %v1092
        %v1117 = vtanh.pop %v1112
        %v1118 = vadd.f32 %v1114, %v1115
        %v1119 = vadd.f32 %v1118, %v1116
        %v1120 = vadd.f32 %v1119, %v1117
        %v1121 = vmul.f32 %v1120, 0.25
        %v1122 = vmul.f32 %v1121, 1.442695
        %v1123 = vpow.pop %v1122
        %v1124 = vsel %vm489, %v1123, 0.0
        %1125 = vadd.xlane.f32.xlu0 %v1124
        %v1126 = vpop.xlane.xlu0 %1125
        %v1127 = vrcp.pop %v1126
        %1129 = vrot.lane.b32.xlu0 %v1123, 96
        %v1130 = vpop.permute.xlu0 %1129
        %v1132 = vsel %vm204, %v1130, 0.0
        %1133 = vadd.xlane.f32.xlu0 %v1132
        %v1134 = vpop.xlane.xlu0 %1133
        %v1135 = vrcp.pop %v1134
        %1136 = vrot.lane.b32.xlu0 %v1123, 80
        %v1137 = vpop.permute.xlu0 %1136
        %v1139 = vsel %vm204, %v1137, 0.0
        %1140 = vadd.xlane.f32.xlu0 %v1139
        %v1141 = vpop.xlane.xlu0 %1140
        %v1142 = vrcp.pop %v1141
        %1143 = vrot.lane.b32.xlu0 %v1123, 64
        %v1144 = vpop.permute.xlu0 %1143
        %v1146 = vsel %vm489, %v1144, 0.0
        %1147 = vadd.xlane.f32.xlu0 %v1146
        %v1148 = vpop.xlane.xlu0 %1147
        %v1149 = vrcp.pop %v1148
        %v1150 = vmul.f32 %v1127, 0.7
        %v1151 = vmul.f32 %v1123, %v1150
        %v1152 = vmul.f32 %v1149, 0.3
        %v1153 = vmul.f32 %v1123, %v1152
        %1155 = vrot.lane.b32.xlu0 %v1153, 64
        %v1156 = vpop.permute.xlu0 %1155
        %v1158 = vadd.f32 %v1151, %v1156
        %v1159 = vmul.f32 %v1123, %v1135
        %v1160 = vmul.f32 %v1123, %v1142
        %v1161 = vsel %vm489, %v1158, %v1159
        %vm1162 = vcmask 392192
        %v1163 = vsel %vm1162, %v1161, %v1160
        %v1164 = vmul.f32 %v998, %v1163
        %v1165 = vld [vmem:[#allocation3 + $0x300] sm:$0xff]
        %v1166 = vld [vmem:[#allocation3 + $0x320] sm:$0xff]
        %v1167 = vld [vmem:[#allocation3 + $0x340] sm:$0xff]
        %v1168 = vld [vmem:[#allocation3 + $0x360] sm:$0xff]
        %v1169 = vld [vmem:[#allocation3 + $0x380] sm:$0xff]
        %v1170 = vld [vmem:[#allocation3 + $0x3a0] sm:$0xff]
        %v1171 = vld [vmem:[#allocation3 + $0x3c0] sm:$0xff]
        %v1172 = vld [vmem:[#allocation3 + $0x3e0] sm:$0xff]
        %v1174 = vsel %vm746, %v1164, 0
        %1176 = vmatpush.msra.mxu0 0.0
        %1177 = vmatpush.msra.mxu0 0.0
        %1178 = vmatpush.msra.mxu0 0.0
        %1179 = vmatpush.msra.mxu0 0.0
        %1180 = vmatpush.msra.mxu0 0.0
        %1181 = vmatpush.msra.mxu0 0.0
        %1182 = vmatpush.msra.mxu0 0.0
        %1183 = vmatpush.msra.mxu0 0.0
        %1184 = vmatpush.msra.mxu0 %v1172
        %1185 = vmatpush.msra.mxu0 %v1171
        %1186 = vmatpush.msra.mxu0 %v1170
        %1187 = vmatpush.msra.mxu0 %v1169
        %1188 = vmatpush.msra.mxu0 %v1168
        %1189 = vmatpush.msra.mxu0 %v1167
        %1190 = vmatpush.msra.mxu0 %v1166
        %1191 = vmatpush.msra.mxu0 %v1165
        %1192 = vmatmul.f32.gmra.mxu0 %v1174
        %v1193 = vpop.f32.mrf.mxu0
        %v1194 = vadd.f32 %v161, %v1193
        %1195 = vdwg.mxu0
        %v1196 = vld [vmem:[#allocation3 + $0x308] sm:$0xff]
        %v1197 = vld [vmem:[#allocation3 + $0x310] sm:$0xff]
        %v1198 = vld [vmem:[#allocation3 + $0x328] sm:$0xff]
        %v1199 = vld [vmem:[#allocation3 + $0x330] sm:$0xff]
        %v1200 = vld [vmem:[#allocation3 + $0x348] sm:$0xff]
        %v1201 = vld [vmem:[#allocation3 + $0x350] sm:$0xff]
        %v1202 = vld [vmem:[#allocation3 + $0x368] sm:$0xff]
        %v1203 = vld [vmem:[#allocation3 + $0x370] sm:$0xff]
        %v1204 = vld [vmem:[#allocation3 + $0x388] sm:$0xff]
        %v1205 = vld [vmem:[#allocation3 + $0x390] sm:$0xff]
        %v1206 = vld [vmem:[#allocation3 + $0x3a8] sm:$0xff]
        %v1207 = vld [vmem:[#allocation3 + $0x3b0] sm:$0xff]
        %v1208 = vld [vmem:[#allocation3 + $0x3c8] sm:$0xff]
        %v1209 = vld [vmem:[#allocation3 + $0x3d0] sm:$0xff]
        %v1210 = vld [vmem:[#allocation3 + $0x3e8] sm:$0xff]
        %v1211 = vld [vmem:[#allocation3 + $0x3f0] sm:$0xff]
        %v1213 = vsel %vm746, %v1194, 0
        %1215 = vmatpush.msra.mxu0 0.0
        %1216 = vmatpush.msra.mxu0 0.0
        %1217 = vmatpush.msra.mxu0 0.0
        %1218 = vmatpush.msra.mxu0 0.0
        %1219 = vmatpush.msra.mxu0 0.0
        %1220 = vmatpush.msra.mxu0 0.0
        %1221 = vmatpush.msra.mxu0 0.0
        %1222 = vmatpush.msra.mxu0 0.0
        %1223 = vmatpush.msra.mxu0 %v1210
        %1224 = vmatpush.msra.mxu0 %v1208
        %1225 = vmatpush.msra.mxu0 %v1206
        %1226 = vmatpush.msra.mxu0 %v1204
        %1227 = vmatpush.msra.mxu0 %v1202
        %1228 = vmatpush.msra.mxu0 %v1200
        %1229 = vmatpush.msra.mxu0 %v1198
        %1230 = vmatpush.msra.mxu0 %v1196
        %1231 = vmatmul.f32.gmra.mxu0 %v1213
        %v1232 = vpop.f32.mrf.mxu0
        %v1233 = vadd.f32 %v165, %v1232
        %1234 = vdwg.mxu0
        %1235 = vmatpush.msra.mxu0 0.0
        %1236 = vmatpush.msra.mxu0 0.0
        %1237 = vmatpush.msra.mxu0 0.0
        %1238 = vmatpush.msra.mxu0 0.0
        %1239 = vmatpush.msra.mxu0 0.0
        %1240 = vmatpush.msra.mxu0 0.0
        %1241 = vmatpush.msra.mxu0 0.0
        %1242 = vmatpush.msra.mxu0 0.0
        %1243 = vmatpush.msra.mxu0 %v1211
        %1244 = vmatpush.msra.mxu0 %v1209
        %1245 = vmatpush.msra.mxu0 %v1207
        %1246 = vmatpush.msra.mxu0 %v1205
        %1247 = vmatpush.msra.mxu0 %v1203
        %1248 = vmatpush.msra.mxu0 %v1201
        %1249 = vmatpush.msra.mxu0 %v1199
        %1250 = vmatpush.msra.mxu0 %v1197
        %1251 = vmatmul.f32.gmra.mxu0 %v1213
        %v1252 = vpop.f32.mrf.mxu0
        %v1253 = vadd.f32 %v166, %v1252
        %1254 = vdwg.mxu0
        %v1255 = vxor.u32 %v1253, 2147483648
        %v1256 = vmul.f32 %v1255, 1.442695
        %v1257 = vpow.pop %v1256
        %v1258 = vadd.f32 %v1257, 1.0
        %v1259 = vrcp.pop %v1258
        %v1260 = vmul.f32 %v1258, %v1259
        %v1261 = vsub.f32 1.0, %v1260
        %v1262 = vmul.f32 %v1259, %v1261
        %v1263 = vadd.f32 %v1259, %v1262
        %vm1264 = vweird.f32 %v1258
        %vm1265 = vweird.f32 %v1259
        %vm1266 = vmor %vm1264, %vm1265
        %v1267 = vsel %vm1266, %v1259, %v1263
        %v1268 = vand.u32 2147483647, %v1258
        %vm1269 = vcmp.eq.f32.partialorder %v1268, 8.507059e+37
        %v1270 = vand.u32 %v1258, 2147483648
        %v1271 = vor.u32 1.1754944e-38, %v1270
        %v1272 = vsel %vm1269, %v1271, %v1267
        %v1273 = vmul.f32 1.0, %v1272
        %v1274 = vtanh.pop %v1233
        %v1275 = vmul.f32 %v1273, %v1274
        %v1276 = vld [vmem:[#allocation2 + $0x20] sm:$0xff]
        %v1277 = vld [vmem:[#allocation2 + $0x28] sm:$0xff]
        %v1278 = vld [vmem:[#allocation2 + $0x30] sm:$0xff]
        %v1279 = vld [vmem:[#allocation2 + $0x38] sm:$0xff]
        %1280 = vmatpush.msra.mxu0 0.0
        %1281 = vmatpush.msra.mxu0 0.0
        %1282 = vmatpush.msra.mxu0 0.0
        %1283 = vmatpush.msra.mxu0 0.0
        %1284 = vmatpush.msra.mxu0 0.0
        %1285 = vmatpush.msra.mxu0 0.0
        %1286 = vmatpush.msra.mxu0 0.0
        %1287 = vmatpush.msra.mxu0 0.0
        %1288 = vmatpush.msra.mxu0 %v742
        %1289 = vmatpush.msra.mxu0 %v738
        %1290 = vmatpush.msra.mxu0 %v734
        %1291 = vmatpush.msra.mxu0 %v730
        %1292 = vmatpush.msra.mxu0 %v726
        %1293 = vmatpush.msra.mxu0 %v722
        %1294 = vmatpush.msra.mxu0 %v718
        %1295 = vmatpush.msra.mxu0 %v714
        %1296 = vmatmul.f32.gmra.mxu0 %v1032
        %v1297 = vpop.f32.mrf.mxu0
        %v1298 = vadd.f32 0.0, %v1297
        %1299 = vdwg.mxu0
        %1300 = vmatpush.msra.mxu0 0.0
        %1301 = vmatpush.msra.mxu0 0.0
        %1302 = vmatpush.msra.mxu0 0.0
        %1303 = vmatpush.msra.mxu0 0.0
        %1304 = vmatpush.msra.mxu0 0.0
        %1305 = vmatpush.msra.mxu0 0.0
        %1306 = vmatpush.msra.mxu0 0.0
        %1307 = vmatpush.msra.mxu0 0.0
        %1308 = vmatpush.msra.mxu0 %v743
        %1309 = vmatpush.msra.mxu0 %v739
        %1310 = vmatpush.msra.mxu0 %v735
        %1311 = vmatpush.msra.mxu0 %v731
        %1312 = vmatpush.msra.mxu0 %v727
        %1313 = vmatpush.msra.mxu0 %v723
        %1314 = vmatpush.msra.mxu0 %v719
        %1315 = vmatpush.msra.mxu0 %v715
        %1316 = vmatmul.f32.gmra.mxu0 %v1032
        %v1317 = vpop.f32.mrf.mxu0
        %v1318 = vadd.f32 0.0, %v1317
        %1319 = vdwg.mxu0
        %1320 = vmatpush.msra.mxu0 0.0
        %1321 = vmatpush.msra.mxu0 0.0
        %1322 = vmatpush.msra.mxu0 0.0
        %1323 = vmatpush.msra.mxu0 0.0
        %1324 = vmatpush.msra.mxu0 0.0
        %1325 = vmatpush.msra.mxu0 0.0
        %1326 = vmatpush.msra.mxu0 0.0
        %1327 = vmatpush.msra.mxu0 0.0
        %1328 = vmatpush.msra.mxu0 %v744
        %1329 = vmatpush.msra.mxu0 %v740
        %1330 = vmatpush.msra.mxu0 %v736
        %1331 = vmatpush.msra.mxu0 %v732
        %1332 = vmatpush.msra.mxu0 %v728
        %1333 = vmatpush.msra.mxu0 %v724
        %1334 = vmatpush.msra.mxu0 %v720
        %1335 = vmatpush.msra.mxu0 %v716
        %1336 = vmatmul.f32.gmra.mxu0 %v1032
        %v1337 = vpop.f32.mrf.mxu0
        %v1338 = vadd.f32 0.0, %v1337
        %1339 = vdwg.mxu0
        %1340 = vmatpush.msra.mxu0 0.0
        %1341 = vmatpush.msra.mxu0 0.0
        %1342 = vmatpush.msra.mxu0 0.0
        %1343 = vmatpush.msra.mxu0 0.0
        %1344 = vmatpush.msra.mxu0 0.0
        %1345 = vmatpush.msra.mxu0 0.0
        %1346 = vmatpush.msra.mxu0 0.0
        %1347 = vmatpush.msra.mxu0 0.0
        %1348 = vmatpush.msra.mxu0 %v745
        %1349 = vmatpush.msra.mxu0 %v741
        %1350 = vmatpush.msra.mxu0 %v737
        %1351 = vmatpush.msra.mxu0 %v733
        %1352 = vmatpush.msra.mxu0 %v729
        %1353 = vmatpush.msra.mxu0 %v725
        %1354 = vmatpush.msra.mxu0 %v721
        %1355 = vmatpush.msra.mxu0 %v717
        %1356 = vmatmul.f32.gmra.mxu0 %v1032
        %v1357 = vpop.f32.mrf.mxu0
        %v1358 = vadd.f32 0.0, %v1357
        %1359 = vdwg.mxu0
        %v1360 = vadd.f32 %v1276, %v1298
        %v1361 = vadd.f32 %v1277, %v1318
        %v1362 = vadd.f32 %v1278, %v1338
        %v1363 = vadd.f32 %v1279, %v1358
        %v1365 = vsel %vm489, %v1275, 0
        %1367 = vmatpush.msra.mxu0 0.0
        %1368 = vmatpush.msra.mxu0 0.0
        %1369 = vmatpush.msra.mxu0 0.0
        %1370 = vmatpush.msra.mxu0 0.0
        %1371 = vmatpush.msra.mxu0 0.0
        %1372 = vmatpush.msra.mxu0 0.0
        %1373 = vmatpush.msra.mxu0 0.0
        %1374 = vmatpush.msra.mxu0 0.0
        %1375 = vmatpush.msra.mxu0 0.0
        %1376 = vmatpush.msra.mxu0 0.0
        %1377 = vmatpush.msra.mxu0 0.0
        %1378 = vmatpush.msra.mxu0 0.0
        %1379 = vmatpush.msra.mxu0 %v846
        %1380 = vmatpush.msra.mxu0 %v842
        %1381 = vmatpush.msra.mxu0 %v838
        %1382 = vmatpush.msra.mxu0 %v834
        %1383 = vmatmul.f32.gmra.mxu0 %v1365
        %v1384 = vpop.f32.mrf.mxu0
        %v1385 = vadd.f32 0.0, %v1384
        %1386 = vdwg.mxu0
        %1387 = vmatpush.msra.mxu0 0.0
        %1388 = vmatpush.msra.mxu0 0.0
        %1389 = vmatpush.msra.mxu0 0.0
        %1390 = vmatpush.msra.mxu0 0.0
        %1391 = vmatpush.msra.mxu0 0.0
        %1392 = vmatpush.msra.mxu0 0.0
        %1393 = vmatpush.msra.mxu0 0.0
        %1394 = vmatpush.msra.mxu0 0.0
        %1395 = vmatpush.msra.mxu0 0.0
        %1396 = vmatpush.msra.mxu0 0.0
        %1397 = vmatpush.msra.mxu0 0.0
        %1398 = vmatpush.msra.mxu0 0.0
        %1399 = vmatpush.msra.mxu0 %v847
        %1400 = vmatpush.msra.mxu0 %v843
        %1401 = vmatpush.msra.mxu0 %v839
        %1402 = vmatpush.msra.mxu0 %v835
        %1403 = vmatmul.f32.gmra.mxu0 %v1365
        %v1404 = vpop.f32.mrf.mxu0
        %v1405 = vadd.f32 0.0, %v1404
        %1406 = vdwg.mxu0
        %1407 = vmatpush.msra.mxu0 0.0
        %1408 = vmatpush.msra.mxu0 0.0
        %1409 = vmatpush.msra.mxu0 0.0
        %1410 = vmatpush.msra.mxu0 0.0
        %1411 = vmatpush.msra.mxu0 0.0
        %1412 = vmatpush.msra.mxu0 0.0
        %1413 = vmatpush.msra.mxu0 0.0
        %1414 = vmatpush.msra.mxu0 0.0
        %1415 = vmatpush.msra.mxu0 0.0
        %1416 = vmatpush.msra.mxu0 0.0
        %1417 = vmatpush.msra.mxu0 0.0
        %1418 = vmatpush.msra.mxu0 0.0
        %1419 = vmatpush.msra.mxu0 %v848
        %1420 = vmatpush.msra.mxu0 %v844
        %1421 = vmatpush.msra.mxu0 %v840
        %1422 = vmatpush.msra.mxu0 %v836
        %1423 = vmatmul.f32.gmra.mxu0 %v1365
        %v1424 = vpop.f32.mrf.mxu0
        %v1425 = vadd.f32 0.0, %v1424
        %1426 = vdwg.mxu0
        %1427 = vmatpush.msra.mxu0 0.0
        %1428 = vmatpush.msra.mxu0 0.0
        %1429 = vmatpush.msra.mxu0 0.0
        %1430 = vmatpush.msra.mxu0 0.0
        %1431 = vmatpush.msra.mxu0 0.0
        %1432 = vmatpush.msra.mxu0 0.0
        %1433 = vmatpush.msra.mxu0 0.0
        %1434 = vmatpush.msra.mxu0 0.0
        %1435 = vmatpush.msra.mxu0 0.0
        %1436 = vmatpush.msra.mxu0 0.0
        %1437 = vmatpush.msra.mxu0 0.0
        %1438 = vmatpush.msra.mxu0 0.0
        %1439 = vmatpush.msra.mxu0 %v849
        %1440 = vmatpush.msra.mxu0 %v845
        %1441 = vmatpush.msra.mxu0 %v841
        %1442 = vmatpush.msra.mxu0 %v837
        %1443 = vmatmul.f32.gmra.mxu0 %v1365
        %v1444 = vpop.f32.mrf.mxu0
        %v1445 = vadd.f32 0.0, %v1444
        %1446 = vdwg.mxu0
        %v1447 = vadd.f32 %v1360, %v1385
        %v1448 = vadd.f32 %v1361, %v1405
        %v1449 = vadd.f32 %v1362, %v1425
        %v1450 = vadd.f32 %v1363, %v1445
        %v1451 = vxor.u32 %v1447, 2147483648
        %v1452 = vmul.f32 %v1451, 1.442695
        %v1453 = vpow.pop %v1452
        %v1454 = vadd.f32 %v1453, 1.0
        %v1455 = vrcp.pop %v1454
        %v1456 = vmul.f32 %v1454, %v1455
        %v1457 = vsub.f32 1.0, %v1456
        %v1458 = vmul.f32 %v1455, %v1457
        %v1459 = vadd.f32 %v1455, %v1458
        %vm1460 = vweird.f32 %v1454
        %vm1461 = vweird.f32 %v1455
        %vm1462 = vmor %vm1460, %vm1461
        %v1463 = vsel %vm1462, %v1455, %v1459
        %v1464 = vand.u32 2147483647, %v1454
        %vm1465 = vcmp.eq.f32.partialorder %v1464, 8.507059e+37
        %v1466 = vand.u32 %v1454, 2147483648
        %v1467 = vor.u32 1.1754944e-38, %v1466
        %v1468 = vsel %vm1465, %v1467, %v1463
        %v1469 = vmul.f32 1.0, %v1468
        %v1470 = vxor.u32 %v1448, 2147483648
        %v1471 = vmul.f32 %v1470, 1.442695
        %v1472 = vpow.pop %v1471
        %v1473 = vadd.f32 %v1472, 1.0
        %v1474 = vrcp.pop %v1473
        %v1475 = vmul.f32 %v1473, %v1474
        %v1476 = vsub.f32 1.0, %v1475
        %v1477 = vmul.f32 %v1474, %v1476
        %v1478 = vadd.f32 %v1474, %v1477
        %vm1479 = vweird.f32 %v1473
        %vm1480 = vweird.f32 %v1474
        %vm1481 = vmor %vm1479, %vm1480
        %v1482 = vsel %vm1481, %v1474, %v1478
        %v1483 = vand.u32 2147483647, %v1473
        %vm1484 = vcmp.eq.f32.partialorder %v1483, 8.507059e+37
        %v1485 = vand.u32 %v1473, 2147483648
        %v1486 = vor.u32 1.1754944e-38, %v1485
        %v1487 = vsel %vm1484, %v1486, %v1482
        %v1488 = vmul.f32 1.0, %v1487
        %v1489 = vxor.u32 %v1449, 2147483648
        %v1490 = vmul.f32 %v1489, 1.442695
        %v1491 = vpow.pop %v1490
        %v1492 = vadd.f32 %v1491, 1.0
        %v1493 = vrcp.pop %v1492
        %v1494 = vmul.f32 %v1492, %v1493
        %v1495 = vsub.f32 1.0, %v1494
        %v1496 = vmul.f32 %v1493, %v1495
        %v1497 = vadd.f32 %v1493, %v1496
        %vm1498 = vweird.f32 %v1492
        %vm1499 = vweird.f32 %v1493
        %vm1500 = vmor %vm1498, %vm1499
        %v1501 = vsel %vm1500, %v1493, %v1497
        %v1502 = vand.u32 2147483647, %v1492
        %vm1503 = vcmp.eq.f32.partialorder %v1502, 8.507059e+37
        %v1504 = vand.u32 %v1492, 2147483648
        %v1505 = vor.u32 1.1754944e-38, %v1504
        %v1506 = vsel %vm1503, %v1505, %v1501
        %v1507 = vmul.f32 1.0, %v1506
        %v1508 = vtanh.pop %v1450
        %v1509 = vmul.f32 %v1488, %v996
        %v1510 = vmul.f32 %v1469, %v1508
        %v1511 = vadd.f32 %v1509, %v1510
        %v1512 = vtanh.pop %v1511
        %v1513 = vmul.f32 %v1507, %v1512
        %v1515 = vsel %vm746, %v1513, 0
        %1517 = vmatpush.msra.mxu0 0.0
        %1518 = vmatpush.msra.mxu0 0.0
        %1519 = vmatpush.msra.mxu0 0.0
        %1520 = vmatpush.msra.mxu0 0.0
        %1521 = vmatpush.msra.mxu0 0.0
        %1522 = vmatpush.msra.mxu0 0.0
        %1523 = vmatpush.msra.mxu0 0.0
        %1524 = vmatpush.msra.mxu0 0.0
        %1525 = vmatpush.msra.mxu0 %v1027
        %1526 = vmatpush.msra.mxu0 %v1023
        %1527 = vmatpush.msra.mxu0 %v1019
        %1528 = vmatpush.msra.mxu0 %v1015
        %1529 = vmatpush.msra.mxu0 %v1011
        %1530 = vmatpush.msra.mxu0 %v1007
        %1531 = vmatpush.msra.mxu0 %v1003
        %1532 = vmatpush.msra.mxu0 %v999
        %1533 = vmatmul.f32.gmra.mxu0 %v1515
        %v1534 = vpop.f32.mrf.mxu0
        %v1535 = vadd.f32 0.0, %v1534
        %1536 = vdwg.mxu0
        %1537 = vmatpush.msra.mxu0 0.0
        %1538 = vmatpush.msra.mxu0 0.0
        %1539 = vmatpush.msra.mxu0 0.0
        %1540 = vmatpush.msra.mxu0 0.0
        %1541 = vmatpush.msra.mxu0 0.0
        %1542 = vmatpush.msra.mxu0 0.0
        %1543 = vmatpush.msra.mxu0 0.0
        %1544 = vmatpush.msra.mxu0 0.0
        %1545 = vmatpush.msra.mxu0 %v1028
        %1546 = vmatpush.msra.mxu0 %v1024
        %1547 = vmatpush.msra.mxu0 %v1020
        %1548 = vmatpush.msra.mxu0 %v1016
        %1549 = vmatpush.msra.mxu0 %v1012
        %1550 = vmatpush.msra.mxu0 %v1008
        %1551 = vmatpush.msra.mxu0 %v1004
        %1552 = vmatpush.msra.mxu0 %v1000
        %1553 = vmatmul.f32.gmra.mxu0 %v1515
        %v1554 = vpop.f32.mrf.mxu0
        %v1555 = vadd.f32 0.0, %v1554
        %1556 = vdwg.mxu0
        %1557 = vmatpush.msra.mxu0 0.0
        %1558 = vmatpush.msra.mxu0 0.0
        %1559 = vmatpush.msra.mxu0 0.0
        %1560 = vmatpush.msra.mxu0 0.0
        %1561 = vmatpush.msra.mxu0 0.0
        %1562 = vmatpush.msra.mxu0 0.0
        %1563 = vmatpush.msra.mxu0 0.0
        %1564 = vmatpush.msra.mxu0 0.0
        %1565 = vmatpush.msra.mxu0 %v1029
        %1566 = vmatpush.msra.mxu0 %v1025
        %1567 = vmatpush.msra.mxu0 %v1021
        %1568 = vmatpush.msra.mxu0 %v1017
        %1569 = vmatpush.msra.mxu0 %v1013
        %1570 = vmatpush.msra.mxu0 %v1009
        %1571 = vmatpush.msra.mxu0 %v1005
        %1572 = vmatpush.msra.mxu0 %v1001
        %1573 = vmatmul.f32.gmra.mxu0 %v1515
        %v1574 = vpop.f32.mrf.mxu0
        %v1575 = vadd.f32 0.0, %v1574
        %1576 = vdwg.mxu0
        %1577 = vmatpush.msra.mxu0 0.0
        %1578 = vmatpush.msra.mxu0 0.0
        %1579 = vmatpush.msra.mxu0 0.0
        %1580 = vmatpush.msra.mxu0 0.0
        %1581 = vmatpush.msra.mxu0 0.0
        %1582 = vmatpush.msra.mxu0 0.0
        %1583 = vmatpush.msra.mxu0 0.0
        %1584 = vmatpush.msra.mxu0 0.0
        %1585 = vmatpush.msra.mxu0 %v1030
        %1586 = vmatpush.msra.mxu0 %v1026
        %1587 = vmatpush.msra.mxu0 %v1022
        %1588 = vmatpush.msra.mxu0 %v1018
        %1589 = vmatpush.msra.mxu0 %v1014
        %1590 = vmatpush.msra.mxu0 %v1010
        %1591 = vmatpush.msra.mxu0 %v1006
        %1592 = vmatpush.msra.mxu0 %v1002
        %1593 = vmatmul.f32.gmra.mxu0 %v1515
        %v1594 = vpop.f32.mrf.mxu0
        %v1595 = vadd.f32 0.0, %v1594
        %1596 = vdwg.mxu0
        %v1597 = vtanh.pop %v1535
        %v1598 = vtanh.pop %v1555
        %v1599 = vtanh.pop %v1575
        %v1600 = vtanh.pop %v1595
        %v1601 = vadd.f32 %v1597, %v1598
        %v1602 = vadd.f32 %v1601, %v1599
        %v1603 = vadd.f32 %v1602, %v1600
        %v1604 = vmul.f32 %v1603, 0.25
        %v1605 = vmul.f32 %v1604, 1.442695
        %v1606 = vpow.pop %v1605
        %v1607 = vsel %vm489, %v1606, 0.0
        %1608 = vadd.xlane.f32.xlu0 %v1607
        %v1609 = vpop.xlane.xlu0 %1608
        %v1610 = vrcp.pop %v1609
        %1612 = vrot.lane.b32.xlu0 %v1606, 96
        %v1613 = vpop.permute.xlu0 %1612
        %v1615 = vsel %vm204, %v1613, 0.0
        %1616 = vadd.xlane.f32.xlu0 %v1615
        %v1617 = vpop.xlane.xlu0 %1616
        %v1618 = vrcp.pop %v1617
        %1619 = vrot.lane.b32.xlu0 %v1606, 80
        %v1620 = vpop.permute.xlu0 %1619
        %v1622 = vsel %vm204, %v1620, 0.0
        %1623 = vadd.xlane.f32.xlu0 %v1622
        %v1624 = vpop.xlane.xlu0 %1623
        %v1625 = vrcp.pop %v1624
        %1626 = vrot.lane.b32.xlu0 %v1606, 64
        %v1627 = vpop.permute.xlu0 %1626
        %v1629 = vsel %vm489, %v1627, 0.0
        %1630 = vadd.xlane.f32.xlu0 %v1629
        %v1631 = vpop.xlane.xlu0 %1630
        %v1632 = vrcp.pop %v1631
        %v1633 = vmul.f32 %v1610, 0.7
        %v1634 = vmul.f32 %v1606, %v1633
        %v1635 = vmul.f32 %v1632, 0.3
        %v1636 = vmul.f32 %v1606, %v1635
        %1638 = vrot.lane.b32.xlu0 %v1636, 64
        %v1639 = vpop.permute.xlu0 %1638
        %v1641 = vadd.f32 %v1634, %v1639
        %v1642 = vmul.f32 %v1606, %v1618
        %v1643 = vmul.f32 %v1606, %v1625
        %v1644 = vsel %vm489, %v1641, %v1642
        %v1645 = vsel %vm1162, %v1644, %v1643
        %v1646 = vmul.f32 %v1513, %v1645
        %v1648 = vsel %vm746, %v1646, 0
        %1650 = vmatpush.msra.mxu0 0.0
        %1651 = vmatpush.msra.mxu0 0.0
        %1652 = vmatpush.msra.mxu0 0.0
        %1653 = vmatpush.msra.mxu0 0.0
        %1654 = vmatpush.msra.mxu0 0.0
        %1655 = vmatpush.msra.mxu0 0.0
        %1656 = vmatpush.msra.mxu0 0.0
        %1657 = vmatpush.msra.mxu0 0.0
        %1658 = vmatpush.msra.mxu0 %v1172
        %1659 = vmatpush.msra.mxu0 %v1171
        %1660 = vmatpush.msra.mxu0 %v1170
        %1661 = vmatpush.msra.mxu0 %v1169
        %1662 = vmatpush.msra.mxu0 %v1168
        %1663 = vmatpush.msra.mxu0 %v1167
        %1664 = vmatpush.msra.mxu0 %v1166
        %1665 = vmatpush.msra.mxu0 %v1165
        %1666 = vmatmul.f32.gmra.mxu0 %v1648
        %v1667 = vpop.f32.mrf.mxu0
        %v1668 = vadd.f32 %v161, %v1667
        %1669 = vdwg.mxu0
        %v1671 = vsel %vm746, %v1668, 0
        %1673 = vmatpush.msra.mxu0 0.0
        %1674 = vmatpush.msra.mxu0 0.0
        %1675 = vmatpush.msra.mxu0 0.0
        %1676 = vmatpush.msra.mxu0 0.0
        %1677 = vmatpush.msra.mxu0 0.0
        %1678 = vmatpush.msra.mxu0 0.0
        %1679 = vmatpush.msra.mxu0 0.0
        %1680 = vmatpush.msra.mxu0 0.0
        %1681 = vmatpush.msra.mxu0 %v1210
        %1682 = vmatpush.msra.mxu0 %v1208
        %1683 = vmatpush.msra.mxu0 %v1206
        %1684 = vmatpush.msra.mxu0 %v1204
        %1685 = vmatpush.msra.mxu0 %v1202
        %1686 = vmatpush.msra.mxu0 %v1200
        %1687 = vmatpush.msra.mxu0 %v1198
        %1688 = vmatpush.msra.mxu0 %v1196
        %1689 = vmatmul.f32.gmra.mxu0 %v1671
        %v1690 = vpop.f32.mrf.mxu0
        %v1691 = vadd.f32 %v165, %v1690
        %1692 = vdwg.mxu0
        %1693 = vmatpush.msra.mxu0 0.0
        %1694 = vmatpush.msra.mxu0 0.0
        %1695 = vmatpush.msra.mxu0 0.0
        %1696 = vmatpush.msra.mxu0 0.0
        %1697 = vmatpush.msra.mxu0 0.0
        %1698 = vmatpush.msra.mxu0 0.0
        %1699 = vmatpush.msra.mxu0 0.0
        %1700 = vmatpush.msra.mxu0 0.0
        %1701 = vmatpush.msra.mxu0 %v1211
        %1702 = vmatpush.msra.mxu0 %v1209
        %1703 = vmatpush.msra.mxu0 %v1207
        %1704 = vmatpush.msra.mxu0 %v1205
        %1705 = vmatpush.msra.mxu0 %v1203
        %1706 = vmatpush.msra.mxu0 %v1201
        %1707 = vmatpush.msra.mxu0 %v1199
        %1708 = vmatpush.msra.mxu0 %v1197
        %1709 = vmatmul.f32.gmra.mxu0 %v1671
        %v1710 = vpop.f32.mrf.mxu0
        %v1711 = vadd.f32 %v166, %v1710
        %1712 = vdwg.mxu0
        %v1713 = vxor.u32 %v1711, 2147483648
        %v1714 = vmul.f32 %v1713, 1.442695
        %v1715 = vpow.pop %v1714
        %v1716 = vadd.f32 %v1715, 1.0
        %v1717 = vrcp.pop %v1716
        %v1718 = vmul.f32 %v1716, %v1717
        %v1719 = vsub.f32 1.0, %v1718
        %v1720 = vmul.f32 %v1717, %v1719
        %v1721 = vadd.f32 %v1717, %v1720
        %vm1722 = vweird.f32 %v1716
        %vm1723 = vweird.f32 %v1717
        %vm1724 = vmor %vm1722, %vm1723
        %v1725 = vsel %vm1724, %v1717, %v1721
        %v1726 = vand.u32 2147483647, %v1716
        %vm1727 = vcmp.eq.f32.partialorder %v1726, 8.507059e+37
        %v1728 = vand.u32 %v1716, 2147483648
        %v1729 = vor.u32 1.1754944e-38, %v1728
        %v1730 = vsel %vm1727, %v1729, %v1725
        %v1731 = vmul.f32 1.0, %v1730
        %v1732 = vtanh.pop %v1691
        %v1733 = vmul.f32 %v1731, %v1732
        %v1734 = vld [vmem:[#allocation2 + $0x40] sm:$0xff]
        %v1735 = vld [vmem:[#allocation2 + $0x48] sm:$0xff]
        %v1736 = vld [vmem:[#allocation2 + $0x50] sm:$0xff]
        %v1737 = vld [vmem:[#allocation2 + $0x58] sm:$0xff]
        %1738 = vmatpush.msra.mxu0 0.0
        %1739 = vmatpush.msra.mxu0 0.0
        %1740 = vmatpush.msra.mxu0 0.0
        %1741 = vmatpush.msra.mxu0 0.0
        %1742 = vmatpush.msra.mxu0 0.0
        %1743 = vmatpush.msra.mxu0 0.0
        %1744 = vmatpush.msra.mxu0 0.0
        %1745 = vmatpush.msra.mxu0 0.0
        %1746 = vmatpush.msra.mxu0 %v742
        %1747 = vmatpush.msra.mxu0 %v738
        %1748 = vmatpush.msra.mxu0 %v734
        %1749 = vmatpush.msra.mxu0 %v730
        %1750 = vmatpush.msra.mxu0 %v726
        %1751 = vmatpush.msra.mxu0 %v722
        %1752 = vmatpush.msra.mxu0 %v718
        %1753 = vmatpush.msra.mxu0 %v714
        %1754 = vmatmul.f32.gmra.mxu0 %v1515
        %v1755 = vpop.f32.mrf.mxu0
        %v1756 = vadd.f32 0.0, %v1755
        %1757 = vdwg.mxu0
        %1758 = vmatpush.msra.mxu0 0.0
        %1759 = vmatpush.msra.mxu0 0.0
        %1760 = vmatpush.msra.mxu0 0.0
        %1761 = vmatpush.msra.mxu0 0.0
        %1762 = vmatpush.msra.mxu0 0.0
        %1763 = vmatpush.msra.mxu0 0.0
        %1764 = vmatpush.msra.mxu0 0.0
        %1765 = vmatpush.msra.mxu0 0.0
        %1766 = vmatpush.msra.mxu0 %v743
        %1767 = vmatpush.msra.mxu0 %v739
        %1768 = vmatpush.msra.mxu0 %v735
        %1769 = vmatpush.msra.mxu0 %v731
        %1770 = vmatpush.msra.mxu0 %v727
        %1771 = vmatpush.msra.mxu0 %v723
        %1772 = vmatpush.msra.mxu0 %v719
        %1773 = vmatpush.msra.mxu0 %v715
        %1774 = vmatmul.f32.gmra.mxu0 %v1515
        %v1775 = vpop.f32.mrf.mxu0
        %v1776 = vadd.f32 0.0, %v1775
        %1777 = vdwg.mxu0
        %1778 = vmatpush.msra.mxu0 0.0
        %1779 = vmatpush.msra.mxu0 0.0
        %1780 = vmatpush.msra.mxu0 0.0
        %1781 = vmatpush.msra.mxu0 0.0
        %1782 = vmatpush.msra.mxu0 0.0
        %1783 = vmatpush.msra.mxu0 0.0
        %1784 = vmatpush.msra.mxu0 0.0
        %1785 = vmatpush.msra.mxu0 0.0
        %1786 = vmatpush.msra.mxu0 %v744
        %1787 = vmatpush.msra.mxu0 %v740
        %1788 = vmatpush.msra.mxu0 %v736
        %1789 = vmatpush.msra.mxu0 %v732
        %1790 = vmatpush.msra.mxu0 %v728
        %1791 = vmatpush.msra.mxu0 %v724
        %1792 = vmatpush.msra.mxu0 %v720
        %1793 = vmatpush.msra.mxu0 %v716
        %1794 = vmatmul.f32.gmra.mxu0 %v1515
        %v1795 = vpop.f32.mrf.mxu0
        %v1796 = vadd.f32 0.0, %v1795
        %1797 = vdwg.mxu0
        %1798 = vmatpush.msra.mxu0 0.0
        %1799 = vmatpush.msra.mxu0 0.0
        %1800 = vmatpush.msra.mxu0 0.0
        %1801 = vmatpush.msra.mxu0 0.0
        %1802 = vmatpush.msra.mxu0 0.0
        %1803 = vmatpush.msra.mxu0 0.0
        %1804 = vmatpush.msra.mxu0 0.0
        %1805 = vmatpush.msra.mxu0 0.0
        %1806 = vmatpush.msra.mxu0 %v745
        %1807 = vmatpush.msra.mxu0 %v741
        %1808 = vmatpush.msra.mxu0 %v737
        %1809 = vmatpush.msra.mxu0 %v733
        %1810 = vmatpush.msra.mxu0 %v729
        %1811 = vmatpush.msra.mxu0 %v725
        %1812 = vmatpush.msra.mxu0 %v721
        %1813 = vmatpush.msra.mxu0 %v717
        %1814 = vmatmul.f32.gmra.mxu0 %v1515
        %v1815 = vpop.f32.mrf.mxu0
        %v1816 = vadd.f32 0.0, %v1815
        %1817 = vdwg.mxu0
        %v1818 = vadd.f32 %v1734, %v1756
        %v1819 = vadd.f32 %v1735, %v1776
        %v1820 = vadd.f32 %v1736, %v1796
        %v1821 = vadd.f32 %v1737, %v1816
        %v1823 = vsel %vm489, %v1733, 0
        %1825 = vmatpush.msra.mxu0 0.0
        %1826 = vmatpush.msra.mxu0 0.0
        %1827 = vmatpush.msra.mxu0 0.0
        %1828 = vmatpush.msra.mxu0 0.0
        %1829 = vmatpush.msra.mxu0 0.0
        %1830 = vmatpush.msra.mxu0 0.0
        %1831 = vmatpush.msra.mxu0 0.0
        %1832 = vmatpush.msra.mxu0 0.0
        %1833 = vmatpush.msra.mxu0 0.0
        %1834 = vmatpush.msra.mxu0 0.0
        %1835 = vmatpush.msra.mxu0 0.0
        %1836 = vmatpush.msra.mxu0 0.0
        %1837 = vmatpush.msra.mxu0 %v846
        %1838 = vmatpush.msra.mxu0 %v842
        %1839 = vmatpush.msra.mxu0 %v838
        %1840 = vmatpush.msra.mxu0 %v834
        %1841 = vmatmul.f32.gmra.mxu0 %v1823
        %v1842 = vpop.f32.mrf.mxu0
        %v1843 = vadd.f32 0.0, %v1842
        %1844 = vdwg.mxu0
        %1845 = vmatpush.msra.mxu0 0.0
        %1846 = vmatpush.msra.mxu0 0.0
        %1847 = vmatpush.msra.mxu0 0.0
        %1848 = vmatpush.msra.mxu0 0.0
        %1849 = vmatpush.msra.mxu0 0.0
        %1850 = vmatpush.msra.mxu0 0.0
        %1851 = vmatpush.msra.mxu0 0.0
        %1852 = vmatpush.msra.mxu0 0.0
        %1853 = vmatpush.msra.mxu0 0.0
        %1854 = vmatpush.msra.mxu0 0.0
        %1855 = vmatpush.msra.mxu0 0.0
        %1856 = vmatpush.msra.mxu0 0.0
        %1857 = vmatpush.msra.mxu0 %v847
        %1858 = vmatpush.msra.mxu0 %v843
        %1859 = vmatpush.msra.mxu0 %v839
        %1860 = vmatpush.msra.mxu0 %v835
        %1861 = vmatmul.f32.gmra.mxu0 %v1823
        %v1862 = vpop.f32.mrf.mxu0
        %v1863 = vadd.f32 0.0, %v1862
        %1864 = vdwg.mxu0
        %1865 = vmatpush.msra.mxu0 0.0
        %1866 = vmatpush.msra.mxu0 0.0
        %1867 = vmatpush.msra.mxu0 0.0
        %1868 = vmatpush.msra.mxu0 0.0
        %1869 = vmatpush.msra.mxu0 0.0
        %1870 = vmatpush.msra.mxu0 0.0
        %1871 = vmatpush.msra.mxu0 0.0
        %1872 = vmatpush.msra.mxu0 0.0
        %1873 = vmatpush.msra.mxu0 0.0
        %1874 = vmatpush.msra.mxu0 0.0
        %1875 = vmatpush.msra.mxu0 0.0
        %1876 = vmatpush.msra.mxu0 0.0
        %1877 = vmatpush.msra.mxu0 %v848
        %1878 = vmatpush.msra.mxu0 %v844
        %1879 = vmatpush.msra.mxu0 %v840
        %1880 = vmatpush.msra.mxu0 %v836
        %1881 = vmatmul.f32.gmra.mxu0 %v1823
        %v1882 = vpop.f32.mrf.mxu0
        %v1883 = vadd.f32 0.0, %v1882
        %1884 = vdwg.mxu0
        %1885 = vmatpush.msra.mxu0 0.0
        %1886 = vmatpush.msra.mxu0 0.0
        %1887 = vmatpush.msra.mxu0 0.0
        %1888 = vmatpush.msra.mxu0 0.0
        %1889 = vmatpush.msra.mxu0 0.0
        %1890 = vmatpush.msra.mxu0 0.0
        %1891 = vmatpush.msra.mxu0 0.0
        %1892 = vmatpush.msra.mxu0 0.0
        %1893 = vmatpush.msra.mxu0 0.0
        %1894 = vmatpush.msra.mxu0 0.0
        %1895 = vmatpush.msra.mxu0 0.0
        %1896 = vmatpush.msra.mxu0 0.0
        %1897 = vmatpush.msra.mxu0 %v849
        %1898 = vmatpush.msra.mxu0 %v845
        %1899 = vmatpush.msra.mxu0 %v841
        %1900 = vmatpush.msra.mxu0 %v837
        %1901 = vmatmul.f32.gmra.mxu0 %v1823
        %v1902 = vpop.f32.mrf.mxu0
        %v1903 = vadd.f32 0.0, %v1902
        %1904 = vdwg.mxu0
        %v1905 = vadd.f32 %v1818, %v1843
        %v1906 = vadd.f32 %v1819, %v1863
        %v1907 = vadd.f32 %v1820, %v1883
        %v1908 = vadd.f32 %v1821, %v1903
        %v1909 = vxor.u32 %v1905, 2147483648
        %v1910 = vmul.f32 %v1909, 1.442695
        %v1911 = vpow.pop %v1910
        %v1912 = vadd.f32 %v1911, 1.0
        %v1913 = vrcp.pop %v1912
        %v1914 = vmul.f32 %v1912, %v1913
        %v1915 = vsub.f32 1.0, %v1914
        %v1916 = vmul.f32 %v1913, %v1915
        %v1917 = vadd.f32 %v1913, %v1916
        %vm1918 = vweird.f32 %v1912
        %vm1919 = vweird.f32 %v1913
        %vm1920 = vmor %vm1918, %vm1919
        %v1921 = vsel %vm1920, %v1913, %v1917
        %v1922 = vand.u32 2147483647, %v1912
        %vm1923 = vcmp.eq.f32.partialorder %v1922, 8.507059e+37
        %v1924 = vand.u32 %v1912, 2147483648
        %v1925 = vor.u32 1.1754944e-38, %v1924
        %v1926 = vsel %vm1923, %v1925, %v1921
        %v1927 = vmul.f32 1.0, %v1926
        %v1928 = vxor.u32 %v1906, 2147483648
        %v1929 = vmul.f32 %v1928, 1.442695
        %v1930 = vpow.pop %v1929
        %v1931 = vadd.f32 %v1930, 1.0
        %v1932 = vrcp.pop %v1931
        %v1933 = vmul.f32 %v1931, %v1932
        %v1934 = vsub.f32 1.0, %v1933
        %v1935 = vmul.f32 %v1932, %v1934
        %v1936 = vadd.f32 %v1932, %v1935
        %vm1937 = vweird.f32 %v1931
        %vm1938 = vweird.f32 %v1932
        %vm1939 = vmor %vm1937, %vm1938
        %v1940 = vsel %vm1939, %v1932, %v1936
        %v1941 = vand.u32 2147483647, %v1931
        %vm1942 = vcmp.eq.f32.partialorder %v1941, 8.507059e+37
        %v1943 = vand.u32 %v1931, 2147483648
        %v1944 = vor.u32 1.1754944e-38, %v1943
        %v1945 = vsel %vm1942, %v1944, %v1940
        %v1946 = vmul.f32 1.0, %v1945
        %v1947 = vxor.u32 %v1907, 2147483648
        %v1948 = vmul.f32 %v1947, 1.442695
        %v1949 = vpow.pop %v1948
        %v1950 = vadd.f32 %v1949, 1.0
        %v1951 = vrcp.pop %v1950
        %v1952 = vmul.f32 %v1950, %v1951
        %v1953 = vsub.f32 1.0, %v1952
        %v1954 = vmul.f32 %v1951, %v1953
        %v1955 = vadd.f32 %v1951, %v1954
        %vm1956 = vweird.f32 %v1950
        %vm1957 = vweird.f32 %v1951
        %vm1958 = vmor %vm1956, %vm1957
        %v1959 = vsel %vm1958, %v1951, %v1955
        %v1960 = vand.u32 2147483647, %v1950
        %vm1961 = vcmp.eq.f32.partialorder %v1960, 8.507059e+37
        %v1962 = vand.u32 %v1950, 2147483648
        %v1963 = vor.u32 1.1754944e-38, %v1962
        %v1964 = vsel %vm1961, %v1963, %v1959
        %v1965 = vmul.f32 1.0, %v1964
        %v1966 = vtanh.pop %v1908
        %v1967 = vmul.f32 %v1946, %v1511
        %v1968 = vmul.f32 %v1927, %v1966
        %v1969 = vadd.f32 %v1967, %v1968
        %v1970 = vtanh.pop %v1969
        %v1971 = vmul.f32 %v1965, %v1970
        %v1973 = vsel %vm746, %v1971, 0
        %1975 = vmatpush.msra.mxu0 0.0
        %1976 = vmatpush.msra.mxu0 0.0
        %1977 = vmatpush.msra.mxu0 0.0
        %1978 = vmatpush.msra.mxu0 0.0
        %1979 = vmatpush.msra.mxu0 0.0
        %1980 = vmatpush.msra.mxu0 0.0
        %1981 = vmatpush.msra.mxu0 0.0
        %1982 = vmatpush.msra.mxu0 0.0
        %1983 = vmatpush.msra.mxu0 %v1027
        %1984 = vmatpush.msra.mxu0 %v1023
        %1985 = vmatpush.msra.mxu0 %v1019
        %1986 = vmatpush.msra.mxu0 %v1015
        %1987 = vmatpush.msra.mxu0 %v1011
        %1988 = vmatpush.msra.mxu0 %v1007
        %1989 = vmatpush.msra.mxu0 %v1003
        %1990 = vmatpush.msra.mxu0 %v999
        %1991 = vmatmul.f32.gmra.mxu0 %v1973
        %v1992 = vpop.f32.mrf.mxu0
        %v1993 = vadd.f32 0.0, %v1992
        %1994 = vdwg.mxu0
        %1995 = vmatpush.msra.mxu0 0.0
        %1996 = vmatpush.msra.mxu0 0.0
        %1997 = vmatpush.msra.mxu0 0.0
        %1998 = vmatpush.msra.mxu0 0.0
        %1999 = vmatpush.msra.mxu0 0.0
        %2000 = vmatpush.msra.mxu0 0.0
        %2001 = vmatpush.msra.mxu0 0.0
        %2002 = vmatpush.msra.mxu0 0.0
        %2003 = vmatpush.msra.mxu0 %v1028
        %2004 = vmatpush.msra.mxu0 %v1024
        %2005 = vmatpush.msra.mxu0 %v1020
        %2006 = vmatpush.msra.mxu0 %v1016
        %2007 = vmatpush.msra.mxu0 %v1012
        %2008 = vmatpush.msra.mxu0 %v1008
        %2009 = vmatpush.msra.mxu0 %v1004
        %2010 = vmatpush.msra.mxu0 %v1000
        %2011 = vmatmul.f32.gmra.mxu0 %v1973
        %v2012 = vpop.f32.mrf.mxu0
        %v2013 = vadd.f32 0.0, %v2012
        %2014 = vdwg.mxu0
        %2015 = vmatpush.msra.mxu0 0.0
        %2016 = vmatpush.msra.mxu0 0.0
        %2017 = vmatpush.msra.mxu0 0.0
        %2018 = vmatpush.msra.mxu0 0.0
        %2019 = vmatpush.msra.mxu0 0.0
        %2020 = vmatpush.msra.mxu0 0.0
        %2021 = vmatpush.msra.mxu0 0.0
        %2022 = vmatpush.msra.mxu0 0.0
        %2023 = vmatpush.msra.mxu0 %v1029
        %2024 = vmatpush.msra.mxu0 %v1025
        %2025 = vmatpush.msra.mxu0 %v1021
        %2026 = vmatpush.msra.mxu0 %v1017
        %2027 = vmatpush.msra.mxu0 %v1013
        %2028 = vmatpush.msra.mxu0 %v1009
        %2029 = vmatpush.msra.mxu0 %v1005
        %2030 = vmatpush.msra.mxu0 %v1001
        %2031 = vmatmul.f32.gmra.mxu0 %v1973
        %v2032 = vpop.f32.mrf.mxu0
        %v2033 = vadd.f32 0.0, %v2032
        %2034 = vdwg.mxu0
        %2035 = vmatpush.msra.mxu0 0.0
        %2036 = vmatpush.msra.mxu0 0.0
        %2037 = vmatpush.msra.mxu0 0.0
        %2038 = vmatpush.msra.mxu0 0.0
        %2039 = vmatpush.msra.mxu0 0.0
        %2040 = vmatpush.msra.mxu0 0.0
        %2041 = vmatpush.msra.mxu0 0.0
        %2042 = vmatpush.msra.mxu0 0.0
        %2043 = vmatpush.msra.mxu0 %v1030
        %2044 = vmatpush.msra.mxu0 %v1026
        %2045 = vmatpush.msra.mxu0 %v1022
        %2046 = vmatpush.msra.mxu0 %v1018
        %2047 = vmatpush.msra.mxu0 %v1014
        %2048 = vmatpush.msra.mxu0 %v1010
        %2049 = vmatpush.msra.mxu0 %v1006
        %2050 = vmatpush.msra.mxu0 %v1002
        %2051 = vmatmul.f32.gmra.mxu0 %v1973
        %v2052 = vpop.f32.mrf.mxu0
        %v2053 = vadd.f32 0.0, %v2052
        %2054 = vdwg.mxu0
        %v2055 = vtanh.pop %v1993
        %v2056 = vtanh.pop %v2013
        %v2057 = vtanh.pop %v2033
        %v2058 = vtanh.pop %v2053
        %v2059 = vadd.f32 %v2055, %v2056
        %v2060 = vadd.f32 %v2059, %v2057
        %v2061 = vadd.f32 %v2060, %v2058
        %v2062 = vmul.f32 %v2061, 0.25
        %v2063 = vmul.f32 %v2062, 1.442695
        %v2064 = vpow.pop %v2063
        %v2065 = vsel %vm489, %v2064, 0.0
        %2066 = vadd.xlane.f32.xlu0 %v2065
        %v2067 = vpop.xlane.xlu0 %2066
        %v2068 = vrcp.pop %v2067
        %2070 = vrot.lane.b32.xlu0 %v2064, 96
        %v2071 = vpop.permute.xlu0 %2070
        %v2073 = vsel %vm204, %v2071, 0.0
        %2074 = vadd.xlane.f32.xlu0 %v2073
        %v2075 = vpop.xlane.xlu0 %2074
        %v2076 = vrcp.pop %v2075
        %2077 = vrot.lane.b32.xlu0 %v2064, 80
        %v2078 = vpop.permute.xlu0 %2077
        %v2080 = vsel %vm204, %v2078, 0.0
        %2081 = vadd.xlane.f32.xlu0 %v2080
        %v2082 = vpop.xlane.xlu0 %2081
        %v2083 = vrcp.pop %v2082
        %2084 = vrot.lane.b32.xlu0 %v2064, 64
        %v2085 = vpop.permute.xlu0 %2084
        %v2087 = vsel %vm489, %v2085, 0.0
        %2088 = vadd.xlane.f32.xlu0 %v2087
        %v2089 = vpop.xlane.xlu0 %2088
        %v2090 = vrcp.pop %v2089
        %v2091 = vmul.f32 %v2068, 0.7
        %v2092 = vmul.f32 %v2064, %v2091
        %v2093 = vmul.f32 %v2090, 0.3
        %v2094 = vmul.f32 %v2064, %v2093
        %2096 = vrot.lane.b32.xlu0 %v2094, 64
        %v2097 = vpop.permute.xlu0 %2096
        %v2099 = vadd.f32 %v2092, %v2097
        %v2100 = vmul.f32 %v2064, %v2076
        %v2101 = vmul.f32 %v2064, %v2083
        %v2102 = vsel %vm489, %v2099, %v2100
        %v2103 = vsel %vm1162, %v2102, %v2101
        %v2104 = vmul.f32 %v1971, %v2103
        %v2106 = vsel %vm746, %v2104, 0
        %2108 = vmatpush.msra.mxu0 0.0
        %2109 = vmatpush.msra.mxu0 0.0
        %2110 = vmatpush.msra.mxu0 0.0
        %2111 = vmatpush.msra.mxu0 0.0
        %2112 = vmatpush.msra.mxu0 0.0
        %2113 = vmatpush.msra.mxu0 0.0
        %2114 = vmatpush.msra.mxu0 0.0
        %2115 = vmatpush.msra.mxu0 0.0
        %2116 = vmatpush.msra.mxu0 %v1172
        %2117 = vmatpush.msra.mxu0 %v1171
        %2118 = vmatpush.msra.mxu0 %v1170
        %2119 = vmatpush.msra.mxu0 %v1169
        %2120 = vmatpush.msra.mxu0 %v1168
        %2121 = vmatpush.msra.mxu0 %v1167
        %2122 = vmatpush.msra.mxu0 %v1166
        %2123 = vmatpush.msra.mxu0 %v1165
        %2124 = vmatmul.f32.gmra.mxu0 %v2106
        %v2125 = vpop.f32.mrf.mxu0
        %v2126 = vadd.f32 %v161, %v2125
        %2127 = vdwg.mxu0
        %v2129 = vsel %vm746, %v2126, 0
        %2131 = vmatpush.msra.mxu0 0.0
        %2132 = vmatpush.msra.mxu0 0.0
        %2133 = vmatpush.msra.mxu0 0.0
        %2134 = vmatpush.msra.mxu0 0.0
        %2135 = vmatpush.msra.mxu0 0.0
        %2136 = vmatpush.msra.mxu0 0.0
        %2137 = vmatpush.msra.mxu0 0.0
        %2138 = vmatpush.msra.mxu0 0.0
        %2139 = vmatpush.msra.mxu0 %v1210
        %2140 = vmatpush.msra.mxu0 %v1208
        %2141 = vmatpush.msra.mxu0 %v1206
        %2142 = vmatpush.msra.mxu0 %v1204
        %2143 = vmatpush.msra.mxu0 %v1202
        %2144 = vmatpush.msra.mxu0 %v1200
        %2145 = vmatpush.msra.mxu0 %v1198
        %2146 = vmatpush.msra.mxu0 %v1196
        %2147 = vmatmul.f32.gmra.mxu0 %v2129
        %v2148 = vpop.f32.mrf.mxu0
        %v2149 = vadd.f32 %v165, %v2148
        %2150 = vdwg.mxu0
        %2151 = vmatpush.msra.mxu0 0.0
        %2152 = vmatpush.msra.mxu0 0.0
        %2153 = vmatpush.msra.mxu0 0.0
        %2154 = vmatpush.msra.mxu0 0.0
        %2155 = vmatpush.msra.mxu0 0.0
        %2156 = vmatpush.msra.mxu0 0.0
        %2157 = vmatpush.msra.mxu0 0.0
        %2158 = vmatpush.msra.mxu0 0.0
        %2159 = vmatpush.msra.mxu0 %v1211
        %2160 = vmatpush.msra.mxu0 %v1209
        %2161 = vmatpush.msra.mxu0 %v1207
        %2162 = vmatpush.msra.mxu0 %v1205
        %2163 = vmatpush.msra.mxu0 %v1203
        %2164 = vmatpush.msra.mxu0 %v1201
        %2165 = vmatpush.msra.mxu0 %v1199
        %2166 = vmatpush.msra.mxu0 %v1197
        %2167 = vmatmul.f32.gmra.mxu0 %v2129
        %v2168 = vpop.f32.mrf.mxu0
        %v2169 = vadd.f32 %v166, %v2168
        %2170 = vdwg.mxu0
        %v2171 = vxor.u32 %v2169, 2147483648
        %v2172 = vmul.f32 %v2171, 1.442695
        %v2173 = vpow.pop %v2172
        %v2174 = vadd.f32 %v2173, 1.0
        %v2175 = vrcp.pop %v2174
        %v2176 = vmul.f32 %v2174, %v2175
        %v2177 = vsub.f32 1.0, %v2176
        %v2178 = vmul.f32 %v2175, %v2177
        %v2179 = vadd.f32 %v2175, %v2178
        %vm2180 = vweird.f32 %v2174
        %vm2181 = vweird.f32 %v2175
        %vm2182 = vmor %vm2180, %vm2181
        %v2183 = vsel %vm2182, %v2175, %v2179
        %v2184 = vand.u32 2147483647, %v2174
        %vm2185 = vcmp.eq.f32.partialorder %v2184, 8.507059e+37
        %v2186 = vand.u32 %v2174, 2147483648
        %v2187 = vor.u32 1.1754944e-38, %v2186
        %v2188 = vsel %vm2185, %v2187, %v2183
        %v2189 = vmul.f32 1.0, %v2188
        %v2190 = vtanh.pop %v2149
        %v2191 = vmul.f32 %v2189, %v2190
        %v2192 = vld [vmem:[#allocation2 + $0x60] sm:$0xff]
        %v2193 = vld [vmem:[#allocation2 + $0x68] sm:$0xff]
        %v2194 = vld [vmem:[#allocation2 + $0x70] sm:$0xff]
        %v2195 = vld [vmem:[#allocation2 + $0x78] sm:$0xff]
        %2196 = vmatpush.msra.mxu0 0.0
        %2197 = vmatpush.msra.mxu0 0.0
        %2198 = vmatpush.msra.mxu0 0.0
        %2199 = vmatpush.msra.mxu0 0.0
        %2200 = vmatpush.msra.mxu0 0.0
        %2201 = vmatpush.msra.mxu0 0.0
        %2202 = vmatpush.msra.mxu0 0.0
        %2203 = vmatpush.msra.mxu0 0.0
        %2204 = vmatpush.msra.mxu0 %v742
        %2205 = vmatpush.msra.mxu0 %v738
        %2206 = vmatpush.msra.mxu0 %v734
        %2207 = vmatpush.msra.mxu0 %v730
        %2208 = vmatpush.msra.mxu0 %v726
        %2209 = vmatpush.msra.mxu0 %v722
        %2210 = vmatpush.msra.mxu0 %v718
        %2211 = vmatpush.msra.mxu0 %v714
        %2212 = vmatmul.f32.gmra.mxu0 %v1973
        %v2213 = vpop.f32.mrf.mxu0
        %v2214 = vadd.f32 0.0, %v2213
        %2215 = vdwg.mxu0
        %2216 = vmatpush.msra.mxu0 0.0
        %2217 = vmatpush.msra.mxu0 0.0
        %2218 = vmatpush.msra.mxu0 0.0
        %2219 = vmatpush.msra.mxu0 0.0
        %2220 = vmatpush.msra.mxu0 0.0
        %2221 = vmatpush.msra.mxu0 0.0
        %2222 = vmatpush.msra.mxu0 0.0
        %2223 = vmatpush.msra.mxu0 0.0
        %2224 = vmatpush.msra.mxu0 %v743
        %2225 = vmatpush.msra.mxu0 %v739
        %2226 = vmatpush.msra.mxu0 %v735
        %2227 = vmatpush.msra.mxu0 %v731
        %2228 = vmatpush.msra.mxu0 %v727
        %2229 = vmatpush.msra.mxu0 %v723
        %2230 = vmatpush.msra.mxu0 %v719
        %2231 = vmatpush.msra.mxu0 %v715
        %2232 = vmatmul.f32.gmra.mxu0 %v1973
        %v2233 = vpop.f32.mrf.mxu0
        %v2234 = vadd.f32 0.0, %v2233
        %2235 = vdwg.mxu0
        %2236 = vmatpush.msra.mxu0 0.0
        %2237 = vmatpush.msra.mxu0 0.0
        %2238 = vmatpush.msra.mxu0 0.0
        %2239 = vmatpush.msra.mxu0 0.0
        %2240 = vmatpush.msra.mxu0 0.0
        %2241 = vmatpush.msra.mxu0 0.0
        %2242 = vmatpush.msra.mxu0 0.0
        %2243 = vmatpush.msra.mxu0 0.0
        %2244 = vmatpush.msra.mxu0 %v744
        %2245 = vmatpush.msra.mxu0 %v740
        %2246 = vmatpush.msra.mxu0 %v736
        %2247 = vmatpush.msra.mxu0 %v732
        %2248 = vmatpush.msra.mxu0 %v728
        %2249 = vmatpush.msra.mxu0 %v724
        %2250 = vmatpush.msra.mxu0 %v720
        %2251 = vmatpush.msra.mxu0 %v716
        %2252 = vmatmul.f32.gmra.mxu0 %v1973
        %v2253 = vpop.f32.mrf.mxu0
        %v2254 = vadd.f32 0.0, %v2253
        %2255 = vdwg.mxu0
        %2256 = vmatpush.msra.mxu0 0.0
        %2257 = vmatpush.msra.mxu0 0.0
        %2258 = vmatpush.msra.mxu0 0.0
        %2259 = vmatpush.msra.mxu0 0.0
        %2260 = vmatpush.msra.mxu0 0.0
        %2261 = vmatpush.msra.mxu0 0.0
        %2262 = vmatpush.msra.mxu0 0.0
        %2263 = vmatpush.msra.mxu0 0.0
        %2264 = vmatpush.msra.mxu0 %v745
        %2265 = vmatpush.msra.mxu0 %v741
        %2266 = vmatpush.msra.mxu0 %v737
        %2267 = vmatpush.msra.mxu0 %v733
        %2268 = vmatpush.msra.mxu0 %v729
        %2269 = vmatpush.msra.mxu0 %v725
        %2270 = vmatpush.msra.mxu0 %v721
        %2271 = vmatpush.msra.mxu0 %v717
        %2272 = vmatmul.f32.gmra.mxu0 %v1973
        %v2273 = vpop.f32.mrf.mxu0
        %v2274 = vadd.f32 0.0, %v2273
        %2275 = vdwg.mxu0
        %v2276 = vadd.f32 %v2192, %v2214
        %v2277 = vadd.f32 %v2193, %v2234
        %v2278 = vadd.f32 %v2194, %v2254
        %v2279 = vadd.f32 %v2195, %v2274
        %v2281 = vsel %vm489, %v2191, 0
        %2283 = vmatpush.msra.mxu0 0.0
        %2284 = vmatpush.msra.mxu0 0.0
        %2285 = vmatpush.msra.mxu0 0.0
        %2286 = vmatpush.msra.mxu0 0.0
        %2287 = vmatpush.msra.mxu0 0.0
        %2288 = vmatpush.msra.mxu0 0.0
        %2289 = vmatpush.msra.mxu0 0.0
        %2290 = vmatpush.msra.mxu0 0.0
        %2291 = vmatpush.msra.mxu0 0.0
        %2292 = vmatpush.msra.mxu0 0.0
        %2293 = vmatpush.msra.mxu0 0.0
        %2294 = vmatpush.msra.mxu0 0.0
        %2295 = vmatpush.msra.mxu0 %v846
        %2296 = vmatpush.msra.mxu0 %v842
        %2297 = vmatpush.msra.mxu0 %v838
        %2298 = vmatpush.msra.mxu0 %v834
        %2299 = vmatmul.f32.gmra.mxu0 %v2281
        %v2300 = vpop.f32.mrf.mxu0
        %v2301 = vadd.f32 0.0, %v2300
        %2302 = vdwg.mxu0
        %2303 = vmatpush.msra.mxu0 0.0
        %2304 = vmatpush.msra.mxu0 0.0
        %2305 = vmatpush.msra.mxu0 0.0
        %2306 = vmatpush.msra.mxu0 0.0
        %2307 = vmatpush.msra.mxu0 0.0
        %2308 = vmatpush.msra.mxu0 0.0
        %2309 = vmatpush.msra.mxu0 0.0
        %2310 = vmatpush.msra.mxu0 0.0
        %2311 = vmatpush.msra.mxu0 0.0
        %2312 = vmatpush.msra.mxu0 0.0
        %2313 = vmatpush.msra.mxu0 0.0
        %2314 = vmatpush.msra.mxu0 0.0
        %2315 = vmatpush.msra.mxu0 %v847
        %2316 = vmatpush.msra.mxu0 %v843
        %2317 = vmatpush.msra.mxu0 %v839
        %2318 = vmatpush.msra.mxu0 %v835
        %2319 = vmatmul.f32.gmra.mxu0 %v2281
        %v2320 = vpop.f32.mrf.mxu0
        %v2321 = vadd.f32 0.0, %v2320
        %2322 = vdwg.mxu0
        %2323 = vmatpush.msra.mxu0 0.0
        %2324 = vmatpush.msra.mxu0 0.0
        %2325 = vmatpush.msra.mxu0 0.0
        %2326 = vmatpush.msra.mxu0 0.0
        %2327 = vmatpush.msra.mxu0 0.0
        %2328 = vmatpush.msra.mxu0 0.0
        %2329 = vmatpush.msra.mxu0 0.0
        %2330 = vmatpush.msra.mxu0 0.0
        %2331 = vmatpush.msra.mxu0 0.0
        %2332 = vmatpush.msra.mxu0 0.0
        %2333 = vmatpush.msra.mxu0 0.0
        %2334 = vmatpush.msra.mxu0 0.0
        %2335 = vmatpush.msra.mxu0 %v848
        %2336 = vmatpush.msra.mxu0 %v844
        %2337 = vmatpush.msra.mxu0 %v840
        %2338 = vmatpush.msra.mxu0 %v836
        %2339 = vmatmul.f32.gmra.mxu0 %v2281
        %v2340 = vpop.f32.mrf.mxu0
        %v2341 = vadd.f32 0.0, %v2340
        %2342 = vdwg.mxu0
        %2343 = vmatpush.msra.mxu0 0.0
        %2344 = vmatpush.msra.mxu0 0.0
        %2345 = vmatpush.msra.mxu0 0.0
        %2346 = vmatpush.msra.mxu0 0.0
        %2347 = vmatpush.msra.mxu0 0.0
        %2348 = vmatpush.msra.mxu0 0.0
        %2349 = vmatpush.msra.mxu0 0.0
        %2350 = vmatpush.msra.mxu0 0.0
        %2351 = vmatpush.msra.mxu0 0.0
        %2352 = vmatpush.msra.mxu0 0.0
        %2353 = vmatpush.msra.mxu0 0.0
        %2354 = vmatpush.msra.mxu0 0.0
        %2355 = vmatpush.msra.mxu0 %v849
        %2356 = vmatpush.msra.mxu0 %v845
        %2357 = vmatpush.msra.mxu0 %v841
        %2358 = vmatpush.msra.mxu0 %v837
        %2359 = vmatmul.f32.gmra.mxu0 %v2281
        %v2360 = vpop.f32.mrf.mxu0
        %v2361 = vadd.f32 0.0, %v2360
        %2362 = vdwg.mxu0
        %v2363 = vadd.f32 %v2276, %v2301
        %v2364 = vadd.f32 %v2277, %v2321
        %v2365 = vadd.f32 %v2278, %v2341
        %v2366 = vadd.f32 %v2279, %v2361
        %v2367 = vxor.u32 %v2363, 2147483648
        %v2368 = vmul.f32 %v2367, 1.442695
        %v2369 = vpow.pop %v2368
        %v2370 = vadd.f32 %v2369, 1.0
        %v2371 = vrcp.pop %v2370
        %v2372 = vmul.f32 %v2370, %v2371
        %v2373 = vsub.f32 1.0, %v2372
        %v2374 = vmul.f32 %v2371, %v2373
        %v2375 = vadd.f32 %v2371, %v2374
        %vm2376 = vweird.f32 %v2370
        %vm2377 = vweird.f32 %v2371
        %vm2378 = vmor %vm2376, %vm2377
        %v2379 = vsel %vm2378, %v2371, %v2375
        %v2380 = vand.u32 2147483647, %v2370
        %vm2381 = vcmp.eq.f32.partialorder %v2380, 8.507059e+37
        %v2382 = vand.u32 %v2370, 2147483648
        %v2383 = vor.u32 1.1754944e-38, %v2382
        %v2384 = vsel %vm2381, %v2383, %v2379
        %v2385 = vmul.f32 1.0, %v2384
        %v2386 = vxor.u32 %v2364, 2147483648
        %v2387 = vmul.f32 %v2386, 1.442695
        %v2388 = vpow.pop %v2387
        %v2389 = vadd.f32 %v2388, 1.0
        %v2390 = vrcp.pop %v2389
        %v2391 = vmul.f32 %v2389, %v2390
        %v2392 = vsub.f32 1.0, %v2391
        %v2393 = vmul.f32 %v2390, %v2392
        %v2394 = vadd.f32 %v2390, %v2393
        %vm2395 = vweird.f32 %v2389
        %vm2396 = vweird.f32 %v2390
        %vm2397 = vmor %vm2395, %vm2396
        %v2398 = vsel %vm2397, %v2390, %v2394
        %v2399 = vand.u32 2147483647, %v2389
        %vm2400 = vcmp.eq.f32.partialorder %v2399, 8.507059e+37
        %v2401 = vand.u32 %v2389, 2147483648
        %v2402 = vor.u32 1.1754944e-38, %v2401
        %v2403 = vsel %vm2400, %v2402, %v2398
        %v2404 = vmul.f32 1.0, %v2403
        %v2405 = vxor.u32 %v2365, 2147483648
        %v2406 = vmul.f32 %v2405, 1.442695
        %v2407 = vpow.pop %v2406
        %v2408 = vadd.f32 %v2407, 1.0
        %v2409 = vrcp.pop %v2408
        %v2410 = vmul.f32 %v2408, %v2409
        %v2411 = vsub.f32 1.0, %v2410
        %v2412 = vmul.f32 %v2409, %v2411
        %v2413 = vadd.f32 %v2409, %v2412
        %vm2414 = vweird.f32 %v2408
        %vm2415 = vweird.f32 %v2409
        %vm2416 = vmor %vm2414, %vm2415
        %v2417 = vsel %vm2416, %v2409, %v2413
        %v2418 = vand.u32 2147483647, %v2408
        %vm2419 = vcmp.eq.f32.partialorder %v2418, 8.507059e+37
        %v2420 = vand.u32 %v2408, 2147483648
        %v2421 = vor.u32 1.1754944e-38, %v2420
        %v2422 = vsel %vm2419, %v2421, %v2417
        %v2423 = vmul.f32 1.0, %v2422
        %v2424 = vtanh.pop %v2366
        %v2425 = vmul.f32 %v2404, %v1969
        %v2426 = vmul.f32 %v2385, %v2424
        %v2427 = vadd.f32 %v2425, %v2426
        %v2428 = vtanh.pop %v2427
        %v2429 = vmul.f32 %v2423, %v2428
        %v2431 = vsel %vm746, %v2429, 0
        %2433 = vmatpush.msra.mxu0 0.0
        %2434 = vmatpush.msra.mxu0 0.0
        %2435 = vmatpush.msra.mxu0 0.0
        %2436 = vmatpush.msra.mxu0 0.0
        %2437 = vmatpush.msra.mxu0 0.0
        %2438 = vmatpush.msra.mxu0 0.0
        %2439 = vmatpush.msra.mxu0 0.0
        %2440 = vmatpush.msra.mxu0 0.0
        %2441 = vmatpush.msra.mxu0 %v1027
        %2442 = vmatpush.msra.mxu0 %v1023
        %2443 = vmatpush.msra.mxu0 %v1019
        %2444 = vmatpush.msra.mxu0 %v1015
        %2445 = vmatpush.msra.mxu0 %v1011
        %2446 = vmatpush.msra.mxu0 %v1007
        %2447 = vmatpush.msra.mxu0 %v1003
        %2448 = vmatpush.msra.mxu0 %v999
        %2449 = vmatmul.f32.gmra.mxu0 %v2431
        %v2450 = vpop.f32.mrf.mxu0
        %v2451 = vadd.f32 0.0, %v2450
        %2452 = vdwg.mxu0
        %2453 = vmatpush.msra.mxu0 0.0
        %2454 = vmatpush.msra.mxu0 0.0
        %2455 = vmatpush.msra.mxu0 0.0
        %2456 = vmatpush.msra.mxu0 0.0
        %2457 = vmatpush.msra.mxu0 0.0
        %2458 = vmatpush.msra.mxu0 0.0
        %2459 = vmatpush.msra.mxu0 0.0
        %2460 = vmatpush.msra.mxu0 0.0
        %2461 = vmatpush.msra.mxu0 %v1028
        %2462 = vmatpush.msra.mxu0 %v1024
        %2463 = vmatpush.msra.mxu0 %v1020
        %2464 = vmatpush.msra.mxu0 %v1016
        %2465 = vmatpush.msra.mxu0 %v1012
        %2466 = vmatpush.msra.mxu0 %v1008
        %2467 = vmatpush.msra.mxu0 %v1004
        %2468 = vmatpush.msra.mxu0 %v1000
        %2469 = vmatmul.f32.gmra.mxu0 %v2431
        %v2470 = vpop.f32.mrf.mxu0
        %v2471 = vadd.f32 0.0, %v2470
        %2472 = vdwg.mxu0
        %2473 = vmatpush.msra.mxu0 0.0
        %2474 = vmatpush.msra.mxu0 0.0
        %2475 = vmatpush.msra.mxu0 0.0
        %2476 = vmatpush.msra.mxu0 0.0
        %2477 = vmatpush.msra.mxu0 0.0
        %2478 = vmatpush.msra.mxu0 0.0
        %2479 = vmatpush.msra.mxu0 0.0
        %2480 = vmatpush.msra.mxu0 0.0
        %2481 = vmatpush.msra.mxu0 %v1029
        %2482 = vmatpush.msra.mxu0 %v1025
        %2483 = vmatpush.msra.mxu0 %v1021
        %2484 = vmatpush.msra.mxu0 %v1017
        %2485 = vmatpush.msra.mxu0 %v1013
        %2486 = vmatpush.msra.mxu0 %v1009
        %2487 = vmatpush.msra.mxu0 %v1005
        %2488 = vmatpush.msra.mxu0 %v1001
        %2489 = vmatmul.f32.gmra.mxu0 %v2431
        %v2490 = vpop.f32.mrf.mxu0
        %v2491 = vadd.f32 0.0, %v2490
        %2492 = vdwg.mxu0
        %2493 = vmatpush.msra.mxu0 0.0
        %2494 = vmatpush.msra.mxu0 0.0
        %2495 = vmatpush.msra.mxu0 0.0
        %2496 = vmatpush.msra.mxu0 0.0
        %2497 = vmatpush.msra.mxu0 0.0
        %2498 = vmatpush.msra.mxu0 0.0
        %2499 = vmatpush.msra.mxu0 0.0
        %2500 = vmatpush.msra.mxu0 0.0
        %2501 = vmatpush.msra.mxu0 %v1030
        %2502 = vmatpush.msra.mxu0 %v1026
        %2503 = vmatpush.msra.mxu0 %v1022
        %2504 = vmatpush.msra.mxu0 %v1018
        %2505 = vmatpush.msra.mxu0 %v1014
        %2506 = vmatpush.msra.mxu0 %v1010
        %2507 = vmatpush.msra.mxu0 %v1006
        %2508 = vmatpush.msra.mxu0 %v1002
        %2509 = vmatmul.f32.gmra.mxu0 %v2431
        %v2510 = vpop.f32.mrf.mxu0
        %v2511 = vadd.f32 0.0, %v2510
        %2512 = vdwg.mxu0
        %v2513 = vtanh.pop %v2451
        %v2514 = vtanh.pop %v2471
        %v2515 = vtanh.pop %v2491
        %v2516 = vtanh.pop %v2511
        %v2517 = vadd.f32 %v2513, %v2514
        %v2518 = vadd.f32 %v2517, %v2515
        %v2519 = vadd.f32 %v2518, %v2516
        %v2520 = vmul.f32 %v2519, 0.25
        %v2521 = vmul.f32 %v2520, 1.442695
        %v2522 = vpow.pop %v2521
        %v2523 = vsel %vm489, %v2522, 0.0
        %2524 = vadd.xlane.f32.xlu0 %v2523
        %v2525 = vpop.xlane.xlu0 %2524
        %v2526 = vrcp.pop %v2525
        %2528 = vrot.lane.b32.xlu0 %v2522, 96
        %v2529 = vpop.permute.xlu0 %2528
        %v2531 = vsel %vm204, %v2529, 0.0
        %2532 = vadd.xlane.f32.xlu0 %v2531
        %v2533 = vpop.xlane.xlu0 %2532
        %v2534 = vrcp.pop %v2533
        %2535 = vrot.lane.b32.xlu0 %v2522, 80
        %v2536 = vpop.permute.xlu0 %2535
        %v2538 = vsel %vm204, %v2536, 0.0
        %2539 = vadd.xlane.f32.xlu0 %v2538
        %v2540 = vpop.xlane.xlu0 %2539
        %v2541 = vrcp.pop %v2540
        %2542 = vrot.lane.b32.xlu0 %v2522, 64
        %v2543 = vpop.permute.xlu0 %2542
        %v2545 = vsel %vm489, %v2543, 0.0
        %2546 = vadd.xlane.f32.xlu0 %v2545
        %v2547 = vpop.xlane.xlu0 %2546
        %v2548 = vrcp.pop %v2547
        %v2549 = vmul.f32 %v2526, 0.7
        %v2550 = vmul.f32 %v2522, %v2549
        %v2551 = vmul.f32 %v2548, 0.3
        %v2552 = vmul.f32 %v2522, %v2551
        %2554 = vrot.lane.b32.xlu0 %v2552, 64
        %v2555 = vpop.permute.xlu0 %2554
        %v2557 = vadd.f32 %v2550, %v2555
        %v2558 = vmul.f32 %v2522, %v2534
        %v2559 = vmul.f32 %v2522, %v2541
        %v2560 = vsel %vm489, %v2557, %v2558
        %v2561 = vsel %vm1162, %v2560, %v2559
        %v2562 = vmul.f32 %v2429, %v2561
        %v2564 = vsel %vm746, %v2562, 0
        %2566 = vmatpush.msra.mxu0 0.0
        %2567 = vmatpush.msra.mxu0 0.0
        %2568 = vmatpush.msra.mxu0 0.0
        %2569 = vmatpush.msra.mxu0 0.0
        %2570 = vmatpush.msra.mxu0 0.0
        %2571 = vmatpush.msra.mxu0 0.0
        %2572 = vmatpush.msra.mxu0 0.0
        %2573 = vmatpush.msra.mxu0 0.0
        %2574 = vmatpush.msra.mxu0 %v1172
        %2575 = vmatpush.msra.mxu0 %v1171
        %2576 = vmatpush.msra.mxu0 %v1170
        %2577 = vmatpush.msra.mxu0 %v1169
        %2578 = vmatpush.msra.mxu0 %v1168
        %2579 = vmatpush.msra.mxu0 %v1167
        %2580 = vmatpush.msra.mxu0 %v1166
        %2581 = vmatpush.msra.mxu0 %v1165
        %2582 = vmatmul.f32.gmra.mxu0 %v2564
        %v2583 = vpop.f32.mrf.mxu0
        %v2584 = vadd.f32 %v161, %v2583
        %2585 = vdwg.mxu0
        %v2587 = vsel %vm746, %v2584, 0
        %2589 = vmatpush.msra.mxu0 0.0
        %2590 = vmatpush.msra.mxu0 0.0
        %2591 = vmatpush.msra.mxu0 0.0
        %2592 = vmatpush.msra.mxu0 0.0
        %2593 = vmatpush.msra.mxu0 0.0
        %2594 = vmatpush.msra.mxu0 0.0
        %2595 = vmatpush.msra.mxu0 0.0
        %2596 = vmatpush.msra.mxu0 0.0
        %2597 = vmatpush.msra.mxu0 %v1210
        %2598 = vmatpush.msra.mxu0 %v1208
        %2599 = vmatpush.msra.mxu0 %v1206
        %2600 = vmatpush.msra.mxu0 %v1204
        %2601 = vmatpush.msra.mxu0 %v1202
        %2602 = vmatpush.msra.mxu0 %v1200
        %2603 = vmatpush.msra.mxu0 %v1198
        %2604 = vmatpush.msra.mxu0 %v1196
        %2605 = vmatmul.f32.gmra.mxu0 %v2587
        %v2606 = vpop.f32.mrf.mxu0
        %v2607 = vadd.f32 %v165, %v2606
        %2608 = vdwg.mxu0
        %2609 = vmatpush.msra.mxu0 0.0
        %2610 = vmatpush.msra.mxu0 0.0
        %2611 = vmatpush.msra.mxu0 0.0
        %2612 = vmatpush.msra.mxu0 0.0
        %2613 = vmatpush.msra.mxu0 0.0
        %2614 = vmatpush.msra.mxu0 0.0
        %2615 = vmatpush.msra.mxu0 0.0
        %2616 = vmatpush.msra.mxu0 0.0
        %2617 = vmatpush.msra.mxu0 %v1211
        %2618 = vmatpush.msra.mxu0 %v1209
        %2619 = vmatpush.msra.mxu0 %v1207
        %2620 = vmatpush.msra.mxu0 %v1205
        %2621 = vmatpush.msra.mxu0 %v1203
        %2622 = vmatpush.msra.mxu0 %v1201
        %2623 = vmatpush.msra.mxu0 %v1199
        %2624 = vmatpush.msra.mxu0 %v1197
        %2625 = vmatmul.f32.gmra.mxu0 %v2587
        %v2626 = vpop.f32.mrf.mxu0
        %v2627 = vadd.f32 %v166, %v2626
        %2628 = vdwg.mxu0
        %v2629 = vxor.u32 %v2627, 2147483648
        %v2630 = vmul.f32 %v2629, 1.442695
        %v2631 = vpow.pop %v2630
        %v2632 = vadd.f32 %v2631, 1.0
        %v2633 = vrcp.pop %v2632
        %v2634 = vmul.f32 %v2632, %v2633
        %v2635 = vsub.f32 1.0, %v2634
        %v2636 = vmul.f32 %v2633, %v2635
        %v2637 = vadd.f32 %v2633, %v2636
        %vm2638 = vweird.f32 %v2632
        %vm2639 = vweird.f32 %v2633
        %vm2640 = vmor %vm2638, %vm2639
        %v2641 = vsel %vm2640, %v2633, %v2637
        %v2642 = vand.u32 2147483647, %v2632
        %vm2643 = vcmp.eq.f32.partialorder %v2642, 8.507059e+37
        %v2644 = vand.u32 %v2632, 2147483648
        %v2645 = vor.u32 1.1754944e-38, %v2644
        %v2646 = vsel %vm2643, %v2645, %v2641
        %v2647 = vmul.f32 1.0, %v2646
        %v2648 = vtanh.pop %v2607
        %v2649 = vmul.f32 %v2647, %v2648
        %v2650 = vld [vmem:[#allocation2 + $0x80] sm:$0xff]
        %v2651 = vld [vmem:[#allocation2 + $0x88] sm:$0xff]
        %v2652 = vld [vmem:[#allocation2 + $0x90] sm:$0xff]
        %v2653 = vld [vmem:[#allocation2 + $0x98] sm:$0xff]
        %2654 = vmatpush.msra.mxu0 0.0
        %2655 = vmatpush.msra.mxu0 0.0
        %2656 = vmatpush.msra.mxu0 0.0
        %2657 = vmatpush.msra.mxu0 0.0
        %2658 = vmatpush.msra.mxu0 0.0
        %2659 = vmatpush.msra.mxu0 0.0
        %2660 = vmatpush.msra.mxu0 0.0
        %2661 = vmatpush.msra.mxu0 0.0
        %2662 = vmatpush.msra.mxu0 %v742
        %2663 = vmatpush.msra.mxu0 %v738
        %2664 = vmatpush.msra.mxu0 %v734
        %2665 = vmatpush.msra.mxu0 %v730
        %2666 = vmatpush.msra.mxu0 %v726
        %2667 = vmatpush.msra.mxu0 %v722
        %2668 = vmatpush.msra.mxu0 %v718
        %2669 = vmatpush.msra.mxu0 %v714
        %2670 = vmatmul.f32.gmra.mxu0 %v2431
        %v2671 = vpop.f32.mrf.mxu0
        %v2672 = vadd.f32 0.0, %v2671
        %2673 = vdwg.mxu0
        %2674 = vmatpush.msra.mxu0 0.0
        %2675 = vmatpush.msra.mxu0 0.0
        %2676 = vmatpush.msra.mxu0 0.0
        %2677 = vmatpush.msra.mxu0 0.0
        %2678 = vmatpush.msra.mxu0 0.0
        %2679 = vmatpush.msra.mxu0 0.0
        %2680 = vmatpush.msra.mxu0 0.0
        %2681 = vmatpush.msra.mxu0 0.0
        %2682 = vmatpush.msra.mxu0 %v743
        %2683 = vmatpush.msra.mxu0 %v739
        %2684 = vmatpush.msra.mxu0 %v735
        %2685 = vmatpush.msra.mxu0 %v731
        %2686 = vmatpush.msra.mxu0 %v727
        %2687 = vmatpush.msra.mxu0 %v723
        %2688 = vmatpush.msra.mxu0 %v719
        %2689 = vmatpush.msra.mxu0 %v715
        %2690 = vmatmul.f32.gmra.mxu0 %v2431
        %v2691 = vpop.f32.mrf.mxu0
        %v2692 = vadd.f32 0.0, %v2691
        %2693 = vdwg.mxu0
        %2694 = vmatpush.msra.mxu0 0.0
        %2695 = vmatpush.msra.mxu0 0.0
        %2696 = vmatpush.msra.mxu0 0.0
        %2697 = vmatpush.msra.mxu0 0.0
        %2698 = vmatpush.msra.mxu0 0.0
        %2699 = vmatpush.msra.mxu0 0.0
        %2700 = vmatpush.msra.mxu0 0.0
        %2701 = vmatpush.msra.mxu0 0.0
        %2702 = vmatpush.msra.mxu0 %v744
        %2703 = vmatpush.msra.mxu0 %v740
        %2704 = vmatpush.msra.mxu0 %v736
        %2705 = vmatpush.msra.mxu0 %v732
        %2706 = vmatpush.msra.mxu0 %v728
        %2707 = vmatpush.msra.mxu0 %v724
        %2708 = vmatpush.msra.mxu0 %v720
        %2709 = vmatpush.msra.mxu0 %v716
        %2710 = vmatmul.f32.gmra.mxu0 %v2431
        %v2711 = vpop.f32.mrf.mxu0
        %v2712 = vadd.f32 0.0, %v2711
        %2713 = vdwg.mxu0
        %2714 = vmatpush.msra.mxu0 0.0
        %2715 = vmatpush.msra.mxu0 0.0
        %2716 = vmatpush.msra.mxu0 0.0
        %2717 = vmatpush.msra.mxu0 0.0
        %2718 = vmatpush.msra.mxu0 0.0
        %2719 = vmatpush.msra.mxu0 0.0
        %2720 = vmatpush.msra.mxu0 0.0
        %2721 = vmatpush.msra.mxu0 0.0
        %2722 = vmatpush.msra.mxu0 %v745
        %2723 = vmatpush.msra.mxu0 %v741
        %2724 = vmatpush.msra.mxu0 %v737
        %2725 = vmatpush.msra.mxu0 %v733
        %2726 = vmatpush.msra.mxu0 %v729
        %2727 = vmatpush.msra.mxu0 %v725
        %2728 = vmatpush.msra.mxu0 %v721
        %2729 = vmatpush.msra.mxu0 %v717
        %2730 = vmatmul.f32.gmra.mxu0 %v2431
        %v2731 = vpop.f32.mrf.mxu0
        %v2732 = vadd.f32 0.0, %v2731
        %2733 = vdwg.mxu0
        %v2734 = vadd.f32 %v2650, %v2672
        %v2735 = vadd.f32 %v2651, %v2692
        %v2736 = vadd.f32 %v2652, %v2712
        %v2737 = vadd.f32 %v2653, %v2732
        %v2739 = vsel %vm489, %v2649, 0
        %2741 = vmatpush.msra.mxu0 0.0
        %2742 = vmatpush.msra.mxu0 0.0
        %2743 = vmatpush.msra.mxu0 0.0
        %2744 = vmatpush.msra.mxu0 0.0
        %2745 = vmatpush.msra.mxu0 0.0
        %2746 = vmatpush.msra.mxu0 0.0
        %2747 = vmatpush.msra.mxu0 0.0
        %2748 = vmatpush.msra.mxu0 0.0
        %2749 = vmatpush.msra.mxu0 0.0
        %2750 = vmatpush.msra.mxu0 0.0
        %2751 = vmatpush.msra.mxu0 0.0
        %2752 = vmatpush.msra.mxu0 0.0
        %2753 = vmatpush.msra.mxu0 %v846
        %2754 = vmatpush.msra.mxu0 %v842
        %2755 = vmatpush.msra.mxu0 %v838
        %2756 = vmatpush.msra.mxu0 %v834
        %2757 = vmatmul.f32.gmra.mxu0 %v2739
        %v2758 = vpop.f32.mrf.mxu0
        %v2759 = vadd.f32 0.0, %v2758
        %2760 = vdwg.mxu0
        %2761 = vmatpush.msra.mxu0 0.0
        %2762 = vmatpush.msra.mxu0 0.0
        %2763 = vmatpush.msra.mxu0 0.0
        %2764 = vmatpush.msra.mxu0 0.0
        %2765 = vmatpush.msra.mxu0 0.0
        %2766 = vmatpush.msra.mxu0 0.0
        %2767 = vmatpush.msra.mxu0 0.0
        %2768 = vmatpush.msra.mxu0 0.0
        %2769 = vmatpush.msra.mxu0 0.0
        %2770 = vmatpush.msra.mxu0 0.0
        %2771 = vmatpush.msra.mxu0 0.0
        %2772 = vmatpush.msra.mxu0 0.0
        %2773 = vmatpush.msra.mxu0 %v847
        %2774 = vmatpush.msra.mxu0 %v843
        %2775 = vmatpush.msra.mxu0 %v839
        %2776 = vmatpush.msra.mxu0 %v835
        %2777 = vmatmul.f32.gmra.mxu0 %v2739
        %v2778 = vpop.f32.mrf.mxu0
        %v2779 = vadd.f32 0.0, %v2778
        %2780 = vdwg.mxu0
        %2781 = vmatpush.msra.mxu0 0.0
        %2782 = vmatpush.msra.mxu0 0.0
        %2783 = vmatpush.msra.mxu0 0.0
        %2784 = vmatpush.msra.mxu0 0.0
        %2785 = vmatpush.msra.mxu0 0.0
        %2786 = vmatpush.msra.mxu0 0.0
        %2787 = vmatpush.msra.mxu0 0.0
        %2788 = vmatpush.msra.mxu0 0.0
        %2789 = vmatpush.msra.mxu0 0.0
        %2790 = vmatpush.msra.mxu0 0.0
        %2791 = vmatpush.msra.mxu0 0.0
        %2792 = vmatpush.msra.mxu0 0.0
        %2793 = vmatpush.msra.mxu0 %v848
        %2794 = vmatpush.msra.mxu0 %v844
        %2795 = vmatpush.msra.mxu0 %v840
        %2796 = vmatpush.msra.mxu0 %v836
        %2797 = vmatmul.f32.gmra.mxu0 %v2739
        %v2798 = vpop.f32.mrf.mxu0
        %v2799 = vadd.f32 0.0, %v2798
        %2800 = vdwg.mxu0
        %2801 = vmatpush.msra.mxu0 0.0
        %2802 = vmatpush.msra.mxu0 0.0
        %2803 = vmatpush.msra.mxu0 0.0
        %2804 = vmatpush.msra.mxu0 0.0
        %2805 = vmatpush.msra.mxu0 0.0
        %2806 = vmatpush.msra.mxu0 0.0
        %2807 = vmatpush.msra.mxu0 0.0
        %2808 = vmatpush.msra.mxu0 0.0
        %2809 = vmatpush.msra.mxu0 0.0
        %2810 = vmatpush.msra.mxu0 0.0
        %2811 = vmatpush.msra.mxu0 0.0
        %2812 = vmatpush.msra.mxu0 0.0
        %2813 = vmatpush.msra.mxu0 %v849
        %2814 = vmatpush.msra.mxu0 %v845
        %2815 = vmatpush.msra.mxu0 %v841
        %2816 = vmatpush.msra.mxu0 %v837
        %2817 = vmatmul.f32.gmra.mxu0 %v2739
        %v2818 = vpop.f32.mrf.mxu0
        %v2819 = vadd.f32 0.0, %v2818
        %2820 = vdwg.mxu0
        %v2821 = vadd.f32 %v2734, %v2759
        %v2822 = vadd.f32 %v2735, %v2779
        %v2823 = vadd.f32 %v2736, %v2799
        %v2824 = vadd.f32 %v2737, %v2819
        %v2825 = vxor.u32 %v2821, 2147483648
        %v2826 = vmul.f32 %v2825, 1.442695
        %v2827 = vpow.pop %v2826
        %v2828 = vadd.f32 %v2827, 1.0
        %v2829 = vrcp.pop %v2828
        %v2830 = vmul.f32 %v2828, %v2829
        %v2831 = vsub.f32 1.0, %v2830
        %v2832 = vmul.f32 %v2829, %v2831
        %v2833 = vadd.f32 %v2829, %v2832
        %vm2834 = vweird.f32 %v2828
        %vm2835 = vweird.f32 %v2829
        %vm2836 = vmor %vm2834, %vm2835
        %v2837 = vsel %vm2836, %v2829, %v2833
        %v2838 = vand.u32 2147483647, %v2828
        %vm2839 = vcmp.eq.f32.partialorder %v2838, 8.507059e+37
        %v2840 = vand.u32 %v2828, 2147483648
        %v2841 = vor.u32 1.1754944e-38, %v2840
        %v2842 = vsel %vm2839, %v2841, %v2837
        %v2843 = vmul.f32 1.0, %v2842
        %v2844 = vxor.u32 %v2822, 2147483648
        %v2845 = vmul.f32 %v2844, 1.442695
        %v2846 = vpow.pop %v2845
        %v2847 = vadd.f32 %v2846, 1.0
        %v2848 = vrcp.pop %v2847
        %v2849 = vmul.f32 %v2847, %v2848
        %v2850 = vsub.f32 1.0, %v2849
        %v2851 = vmul.f32 %v2848, %v2850
        %v2852 = vadd.f32 %v2848, %v2851
        %vm2853 = vweird.f32 %v2847
        %vm2854 = vweird.f32 %v2848
        %vm2855 = vmor %vm2853, %vm2854
        %v2856 = vsel %vm2855, %v2848, %v2852
        %v2857 = vand.u32 2147483647, %v2847
        %vm2858 = vcmp.eq.f32.partialorder %v2857, 8.507059e+37
        %v2859 = vand.u32 %v2847, 2147483648
        %v2860 = vor.u32 1.1754944e-38, %v2859
        %v2861 = vsel %vm2858, %v2860, %v2856
        %v2862 = vmul.f32 1.0, %v2861
        %v2863 = vxor.u32 %v2823, 2147483648
        %v2864 = vmul.f32 %v2863, 1.442695
        %v2865 = vpow.pop %v2864
        %v2866 = vadd.f32 %v2865, 1.0
        %v2867 = vrcp.pop %v2866
        %v2868 = vmul.f32 %v2866, %v2867
        %v2869 = vsub.f32 1.0, %v2868
        %v2870 = vmul.f32 %v2867, %v2869
        %v2871 = vadd.f32 %v2867, %v2870
        %vm2872 = vweird.f32 %v2866
        %vm2873 = vweird.f32 %v2867
        %vm2874 = vmor %vm2872, %vm2873
        %v2875 = vsel %vm2874, %v2867, %v2871
        %v2876 = vand.u32 2147483647, %v2866
        %vm2877 = vcmp.eq.f32.partialorder %v2876, 8.507059e+37
        %v2878 = vand.u32 %v2866, 2147483648
        %v2879 = vor.u32 1.1754944e-38, %v2878
        %v2880 = vsel %vm2877, %v2879, %v2875
        %v2881 = vmul.f32 1.0, %v2880
        %v2882 = vtanh.pop %v2824
        %v2883 = vmul.f32 %v2862, %v2427
        %v2884 = vmul.f32 %v2843, %v2882
        %v2885 = vadd.f32 %v2883, %v2884
        %v2886 = vtanh.pop %v2885
        %v2887 = vmul.f32 %v2881, %v2886
        %v2889 = vsel %vm746, %v2887, 0
        %2891 = vmatpush.msra.mxu0 0.0
        %2892 = vmatpush.msra.mxu0 0.0
        %2893 = vmatpush.msra.mxu0 0.0
        %2894 = vmatpush.msra.mxu0 0.0
        %2895 = vmatpush.msra.mxu0 0.0
        %2896 = vmatpush.msra.mxu0 0.0
        %2897 = vmatpush.msra.mxu0 0.0
        %2898 = vmatpush.msra.mxu0 0.0
        %2899 = vmatpush.msra.mxu0 %v1027
        %2900 = vmatpush.msra.mxu0 %v1023
        %2901 = vmatpush.msra.mxu0 %v1019
        %2902 = vmatpush.msra.mxu0 %v1015
        %2903 = vmatpush.msra.mxu0 %v1011
        %2904 = vmatpush.msra.mxu0 %v1007
        %2905 = vmatpush.msra.mxu0 %v1003
        %2906 = vmatpush.msra.mxu0 %v999
        %2907 = vmatmul.f32.gmra.mxu0 %v2889
        %v2908 = vpop.f32.mrf.mxu0
        %v2909 = vadd.f32 0.0, %v2908
        %2910 = vdwg.mxu0
        %2911 = vmatpush.msra.mxu0 0.0
        %2912 = vmatpush.msra.mxu0 0.0
        %2913 = vmatpush.msra.mxu0 0.0
        %2914 = vmatpush.msra.mxu0 0.0
        %2915 = vmatpush.msra.mxu0 0.0
        %2916 = vmatpush.msra.mxu0 0.0
        %2917 = vmatpush.msra.mxu0 0.0
        %2918 = vmatpush.msra.mxu0 0.0
        %2919 = vmatpush.msra.mxu0 %v1028
        %2920 = vmatpush.msra.mxu0 %v1024
        %2921 = vmatpush.msra.mxu0 %v1020
        %2922 = vmatpush.msra.mxu0 %v1016
        %2923 = vmatpush.msra.mxu0 %v1012
        %2924 = vmatpush.msra.mxu0 %v1008
        %2925 = vmatpush.msra.mxu0 %v1004
        %2926 = vmatpush.msra.mxu0 %v1000
        %2927 = vmatmul.f32.gmra.mxu0 %v2889
        %v2928 = vpop.f32.mrf.mxu0
        %v2929 = vadd.f32 0.0, %v2928
        %2930 = vdwg.mxu0
        %2931 = vmatpush.msra.mxu0 0.0
        %2932 = vmatpush.msra.mxu0 0.0
        %2933 = vmatpush.msra.mxu0 0.0
        %2934 = vmatpush.msra.mxu0 0.0
        %2935 = vmatpush.msra.mxu0 0.0
        %2936 = vmatpush.msra.mxu0 0.0
        %2937 = vmatpush.msra.mxu0 0.0
        %2938 = vmatpush.msra.mxu0 0.0
        %2939 = vmatpush.msra.mxu0 %v1029
        %2940 = vmatpush.msra.mxu0 %v1025
        %2941 = vmatpush.msra.mxu0 %v1021
        %2942 = vmatpush.msra.mxu0 %v1017
        %2943 = vmatpush.msra.mxu0 %v1013
        %2944 = vmatpush.msra.mxu0 %v1009
        %2945 = vmatpush.msra.mxu0 %v1005
        %2946 = vmatpush.msra.mxu0 %v1001
        %2947 = vmatmul.f32.gmra.mxu0 %v2889
        %v2948 = vpop.f32.mrf.mxu0
        %v2949 = vadd.f32 0.0, %v2948
        %2950 = vdwg.mxu0
        %2951 = vmatpush.msra.mxu0 0.0
        %2952 = vmatpush.msra.mxu0 0.0
        %2953 = vmatpush.msra.mxu0 0.0
        %2954 = vmatpush.msra.mxu0 0.0
        %2955 = vmatpush.msra.mxu0 0.0
        %2956 = vmatpush.msra.mxu0 0.0
        %2957 = vmatpush.msra.mxu0 0.0
        %2958 = vmatpush.msra.mxu0 0.0
        %2959 = vmatpush.msra.mxu0 %v1030
        %2960 = vmatpush.msra.mxu0 %v1026
        %2961 = vmatpush.msra.mxu0 %v1022
        %2962 = vmatpush.msra.mxu0 %v1018
        %2963 = vmatpush.msra.mxu0 %v1014
        %2964 = vmatpush.msra.mxu0 %v1010
        %2965 = vmatpush.msra.mxu0 %v1006
        %2966 = vmatpush.msra.mxu0 %v1002
        %2967 = vmatmul.f32.gmra.mxu0 %v2889
        %v2968 = vpop.f32.mrf.mxu0
        %v2969 = vadd.f32 0.0, %v2968
        %2970 = vdwg.mxu0
        %v2971 = vtanh.pop %v2909
        %v2972 = vtanh.pop %v2929
        %v2973 = vtanh.pop %v2949
        %v2974 = vtanh.pop %v2969
        %v2975 = vadd.f32 %v2971, %v2972
        %v2976 = vadd.f32 %v2975, %v2973
        %v2977 = vadd.f32 %v2976, %v2974
        %v2978 = vmul.f32 %v2977, 0.25
        %v2979 = vmul.f32 %v2978, 1.442695
        %v2980 = vpow.pop %v2979
        %v2981 = vsel %vm489, %v2980, 0.0
        %2982 = vadd.xlane.f32.xlu0 %v2981
        %v2983 = vpop.xlane.xlu0 %2982
        %v2984 = vrcp.pop %v2983
        %2986 = vrot.lane.b32.xlu0 %v2980, 96
        %v2987 = vpop.permute.xlu0 %2986
        %v2989 = vsel %vm204, %v2987, 0.0
        %2990 = vadd.xlane.f32.xlu0 %v2989
        %v2991 = vpop.xlane.xlu0 %2990
        %v2992 = vrcp.pop %v2991
        %2993 = vrot.lane.b32.xlu0 %v2980, 80
        %v2994 = vpop.permute.xlu0 %2993
        %v2996 = vsel %vm204, %v2994, 0.0
        %2997 = vadd.xlane.f32.xlu0 %v2996
        %v2998 = vpop.xlane.xlu0 %2997
        %v2999 = vrcp.pop %v2998
        %3000 = vrot.lane.b32.xlu0 %v2980, 64
        %v3001 = vpop.permute.xlu0 %3000
        %v3003 = vsel %vm489, %v3001, 0.0
        %3004 = vadd.xlane.f32.xlu0 %v3003
        %v3005 = vpop.xlane.xlu0 %3004
        %v3006 = vrcp.pop %v3005
        %v3007 = vmul.f32 %v2984, 0.7
        %v3008 = vmul.f32 %v2980, %v3007
        %v3009 = vmul.f32 %v3006, 0.3
        %v3010 = vmul.f32 %v2980, %v3009
        %3012 = vrot.lane.b32.xlu0 %v3010, 64
        %v3013 = vpop.permute.xlu0 %3012
        %v3015 = vadd.f32 %v3008, %v3013
        %v3016 = vmul.f32 %v2980, %v2992
        %v3017 = vmul.f32 %v2980, %v2999
        %v3018 = vsel %vm489, %v3015, %v3016
        %v3019 = vsel %vm1162, %v3018, %v3017
        %v3020 = vmul.f32 %v2887, %v3019
        %v3022 = vsel %vm746, %v3020, 0
        %3024 = vmatpush.msra.mxu0 0.0
        %3025 = vmatpush.msra.mxu0 0.0
        %3026 = vmatpush.msra.mxu0 0.0
        %3027 = vmatpush.msra.mxu0 0.0
        %3028 = vmatpush.msra.mxu0 0.0
        %3029 = vmatpush.msra.mxu0 0.0
        %3030 = vmatpush.msra.mxu0 0.0
        %3031 = vmatpush.msra.mxu0 0.0
        %3032 = vmatpush.msra.mxu0 %v1172
        %3033 = vmatpush.msra.mxu0 %v1171
        %3034 = vmatpush.msra.mxu0 %v1170
        %3035 = vmatpush.msra.mxu0 %v1169
        %3036 = vmatpush.msra.mxu0 %v1168
        %3037 = vmatpush.msra.mxu0 %v1167
        %3038 = vmatpush.msra.mxu0 %v1166
        %3039 = vmatpush.msra.mxu0 %v1165
        %3040 = vmatmul.f32.gmra.mxu0 %v3022
        %v3041 = vpop.f32.mrf.mxu0
        %v3042 = vadd.f32 %v161, %v3041
        %3043 = vdwg.mxu0
        %v3045 = vsel %vm746, %v3042, 0
        %3047 = vmatpush.msra.mxu0 0.0
        %3048 = vmatpush.msra.mxu0 0.0
        %3049 = vmatpush.msra.mxu0 0.0
        %3050 = vmatpush.msra.mxu0 0.0
        %3051 = vmatpush.msra.mxu0 0.0
        %3052 = vmatpush.msra.mxu0 0.0
        %3053 = vmatpush.msra.mxu0 0.0
        %3054 = vmatpush.msra.mxu0 0.0
        %3055 = vmatpush.msra.mxu0 %v1210
        %3056 = vmatpush.msra.mxu0 %v1208
        %3057 = vmatpush.msra.mxu0 %v1206
        %3058 = vmatpush.msra.mxu0 %v1204
        %3059 = vmatpush.msra.mxu0 %v1202
        %3060 = vmatpush.msra.mxu0 %v1200
        %3061 = vmatpush.msra.mxu0 %v1198
        %3062 = vmatpush.msra.mxu0 %v1196
        %3063 = vmatmul.f32.gmra.mxu0 %v3045
        %v3064 = vpop.f32.mrf.mxu0
        %v3065 = vadd.f32 %v165, %v3064
        %3066 = vdwg.mxu0
        %3067 = vmatpush.msra.mxu0 0.0
        %3068 = vmatpush.msra.mxu0 0.0
        %3069 = vmatpush.msra.mxu0 0.0
        %3070 = vmatpush.msra.mxu0 0.0
        %3071 = vmatpush.msra.mxu0 0.0
        %3072 = vmatpush.msra.mxu0 0.0
        %3073 = vmatpush.msra.mxu0 0.0
        %3074 = vmatpush.msra.mxu0 0.0
        %3075 = vmatpush.msra.mxu0 %v1211
        %3076 = vmatpush.msra.mxu0 %v1209
        %3077 = vmatpush.msra.mxu0 %v1207
        %3078 = vmatpush.msra.mxu0 %v1205
        %3079 = vmatpush.msra.mxu0 %v1203
        %3080 = vmatpush.msra.mxu0 %v1201
        %3081 = vmatpush.msra.mxu0 %v1199
        %3082 = vmatpush.msra.mxu0 %v1197
        %3083 = vmatmul.f32.gmra.mxu0 %v3045
        %v3084 = vpop.f32.mrf.mxu0
        %v3085 = vadd.f32 %v166, %v3084
        %3086 = vdwg.mxu0
        %v3087 = vxor.u32 %v3085, 2147483648
        %v3088 = vmul.f32 %v3087, 1.442695
        %v3089 = vpow.pop %v3088
        %v3090 = vadd.f32 %v3089, 1.0
        %v3091 = vrcp.pop %v3090
        %v3092 = vmul.f32 %v3090, %v3091
        %v3093 = vsub.f32 1.0, %v3092
        %v3094 = vmul.f32 %v3091, %v3093
        %v3095 = vadd.f32 %v3091, %v3094
        %vm3096 = vweird.f32 %v3090
        %vm3097 = vweird.f32 %v3091
        %vm3098 = vmor %vm3096, %vm3097
        %v3099 = vsel %vm3098, %v3091, %v3095
        %v3100 = vand.u32 2147483647, %v3090
        %vm3101 = vcmp.eq.f32.partialorder %v3100, 8.507059e+37
        %v3102 = vand.u32 %v3090, 2147483648
        %v3103 = vor.u32 1.1754944e-38, %v3102
        %v3104 = vsel %vm3101, %v3103, %v3099
        %v3105 = vmul.f32 1.0, %v3104
        %v3106 = vtanh.pop %v3065
        %v3107 = vmul.f32 %v3105, %v3106
        %v3108 = vld [vmem:[#allocation2 + $0xa0] sm:$0xff]
        %v3109 = vld [vmem:[#allocation2 + $0xa8] sm:$0xff]
        %v3110 = vld [vmem:[#allocation2 + $0xb0] sm:$0xff]
        %v3111 = vld [vmem:[#allocation2 + $0xb8] sm:$0xff]
        %3112 = vmatpush.msra.mxu0 0.0
        %3113 = vmatpush.msra.mxu0 0.0
        %3114 = vmatpush.msra.mxu0 0.0
        %3115 = vmatpush.msra.mxu0 0.0
        %3116 = vmatpush.msra.mxu0 0.0
        %3117 = vmatpush.msra.mxu0 0.0
        %3118 = vmatpush.msra.mxu0 0.0
        %3119 = vmatpush.msra.mxu0 0.0
        %3120 = vmatpush.msra.mxu0 %v742
        %3121 = vmatpush.msra.mxu0 %v738
        %3122 = vmatpush.msra.mxu0 %v734
        %3123 = vmatpush.msra.mxu0 %v730
        %3124 = vmatpush.msra.mxu0 %v726
        %3125 = vmatpush.msra.mxu0 %v722
        %3126 = vmatpush.msra.mxu0 %v718
        %3127 = vmatpush.msra.mxu0 %v714
        %3128 = vmatmul.f32.gmra.mxu0 %v2889
        %v3129 = vpop.f32.mrf.mxu0
        %v3130 = vadd.f32 0.0, %v3129
        %3131 = vdwg.mxu0
        %3132 = vmatpush.msra.mxu0 0.0
        %3133 = vmatpush.msra.mxu0 0.0
        %3134 = vmatpush.msra.mxu0 0.0
        %3135 = vmatpush.msra.mxu0 0.0
        %3136 = vmatpush.msra.mxu0 0.0
        %3137 = vmatpush.msra.mxu0 0.0
        %3138 = vmatpush.msra.mxu0 0.0
        %3139 = vmatpush.msra.mxu0 0.0
        %3140 = vmatpush.msra.mxu0 %v743
        %3141 = vmatpush.msra.mxu0 %v739
        %3142 = vmatpush.msra.mxu0 %v735
        %3143 = vmatpush.msra.mxu0 %v731
        %3144 = vmatpush.msra.mxu0 %v727
        %3145 = vmatpush.msra.mxu0 %v723
        %3146 = vmatpush.msra.mxu0 %v719
        %3147 = vmatpush.msra.mxu0 %v715
        %3148 = vmatmul.f32.gmra.mxu0 %v2889
        %v3149 = vpop.f32.mrf.mxu0
        %v3150 = vadd.f32 0.0, %v3149
        %3151 = vdwg.mxu0
        %3152 = vmatpush.msra.mxu0 0.0
        %3153 = vmatpush.msra.mxu0 0.0
        %3154 = vmatpush.msra.mxu0 0.0
        %3155 = vmatpush.msra.mxu0 0.0
        %3156 = vmatpush.msra.mxu0 0.0
        %3157 = vmatpush.msra.mxu0 0.0
        %3158 = vmatpush.msra.mxu0 0.0
        %3159 = vmatpush.msra.mxu0 0.0
        %3160 = vmatpush.msra.mxu0 %v744
        %3161 = vmatpush.msra.mxu0 %v740
        %3162 = vmatpush.msra.mxu0 %v736
        %3163 = vmatpush.msra.mxu0 %v732
        %3164 = vmatpush.msra.mxu0 %v728
        %3165 = vmatpush.msra.mxu0 %v724
        %3166 = vmatpush.msra.mxu0 %v720
        %3167 = vmatpush.msra.mxu0 %v716
        %3168 = vmatmul.f32.gmra.mxu0 %v2889
        %v3169 = vpop.f32.mrf.mxu0
        %v3170 = vadd.f32 0.0, %v3169
        %3171 = vdwg.mxu0
        %3172 = vmatpush.msra.mxu0 0.0
        %3173 = vmatpush.msra.mxu0 0.0
        %3174 = vmatpush.msra.mxu0 0.0
        %3175 = vmatpush.msra.mxu0 0.0
        %3176 = vmatpush.msra.mxu0 0.0
        %3177 = vmatpush.msra.mxu0 0.0
        %3178 = vmatpush.msra.mxu0 0.0
        %3179 = vmatpush.msra.mxu0 0.0
        %3180 = vmatpush.msra.mxu0 %v745
        %3181 = vmatpush.msra.mxu0 %v741
        %3182 = vmatpush.msra.mxu0 %v737
        %3183 = vmatpush.msra.mxu0 %v733
        %3184 = vmatpush.msra.mxu0 %v729
        %3185 = vmatpush.msra.mxu0 %v725
        %3186 = vmatpush.msra.mxu0 %v721
        %3187 = vmatpush.msra.mxu0 %v717
        %3188 = vmatmul.f32.gmra.mxu0 %v2889
        %v3189 = vpop.f32.mrf.mxu0
        %v3190 = vadd.f32 0.0, %v3189
        %3191 = vdwg.mxu0
        %v3192 = vadd.f32 %v3108, %v3130
        %v3193 = vadd.f32 %v3109, %v3150
        %v3194 = vadd.f32 %v3110, %v3170
        %v3195 = vadd.f32 %v3111, %v3190
        %v3197 = vsel %vm489, %v3107, 0
        %3199 = vmatpush.msra.mxu0 0.0
        %3200 = vmatpush.msra.mxu0 0.0
        %3201 = vmatpush.msra.mxu0 0.0
        %3202 = vmatpush.msra.mxu0 0.0
        %3203 = vmatpush.msra.mxu0 0.0
        %3204 = vmatpush.msra.mxu0 0.0
        %3205 = vmatpush.msra.mxu0 0.0
        %3206 = vmatpush.msra.mxu0 0.0
        %3207 = vmatpush.msra.mxu0 0.0
        %3208 = vmatpush.msra.mxu0 0.0
        %3209 = vmatpush.msra.mxu0 0.0
        %3210 = vmatpush.msra.mxu0 0.0
        %3211 = vmatpush.msra.mxu0 %v846
        %3212 = vmatpush.msra.mxu0 %v842
        %3213 = vmatpush.msra.mxu0 %v838
        %3214 = vmatpush.msra.mxu0 %v834
        %3215 = vmatmul.f32.gmra.mxu0 %v3197
        %v3216 = vpop.f32.mrf.mxu0
        %v3217 = vadd.f32 0.0, %v3216
        %3218 = vdwg.mxu0
        %3219 = vmatpush.msra.mxu0 0.0
        %3220 = vmatpush.msra.mxu0 0.0
        %3221 = vmatpush.msra.mxu0 0.0
        %3222 = vmatpush.msra.mxu0 0.0
        %3223 = vmatpush.msra.mxu0 0.0
        %3224 = vmatpush.msra.mxu0 0.0
        %3225 = vmatpush.msra.mxu0 0.0
        %3226 = vmatpush.msra.mxu0 0.0
        %3227 = vmatpush.msra.mxu0 0.0
        %3228 = vmatpush.msra.mxu0 0.0
        %3229 = vmatpush.msra.mxu0 0.0
        %3230 = vmatpush.msra.mxu0 0.0
        %3231 = vmatpush.msra.mxu0 %v847
        %3232 = vmatpush.msra.mxu0 %v843
        %3233 = vmatpush.msra.mxu0 %v839
        %3234 = vmatpush.msra.mxu0 %v835
        %3235 = vmatmul.f32.gmra.mxu0 %v3197
        %v3236 = vpop.f32.mrf.mxu0
        %v3237 = vadd.f32 0.0, %v3236
        %3238 = vdwg.mxu0
        %3239 = vmatpush.msra.mxu0 0.0
        %3240 = vmatpush.msra.mxu0 0.0
        %3241 = vmatpush.msra.mxu0 0.0
        %3242 = vmatpush.msra.mxu0 0.0
        %3243 = vmatpush.msra.mxu0 0.0
        %3244 = vmatpush.msra.mxu0 0.0
        %3245 = vmatpush.msra.mxu0 0.0
        %3246 = vmatpush.msra.mxu0 0.0
        %3247 = vmatpush.msra.mxu0 0.0
        %3248 = vmatpush.msra.mxu0 0.0
        %3249 = vmatpush.msra.mxu0 0.0
        %3250 = vmatpush.msra.mxu0 0.0
        %3251 = vmatpush.msra.mxu0 %v848
        %3252 = vmatpush.msra.mxu0 %v844
        %3253 = vmatpush.msra.mxu0 %v840
        %3254 = vmatpush.msra.mxu0 %v836
        %3255 = vmatmul.f32.gmra.mxu0 %v3197
        %v3256 = vpop.f32.mrf.mxu0
        %v3257 = vadd.f32 0.0, %v3256
        %3258 = vdwg.mxu0
        %3259 = vmatpush.msra.mxu0 0.0
        %3260 = vmatpush.msra.mxu0 0.0
        %3261 = vmatpush.msra.mxu0 0.0
        %3262 = vmatpush.msra.mxu0 0.0
        %3263 = vmatpush.msra.mxu0 0.0
        %3264 = vmatpush.msra.mxu0 0.0
        %3265 = vmatpush.msra.mxu0 0.0
        %3266 = vmatpush.msra.mxu0 0.0
        %3267 = vmatpush.msra.mxu0 0.0
        %3268 = vmatpush.msra.mxu0 0.0
        %3269 = vmatpush.msra.mxu0 0.0
        %3270 = vmatpush.msra.mxu0 0.0
        %3271 = vmatpush.msra.mxu0 %v849
        %3272 = vmatpush.msra.mxu0 %v845
        %3273 = vmatpush.msra.mxu0 %v841
        %3274 = vmatpush.msra.mxu0 %v837
        %3275 = vmatmul.f32.gmra.mxu0 %v3197
        %v3276 = vpop.f32.mrf.mxu0
        %v3277 = vadd.f32 0.0, %v3276
        %3278 = vdwg.mxu0
        %v3279 = vadd.f32 %v3192, %v3217
        %v3280 = vadd.f32 %v3193, %v3237
        %v3281 = vadd.f32 %v3194, %v3257
        %v3282 = vadd.f32 %v3195, %v3277
        %v3283 = vxor.u32 %v3279, 2147483648
        %v3284 = vmul.f32 %v3283, 1.442695
        %v3285 = vpow.pop %v3284
        %v3286 = vadd.f32 %v3285, 1.0
        %v3287 = vrcp.pop %v3286
        %v3288 = vmul.f32 %v3286, %v3287
        %v3289 = vsub.f32 1.0, %v3288
        %v3290 = vmul.f32 %v3287, %v3289
        %v3291 = vadd.f32 %v3287, %v3290
        %vm3292 = vweird.f32 %v3286
        %vm3293 = vweird.f32 %v3287
        %vm3294 = vmor %vm3292, %vm3293
        %v3295 = vsel %vm3294, %v3287, %v3291
        %v3296 = vand.u32 2147483647, %v3286
        %vm3297 = vcmp.eq.f32.partialorder %v3296, 8.507059e+37
        %v3298 = vand.u32 %v3286, 2147483648
        %v3299 = vor.u32 1.1754944e-38, %v3298
        %v3300 = vsel %vm3297, %v3299, %v3295
        %v3301 = vmul.f32 1.0, %v3300
        %v3302 = vxor.u32 %v3280, 2147483648
        %v3303 = vmul.f32 %v3302, 1.442695
        %v3304 = vpow.pop %v3303
        %v3305 = vadd.f32 %v3304, 1.0
        %v3306 = vrcp.pop %v3305
        %v3307 = vmul.f32 %v3305, %v3306
        %v3308 = vsub.f32 1.0, %v3307
        %v3309 = vmul.f32 %v3306, %v3308
        %v3310 = vadd.f32 %v3306, %v3309
        %vm3311 = vweird.f32 %v3305
        %vm3312 = vweird.f32 %v3306
        %vm3313 = vmor %vm3311, %vm3312
        %v3314 = vsel %vm3313, %v3306, %v3310
        %v3315 = vand.u32 2147483647, %v3305
        %vm3316 = vcmp.eq.f32.partialorder %v3315, 8.507059e+37
        %v3317 = vand.u32 %v3305, 2147483648
        %v3318 = vor.u32 1.1754944e-38, %v3317
        %v3319 = vsel %vm3316, %v3318, %v3314
        %v3320 = vmul.f32 1.0, %v3319
        %v3321 = vxor.u32 %v3281, 2147483648
        %v3322 = vmul.f32 %v3321, 1.442695
        %v3323 = vpow.pop %v3322
        %v3324 = vadd.f32 %v3323, 1.0
        %v3325 = vrcp.pop %v3324
        %v3326 = vmul.f32 %v3324, %v3325
        %v3327 = vsub.f32 1.0, %v3326
        %v3328 = vmul.f32 %v3325, %v3327
        %v3329 = vadd.f32 %v3325, %v3328
        %vm3330 = vweird.f32 %v3324
        %vm3331 = vweird.f32 %v3325
        %vm3332 = vmor %vm3330, %vm3331
        %v3333 = vsel %vm3332, %v3325, %v3329
        %v3334 = vand.u32 2147483647, %v3324
        %vm3335 = vcmp.eq.f32.partialorder %v3334, 8.507059e+37
        %v3336 = vand.u32 %v3324, 2147483648
        %v3337 = vor.u32 1.1754944e-38, %v3336
        %v3338 = vsel %vm3335, %v3337, %v3333
        %v3339 = vmul.f32 1.0, %v3338
        %v3340 = vtanh.pop %v3282
        %v3341 = vmul.f32 %v3320, %v2885
        %v3342 = vmul.f32 %v3301, %v3340
        %v3343 = vadd.f32 %v3341, %v3342
        %v3344 = vtanh.pop %v3343
        %v3345 = vmul.f32 %v3339, %v3344
        %v3347 = vsel %vm746, %v3345, 0
        %3349 = vmatpush.msra.mxu0 0.0
        %3350 = vmatpush.msra.mxu0 0.0
        %3351 = vmatpush.msra.mxu0 0.0
        %3352 = vmatpush.msra.mxu0 0.0
        %3353 = vmatpush.msra.mxu0 0.0
        %3354 = vmatpush.msra.mxu0 0.0
        %3355 = vmatpush.msra.mxu0 0.0
        %3356 = vmatpush.msra.mxu0 0.0
        %3357 = vmatpush.msra.mxu0 %v1027
        %3358 = vmatpush.msra.mxu0 %v1023
        %3359 = vmatpush.msra.mxu0 %v1019
        %3360 = vmatpush.msra.mxu0 %v1015
        %3361 = vmatpush.msra.mxu0 %v1011
        %3362 = vmatpush.msra.mxu0 %v1007
        %3363 = vmatpush.msra.mxu0 %v1003
        %3364 = vmatpush.msra.mxu0 %v999
        %3365 = vmatmul.f32.gmra.mxu0 %v3347
        %v3366 = vpop.f32.mrf.mxu0
        %v3367 = vadd.f32 0.0, %v3366
        %3368 = vdwg.mxu0
        %3369 = vmatpush.msra.mxu0 0.0
        %3370 = vmatpush.msra.mxu0 0.0
        %3371 = vmatpush.msra.mxu0 0.0
        %3372 = vmatpush.msra.mxu0 0.0
        %3373 = vmatpush.msra.mxu0 0.0
        %3374 = vmatpush.msra.mxu0 0.0
        %3375 = vmatpush.msra.mxu0 0.0
        %3376 = vmatpush.msra.mxu0 0.0
        %3377 = vmatpush.msra.mxu0 %v1028
        %3378 = vmatpush.msra.mxu0 %v1024
        %3379 = vmatpush.msra.mxu0 %v1020
        %3380 = vmatpush.msra.mxu0 %v1016
        %3381 = vmatpush.msra.mxu0 %v1012
        %3382 = vmatpush.msra.mxu0 %v1008
        %3383 = vmatpush.msra.mxu0 %v1004
        %3384 = vmatpush.msra.mxu0 %v1000
        %3385 = vmatmul.f32.gmra.mxu0 %v3347
        %v3386 = vpop.f32.mrf.mxu0
        %v3387 = vadd.f32 0.0, %v3386
        %3388 = vdwg.mxu0
        %3389 = vmatpush.msra.mxu0 0.0
        %3390 = vmatpush.msra.mxu0 0.0
        %3391 = vmatpush.msra.mxu0 0.0
        %3392 = vmatpush.msra.mxu0 0.0
        %3393 = vmatpush.msra.mxu0 0.0
        %3394 = vmatpush.msra.mxu0 0.0
        %3395 = vmatpush.msra.mxu0 0.0
        %3396 = vmatpush.msra.mxu0 0.0
        %3397 = vmatpush.msra.mxu0 %v1029
        %3398 = vmatpush.msra.mxu0 %v1025
        %3399 = vmatpush.msra.mxu0 %v1021
        %3400 = vmatpush.msra.mxu0 %v1017
        %3401 = vmatpush.msra.mxu0 %v1013
        %3402 = vmatpush.msra.mxu0 %v1009
        %3403 = vmatpush.msra.mxu0 %v1005
        %3404 = vmatpush.msra.mxu0 %v1001
        %3405 = vmatmul.f32.gmra.mxu0 %v3347
        %v3406 = vpop.f32.mrf.mxu0
        %v3407 = vadd.f32 0.0, %v3406
        %3408 = vdwg.mxu0
        %3409 = vmatpush.msra.mxu0 0.0
        %3410 = vmatpush.msra.mxu0 0.0
        %3411 = vmatpush.msra.mxu0 0.0
        %3412 = vmatpush.msra.mxu0 0.0
        %3413 = vmatpush.msra.mxu0 0.0
        %3414 = vmatpush.msra.mxu0 0.0
        %3415 = vmatpush.msra.mxu0 0.0
        %3416 = vmatpush.msra.mxu0 0.0
        %3417 = vmatpush.msra.mxu0 %v1030
        %3418 = vmatpush.msra.mxu0 %v1026
        %3419 = vmatpush.msra.mxu0 %v1022
        %3420 = vmatpush.msra.mxu0 %v1018
        %3421 = vmatpush.msra.mxu0 %v1014
        %3422 = vmatpush.msra.mxu0 %v1010
        %3423 = vmatpush.msra.mxu0 %v1006
        %3424 = vmatpush.msra.mxu0 %v1002
        %3425 = vmatmul.f32.gmra.mxu0 %v3347
        %v3426 = vpop.f32.mrf.mxu0
        %v3427 = vadd.f32 0.0, %v3426
        %3428 = vdwg.mxu0
        %v3429 = vtanh.pop %v3367
        %v3430 = vtanh.pop %v3387
        %v3431 = vtanh.pop %v3407
        %v3432 = vtanh.pop %v3427
        %v3433 = vadd.f32 %v3429, %v3430
        %v3434 = vadd.f32 %v3433, %v3431
        %v3435 = vadd.f32 %v3434, %v3432
        %v3436 = vmul.f32 %v3435, 0.25
        %v3437 = vmul.f32 %v3436, 1.442695
        %v3438 = vpow.pop %v3437
        %v3439 = vsel %vm489, %v3438, 0.0
        %3440 = vadd.xlane.f32.xlu0 %v3439
        %v3441 = vpop.xlane.xlu0 %3440
        %v3442 = vrcp.pop %v3441
        %3444 = vrot.lane.b32.xlu0 %v3438, 96
        %v3445 = vpop.permute.xlu0 %3444
        %v3447 = vsel %vm204, %v3445, 0.0
        %3448 = vadd.xlane.f32.xlu0 %v3447
        %v3449 = vpop.xlane.xlu0 %3448
        %v3450 = vrcp.pop %v3449
        %3451 = vrot.lane.b32.xlu0 %v3438, 80
        %v3452 = vpop.permute.xlu0 %3451
        %v3454 = vsel %vm204, %v3452, 0.0
        %3455 = vadd.xlane.f32.xlu0 %v3454
        %v3456 = vpop.xlane.xlu0 %3455
        %v3457 = vrcp.pop %v3456
        %3458 = vrot.lane.b32.xlu0 %v3438, 64
        %v3459 = vpop.permute.xlu0 %3458
        %v3461 = vsel %vm489, %v3459, 0.0
        %3462 = vadd.xlane.f32.xlu0 %v3461
        %v3463 = vpop.xlane.xlu0 %3462
        %v3464 = vrcp.pop %v3463
        %v3465 = vmul.f32 %v3442, 0.7
        %v3466 = vmul.f32 %v3438, %v3465
        %v3467 = vmul.f32 %v3464, 0.3
        %v3468 = vmul.f32 %v3438, %v3467
        %3470 = vrot.lane.b32.xlu0 %v3468, 64
        %v3471 = vpop.permute.xlu0 %3470
        %v3473 = vadd.f32 %v3466, %v3471
        %v3474 = vmul.f32 %v3438, %v3450
        %v3475 = vmul.f32 %v3438, %v3457
        %v3476 = vsel %vm489, %v3473, %v3474
        %v3477 = vsel %vm1162, %v3476, %v3475
        %v3478 = vmul.f32 %v3345, %v3477
        %v3480 = vsel %vm746, %v3478, 0
        %3482 = vmatpush.msra.mxu0 0.0
        %3483 = vmatpush.msra.mxu0 0.0
        %3484 = vmatpush.msra.mxu0 0.0
        %3485 = vmatpush.msra.mxu0 0.0
        %3486 = vmatpush.msra.mxu0 0.0
        %3487 = vmatpush.msra.mxu0 0.0
        %3488 = vmatpush.msra.mxu0 0.0
        %3489 = vmatpush.msra.mxu0 0.0
        %3490 = vmatpush.msra.mxu0 %v1172
        %3491 = vmatpush.msra.mxu0 %v1171
        %3492 = vmatpush.msra.mxu0 %v1170
        %3493 = vmatpush.msra.mxu0 %v1169
        %3494 = vmatpush.msra.mxu0 %v1168
        %3495 = vmatpush.msra.mxu0 %v1167
        %3496 = vmatpush.msra.mxu0 %v1166
        %3497 = vmatpush.msra.mxu0 %v1165
        %3498 = vmatmul.f32.gmra.mxu0 %v3480
        %v3499 = vpop.f32.mrf.mxu0
        %v3500 = vadd.f32 %v161, %v3499
        %3501 = vdwg.mxu0
        %v3503 = vsel %vm746, %v3500, 0
        %3505 = vmatpush.msra.mxu0 0.0
        %3506 = vmatpush.msra.mxu0 0.0
        %3507 = vmatpush.msra.mxu0 0.0
        %3508 = vmatpush.msra.mxu0 0.0
        %3509 = vmatpush.msra.mxu0 0.0
        %3510 = vmatpush.msra.mxu0 0.0
        %3511 = vmatpush.msra.mxu0 0.0
        %3512 = vmatpush.msra.mxu0 0.0
        %3513 = vmatpush.msra.mxu0 %v1210
        %3514 = vmatpush.msra.mxu0 %v1208
        %3515 = vmatpush.msra.mxu0 %v1206
        %3516 = vmatpush.msra.mxu0 %v1204
        %3517 = vmatpush.msra.mxu0 %v1202
        %3518 = vmatpush.msra.mxu0 %v1200
        %3519 = vmatpush.msra.mxu0 %v1198
        %3520 = vmatpush.msra.mxu0 %v1196
        %3521 = vmatmul.f32.gmra.mxu0 %v3503
        %v3522 = vpop.f32.mrf.mxu0
        %v3523 = vadd.f32 %v165, %v3522
        %3524 = vdwg.mxu0
        %3525 = vmatpush.msra.mxu0 0.0
        %3526 = vmatpush.msra.mxu0 0.0
        %3527 = vmatpush.msra.mxu0 0.0
        %3528 = vmatpush.msra.mxu0 0.0
        %3529 = vmatpush.msra.mxu0 0.0
        %3530 = vmatpush.msra.mxu0 0.0
        %3531 = vmatpush.msra.mxu0 0.0
        %3532 = vmatpush.msra.mxu0 0.0
        %3533 = vmatpush.msra.mxu0 %v1211
        %3534 = vmatpush.msra.mxu0 %v1209
        %3535 = vmatpush.msra.mxu0 %v1207
        %3536 = vmatpush.msra.mxu0 %v1205
        %3537 = vmatpush.msra.mxu0 %v1203
        %3538 = vmatpush.msra.mxu0 %v1201
        %3539 = vmatpush.msra.mxu0 %v1199
        %3540 = vmatpush.msra.mxu0 %v1197
        %3541 = vmatmul.f32.gmra.mxu0 %v3503
        %v3542 = vpop.f32.mrf.mxu0
        %v3543 = vadd.f32 %v166, %v3542
        %3544 = vdwg.mxu0
        %v3545 = vxor.u32 %v3543, 2147483648
        %v3546 = vmul.f32 %v3545, 1.442695
        %v3547 = vpow.pop %v3546
        %v3548 = vadd.f32 %v3547, 1.0
        %v3549 = vrcp.pop %v3548
        %v3550 = vmul.f32 %v3548, %v3549
        %v3551 = vsub.f32 1.0, %v3550
        %v3552 = vmul.f32 %v3549, %v3551
        %v3553 = vadd.f32 %v3549, %v3552
        %vm3554 = vweird.f32 %v3548
        %vm3555 = vweird.f32 %v3549
        %vm3556 = vmor %vm3554, %vm3555
        %v3557 = vsel %vm3556, %v3549, %v3553
        %v3558 = vand.u32 2147483647, %v3548
        %vm3559 = vcmp.eq.f32.partialorder %v3558, 8.507059e+37
        %v3560 = vand.u32 %v3548, 2147483648
        %v3561 = vor.u32 1.1754944e-38, %v3560
        %v3562 = vsel %vm3559, %v3561, %v3557
        %v3563 = vmul.f32 1.0, %v3562
        %v3564 = vtanh.pop %v3523
        %v3565 = vmul.f32 %v3563, %v3564
        %v3566 = vld [vmem:[#allocation2 + $0xc0] sm:$0xff]
        %v3567 = vld [vmem:[#allocation2 + $0xc8] sm:$0xff]
        %v3568 = vld [vmem:[#allocation2 + $0xd0] sm:$0xff]
        %v3569 = vld [vmem:[#allocation2 + $0xd8] sm:$0xff]
        %3570 = vmatpush.msra.mxu0 0.0
        %3571 = vmatpush.msra.mxu0 0.0
        %3572 = vmatpush.msra.mxu0 0.0
        %3573 = vmatpush.msra.mxu0 0.0
        %3574 = vmatpush.msra.mxu0 0.0
        %3575 = vmatpush.msra.mxu0 0.0
        %3576 = vmatpush.msra.mxu0 0.0
        %3577 = vmatpush.msra.mxu0 0.0
        %3578 = vmatpush.msra.mxu0 %v742
        %3579 = vmatpush.msra.mxu0 %v738
        %3580 = vmatpush.msra.mxu0 %v734
        %3581 = vmatpush.msra.mxu0 %v730
        %3582 = vmatpush.msra.mxu0 %v726
        %3583 = vmatpush.msra.mxu0 %v722
        %3584 = vmatpush.msra.mxu0 %v718
        %3585 = vmatpush.msra.mxu0 %v714
        %3586 = vmatmul.f32.gmra.mxu0 %v3347
        %v3587 = vpop.f32.mrf.mxu0
        %v3588 = vadd.f32 0.0, %v3587
        %3589 = vdwg.mxu0
        %3590 = vmatpush.msra.mxu0 0.0
        %3591 = vmatpush.msra.mxu0 0.0
        %3592 = vmatpush.msra.mxu0 0.0
        %3593 = vmatpush.msra.mxu0 0.0
        %3594 = vmatpush.msra.mxu0 0.0
        %3595 = vmatpush.msra.mxu0 0.0
        %3596 = vmatpush.msra.mxu0 0.0
        %3597 = vmatpush.msra.mxu0 0.0
        %3598 = vmatpush.msra.mxu0 %v743
        %3599 = vmatpush.msra.mxu0 %v739
        %3600 = vmatpush.msra.mxu0 %v735
        %3601 = vmatpush.msra.mxu0 %v731
        %3602 = vmatpush.msra.mxu0 %v727
        %3603 = vmatpush.msra.mxu0 %v723
        %3604 = vmatpush.msra.mxu0 %v719
        %3605 = vmatpush.msra.mxu0 %v715
        %3606 = vmatmul.f32.gmra.mxu0 %v3347
        %v3607 = vpop.f32.mrf.mxu0
        %v3608 = vadd.f32 0.0, %v3607
        %3609 = vdwg.mxu0
        %3610 = vmatpush.msra.mxu0 0.0
        %3611 = vmatpush.msra.mxu0 0.0
        %3612 = vmatpush.msra.mxu0 0.0
        %3613 = vmatpush.msra.mxu0 0.0
        %3614 = vmatpush.msra.mxu0 0.0
        %3615 = vmatpush.msra.mxu0 0.0
        %3616 = vmatpush.msra.mxu0 0.0
        %3617 = vmatpush.msra.mxu0 0.0
        %3618 = vmatpush.msra.mxu0 %v744
        %3619 = vmatpush.msra.mxu0 %v740
        %3620 = vmatpush.msra.mxu0 %v736
        %3621 = vmatpush.msra.mxu0 %v732
        %3622 = vmatpush.msra.mxu0 %v728
        %3623 = vmatpush.msra.mxu0 %v724
        %3624 = vmatpush.msra.mxu0 %v720
        %3625 = vmatpush.msra.mxu0 %v716
        %3626 = vmatmul.f32.gmra.mxu0 %v3347
        %v3627 = vpop.f32.mrf.mxu0
        %v3628 = vadd.f32 0.0, %v3627
        %3629 = vdwg.mxu0
        %3630 = vmatpush.msra.mxu0 0.0
        %3631 = vmatpush.msra.mxu0 0.0
        %3632 = vmatpush.msra.mxu0 0.0
        %3633 = vmatpush.msra.mxu0 0.0
        %3634 = vmatpush.msra.mxu0 0.0
        %3635 = vmatpush.msra.mxu0 0.0
        %3636 = vmatpush.msra.mxu0 0.0
        %3637 = vmatpush.msra.mxu0 0.0
        %3638 = vmatpush.msra.mxu0 %v745
        %3639 = vmatpush.msra.mxu0 %v741
        %3640 = vmatpush.msra.mxu0 %v737
        %3641 = vmatpush.msra.mxu0 %v733
        %3642 = vmatpush.msra.mxu0 %v729
        %3643 = vmatpush.msra.mxu0 %v725
        %3644 = vmatpush.msra.mxu0 %v721
        %3645 = vmatpush.msra.mxu0 %v717
        %3646 = vmatmul.f32.gmra.mxu0 %v3347
        %v3647 = vpop.f32.mrf.mxu0
        %v3648 = vadd.f32 0.0, %v3647
        %3649 = vdwg.mxu0
        %v3650 = vadd.f32 %v3566, %v3588
        %v3651 = vadd.f32 %v3567, %v3608
        %v3652 = vadd.f32 %v3568, %v3628
        %v3653 = vadd.f32 %v3569, %v3648
        %v3655 = vsel %vm489, %v3565, 0
        %3657 = vmatpush.msra.mxu0 0.0
        %3658 = vmatpush.msra.mxu0 0.0
        %3659 = vmatpush.msra.mxu0 0.0
        %3660 = vmatpush.msra.mxu0 0.0
        %3661 = vmatpush.msra.mxu0 0.0
        %3662 = vmatpush.msra.mxu0 0.0
        %3663 = vmatpush.msra.mxu0 0.0
        %3664 = vmatpush.msra.mxu0 0.0
        %3665 = vmatpush.msra.mxu0 0.0
        %3666 = vmatpush.msra.mxu0 0.0
        %3667 = vmatpush.msra.mxu0 0.0
        %3668 = vmatpush.msra.mxu0 0.0
        %3669 = vmatpush.msra.mxu0 %v846
        %3670 = vmatpush.msra.mxu0 %v842
        %3671 = vmatpush.msra.mxu0 %v838
        %3672 = vmatpush.msra.mxu0 %v834
        %3673 = vmatmul.f32.gmra.mxu0 %v3655
        %v3674 = vpop.f32.mrf.mxu0
        %v3675 = vadd.f32 0.0, %v3674
        %3676 = vdwg.mxu0
        %3677 = vmatpush.msra.mxu0 0.0
        %3678 = vmatpush.msra.mxu0 0.0
        %3679 = vmatpush.msra.mxu0 0.0
        %3680 = vmatpush.msra.mxu0 0.0
        %3681 = vmatpush.msra.mxu0 0.0
        %3682 = vmatpush.msra.mxu0 0.0
        %3683 = vmatpush.msra.mxu0 0.0
        %3684 = vmatpush.msra.mxu0 0.0
        %3685 = vmatpush.msra.mxu0 0.0
        %3686 = vmatpush.msra.mxu0 0.0
        %3687 = vmatpush.msra.mxu0 0.0
        %3688 = vmatpush.msra.mxu0 0.0
        %3689 = vmatpush.msra.mxu0 %v847
        %3690 = vmatpush.msra.mxu0 %v843
        %3691 = vmatpush.msra.mxu0 %v839
        %3692 = vmatpush.msra.mxu0 %v835
        %3693 = vmatmul.f32.gmra.mxu0 %v3655
        %v3694 = vpop.f32.mrf.mxu0
        %v3695 = vadd.f32 0.0, %v3694
        %3696 = vdwg.mxu0
        %3697 = vmatpush.msra.mxu0 0.0
        %3698 = vmatpush.msra.mxu0 0.0
        %3699 = vmatpush.msra.mxu0 0.0
        %3700 = vmatpush.msra.mxu0 0.0
        %3701 = vmatpush.msra.mxu0 0.0
        %3702 = vmatpush.msra.mxu0 0.0
        %3703 = vmatpush.msra.mxu0 0.0
        %3704 = vmatpush.msra.mxu0 0.0
        %3705 = vmatpush.msra.mxu0 0.0
        %3706 = vmatpush.msra.mxu0 0.0
        %3707 = vmatpush.msra.mxu0 0.0
        %3708 = vmatpush.msra.mxu0 0.0
        %3709 = vmatpush.msra.mxu0 %v848
        %3710 = vmatpush.msra.mxu0 %v844
        %3711 = vmatpush.msra.mxu0 %v840
        %3712 = vmatpush.msra.mxu0 %v836
        %3713 = vmatmul.f32.gmra.mxu0 %v3655
        %v3714 = vpop.f32.mrf.mxu0
        %v3715 = vadd.f32 0.0, %v3714
        %3716 = vdwg.mxu0
        %3717 = vmatpush.msra.mxu0 0.0
        %3718 = vmatpush.msra.mxu0 0.0
        %3719 = vmatpush.msra.mxu0 0.0
        %3720 = vmatpush.msra.mxu0 0.0
        %3721 = vmatpush.msra.mxu0 0.0
        %3722 = vmatpush.msra.mxu0 0.0
        %3723 = vmatpush.msra.mxu0 0.0
        %3724 = vmatpush.msra.mxu0 0.0
        %3725 = vmatpush.msra.mxu0 0.0
        %3726 = vmatpush.msra.mxu0 0.0
        %3727 = vmatpush.msra.mxu0 0.0
        %3728 = vmatpush.msra.mxu0 0.0
        %3729 = vmatpush.msra.mxu0 %v849
        %3730 = vmatpush.msra.mxu0 %v845
        %3731 = vmatpush.msra.mxu0 %v841
        %3732 = vmatpush.msra.mxu0 %v837
        %3733 = vmatmul.f32.gmra.mxu0 %v3655
        %v3734 = vpop.f32.mrf.mxu0
        %v3735 = vadd.f32 0.0, %v3734
        %3736 = vdwg.mxu0
        %v3737 = vadd.f32 %v3650, %v3675
        %v3738 = vadd.f32 %v3651, %v3695
        %v3739 = vadd.f32 %v3652, %v3715
        %v3740 = vadd.f32 %v3653, %v3735
        %v3741 = vxor.u32 %v3737, 2147483648
        %v3742 = vmul.f32 %v3741, 1.442695
        %v3743 = vpow.pop %v3742
        %v3744 = vadd.f32 %v3743, 1.0
        %v3745 = vrcp.pop %v3744
        %v3746 = vmul.f32 %v3744, %v3745
        %v3747 = vsub.f32 1.0, %v3746
        %v3748 = vmul.f32 %v3745, %v3747
        %v3749 = vadd.f32 %v3745, %v3748
        %vm3750 = vweird.f32 %v3744
        %vm3751 = vweird.f32 %v3745
        %vm3752 = vmor %vm3750, %vm3751
        %v3753 = vsel %vm3752, %v3745, %v3749
        %v3754 = vand.u32 2147483647, %v3744
        %vm3755 = vcmp.eq.f32.partialorder %v3754, 8.507059e+37
        %v3756 = vand.u32 %v3744, 2147483648
        %v3757 = vor.u32 1.1754944e-38, %v3756
        %v3758 = vsel %vm3755, %v3757, %v3753
        %v3759 = vmul.f32 1.0, %v3758
        %v3760 = vxor.u32 %v3738, 2147483648
        %v3761 = vmul.f32 %v3760, 1.442695
        %v3762 = vpow.pop %v3761
        %v3763 = vadd.f32 %v3762, 1.0
        %v3764 = vrcp.pop %v3763
        %v3765 = vmul.f32 %v3763, %v3764
        %v3766 = vsub.f32 1.0, %v3765
        %v3767 = vmul.f32 %v3764, %v3766
        %v3768 = vadd.f32 %v3764, %v3767
        %vm3769 = vweird.f32 %v3763
        %vm3770 = vweird.f32 %v3764
        %vm3771 = vmor %vm3769, %vm3770
        %v3772 = vsel %vm3771, %v3764, %v3768
        %v3773 = vand.u32 2147483647, %v3763
        %vm3774 = vcmp.eq.f32.partialorder %v3773, 8.507059e+37
        %v3775 = vand.u32 %v3763, 2147483648
        %v3776 = vor.u32 1.1754944e-38, %v3775
        %v3777 = vsel %vm3774, %v3776, %v3772
        %v3778 = vmul.f32 1.0, %v3777
        %v3779 = vxor.u32 %v3739, 2147483648
        %v3780 = vmul.f32 %v3779, 1.442695
        %v3781 = vpow.pop %v3780
        %v3782 = vadd.f32 %v3781, 1.0
        %v3783 = vrcp.pop %v3782
        %v3784 = vmul.f32 %v3782, %v3783
        %v3785 = vsub.f32 1.0, %v3784
        %v3786 = vmul.f32 %v3783, %v3785
        %v3787 = vadd.f32 %v3783, %v3786
        %vm3788 = vweird.f32 %v3782
        %vm3789 = vweird.f32 %v3783
        %vm3790 = vmor %vm3788, %vm3789
        %v3791 = vsel %vm3790, %v3783, %v3787
        %v3792 = vand.u32 2147483647, %v3782
        %vm3793 = vcmp.eq.f32.partialorder %v3792, 8.507059e+37
        %v3794 = vand.u32 %v3782, 2147483648
        %v3795 = vor.u32 1.1754944e-38, %v3794
        %v3796 = vsel %vm3793, %v3795, %v3791
        %v3797 = vmul.f32 1.0, %v3796
        %v3798 = vtanh.pop %v3740
        %v3799 = vmul.f32 %v3778, %v3343
        %v3800 = vmul.f32 %v3759, %v3798
        %v3801 = vadd.f32 %v3799, %v3800
        %v3802 = vtanh.pop %v3801
        %v3803 = vmul.f32 %v3797, %v3802
        %v3805 = vsel %vm746, %v3803, 0
        %3807 = vmatpush.msra.mxu0 0.0
        %3808 = vmatpush.msra.mxu0 0.0
        %3809 = vmatpush.msra.mxu0 0.0
        %3810 = vmatpush.msra.mxu0 0.0
        %3811 = vmatpush.msra.mxu0 0.0
        %3812 = vmatpush.msra.mxu0 0.0
        %3813 = vmatpush.msra.mxu0 0.0
        %3814 = vmatpush.msra.mxu0 0.0
        %3815 = vmatpush.msra.mxu0 %v1027
        %3816 = vmatpush.msra.mxu0 %v1023
        %3817 = vmatpush.msra.mxu0 %v1019
        %3818 = vmatpush.msra.mxu0 %v1015
        %3819 = vmatpush.msra.mxu0 %v1011
        %3820 = vmatpush.msra.mxu0 %v1007
        %3821 = vmatpush.msra.mxu0 %v1003
        %3822 = vmatpush.msra.mxu0 %v999
        %3823 = vmatmul.f32.gmra.mxu0 %v3805
        %v3824 = vpop.f32.mrf.mxu0
        %v3825 = vadd.f32 0.0, %v3824
        %3826 = vdwg.mxu0
        %3827 = vmatpush.msra.mxu0 0.0
        %3828 = vmatpush.msra.mxu0 0.0
        %3829 = vmatpush.msra.mxu0 0.0
        %3830 = vmatpush.msra.mxu0 0.0
        %3831 = vmatpush.msra.mxu0 0.0
        %3832 = vmatpush.msra.mxu0 0.0
        %3833 = vmatpush.msra.mxu0 0.0
        %3834 = vmatpush.msra.mxu0 0.0
        %3835 = vmatpush.msra.mxu0 %v1028
        %3836 = vmatpush.msra.mxu0 %v1024
        %3837 = vmatpush.msra.mxu0 %v1020
        %3838 = vmatpush.msra.mxu0 %v1016
        %3839 = vmatpush.msra.mxu0 %v1012
        %3840 = vmatpush.msra.mxu0 %v1008
        %3841 = vmatpush.msra.mxu0 %v1004
        %3842 = vmatpush.msra.mxu0 %v1000
        %3843 = vmatmul.f32.gmra.mxu0 %v3805
        %v3844 = vpop.f32.mrf.mxu0
        %v3845 = vadd.f32 0.0, %v3844
        %3846 = vdwg.mxu0
        %3847 = vmatpush.msra.mxu0 0.0
        %3848 = vmatpush.msra.mxu0 0.0
        %3849 = vmatpush.msra.mxu0 0.0
        %3850 = vmatpush.msra.mxu0 0.0
        %3851 = vmatpush.msra.mxu0 0.0
        %3852 = vmatpush.msra.mxu0 0.0
        %3853 = vmatpush.msra.mxu0 0.0
        %3854 = vmatpush.msra.mxu0 0.0
        %3855 = vmatpush.msra.mxu0 %v1029
        %3856 = vmatpush.msra.mxu0 %v1025
        %3857 = vmatpush.msra.mxu0 %v1021
        %3858 = vmatpush.msra.mxu0 %v1017
        %3859 = vmatpush.msra.mxu0 %v1013
        %3860 = vmatpush.msra.mxu0 %v1009
        %3861 = vmatpush.msra.mxu0 %v1005
        %3862 = vmatpush.msra.mxu0 %v1001
        %3863 = vmatmul.f32.gmra.mxu0 %v3805
        %v3864 = vpop.f32.mrf.mxu0
        %v3865 = vadd.f32 0.0, %v3864
        %3866 = vdwg.mxu0
        %3867 = vmatpush.msra.mxu0 0.0
        %3868 = vmatpush.msra.mxu0 0.0
        %3869 = vmatpush.msra.mxu0 0.0
        %3870 = vmatpush.msra.mxu0 0.0
        %3871 = vmatpush.msra.mxu0 0.0
        %3872 = vmatpush.msra.mxu0 0.0
        %3873 = vmatpush.msra.mxu0 0.0
        %3874 = vmatpush.msra.mxu0 0.0
        %3875 = vmatpush.msra.mxu0 %v1030
        %3876 = vmatpush.msra.mxu0 %v1026
        %3877 = vmatpush.msra.mxu0 %v1022
        %3878 = vmatpush.msra.mxu0 %v1018
        %3879 = vmatpush.msra.mxu0 %v1014
        %3880 = vmatpush.msra.mxu0 %v1010
        %3881 = vmatpush.msra.mxu0 %v1006
        %3882 = vmatpush.msra.mxu0 %v1002
        %3883 = vmatmul.f32.gmra.mxu0 %v3805
        %v3884 = vpop.f32.mrf.mxu0
        %v3885 = vadd.f32 0.0, %v3884
        %3886 = vdwg.mxu0
        %v3887 = vtanh.pop %v3825
        %v3888 = vtanh.pop %v3845
        %v3889 = vtanh.pop %v3865
        %v3890 = vtanh.pop %v3885
        %v3891 = vadd.f32 %v3887, %v3888
        %v3892 = vadd.f32 %v3891, %v3889
        %v3893 = vadd.f32 %v3892, %v3890
        %v3894 = vmul.f32 %v3893, 0.25
        %v3895 = vmul.f32 %v3894, 1.442695
        %v3896 = vpow.pop %v3895
        %v3897 = vsel %vm489, %v3896, 0.0
        %3898 = vadd.xlane.f32.xlu0 %v3897
        %v3899 = vpop.xlane.xlu0 %3898
        %v3900 = vrcp.pop %v3899
        %3902 = vrot.lane.b32.xlu0 %v3896, 96
        %v3903 = vpop.permute.xlu0 %3902
        %v3905 = vsel %vm204, %v3903, 0.0
        %3906 = vadd.xlane.f32.xlu0 %v3905
        %v3907 = vpop.xlane.xlu0 %3906
        %v3908 = vrcp.pop %v3907
        %3909 = vrot.lane.b32.xlu0 %v3896, 80
        %v3910 = vpop.permute.xlu0 %3909
        %v3912 = vsel %vm204, %v3910, 0.0
        %3913 = vadd.xlane.f32.xlu0 %v3912
        %v3914 = vpop.xlane.xlu0 %3913
        %v3915 = vrcp.pop %v3914
        %3916 = vrot.lane.b32.xlu0 %v3896, 64
        %v3917 = vpop.permute.xlu0 %3916
        %v3919 = vsel %vm489, %v3917, 0.0
        %3920 = vadd.xlane.f32.xlu0 %v3919
        %v3921 = vpop.xlane.xlu0 %3920
        %v3922 = vrcp.pop %v3921
        %v3923 = vmul.f32 %v3900, 0.7
        %v3924 = vmul.f32 %v3896, %v3923
        %v3925 = vmul.f32 %v3922, 0.3
        %v3926 = vmul.f32 %v3896, %v3925
        %3928 = vrot.lane.b32.xlu0 %v3926, 64
        %v3929 = vpop.permute.xlu0 %3928
        %v3931 = vadd.f32 %v3924, %v3929
        %v3932 = vmul.f32 %v3896, %v3908
        %v3933 = vmul.f32 %v3896, %v3915
        %v3934 = vsel %vm489, %v3931, %v3932
        %v3935 = vsel %vm1162, %v3934, %v3933
        %v3936 = vmul.f32 %v3803, %v3935
        %v3938 = vsel %vm746, %v3936, 0
        %3940 = vmatpush.msra.mxu0 0.0
        %3941 = vmatpush.msra.mxu0 0.0
        %3942 = vmatpush.msra.mxu0 0.0
        %3943 = vmatpush.msra.mxu0 0.0
        %3944 = vmatpush.msra.mxu0 0.0
        %3945 = vmatpush.msra.mxu0 0.0
        %3946 = vmatpush.msra.mxu0 0.0
        %3947 = vmatpush.msra.mxu0 0.0
        %3948 = vmatpush.msra.mxu0 %v1172
        %3949 = vmatpush.msra.mxu0 %v1171
        %3950 = vmatpush.msra.mxu0 %v1170
        %3951 = vmatpush.msra.mxu0 %v1169
        %3952 = vmatpush.msra.mxu0 %v1168
        %3953 = vmatpush.msra.mxu0 %v1167
        %3954 = vmatpush.msra.mxu0 %v1166
        %3955 = vmatpush.msra.mxu0 %v1165
        %3956 = vmatmul.f32.gmra.mxu0 %v3938
        %v3957 = vpop.f32.mrf.mxu0
        %v3958 = vadd.f32 %v161, %v3957
        %3959 = vdwg.mxu0
        %v3961 = vsel %vm746, %v3958, 0
        %3963 = vmatpush.msra.mxu0 0.0
        %3964 = vmatpush.msra.mxu0 0.0
        %3965 = vmatpush.msra.mxu0 0.0
        %3966 = vmatpush.msra.mxu0 0.0
        %3967 = vmatpush.msra.mxu0 0.0
        %3968 = vmatpush.msra.mxu0 0.0
        %3969 = vmatpush.msra.mxu0 0.0
        %3970 = vmatpush.msra.mxu0 0.0
        %3971 = vmatpush.msra.mxu0 %v1210
        %3972 = vmatpush.msra.mxu0 %v1208
        %3973 = vmatpush.msra.mxu0 %v1206
        %3974 = vmatpush.msra.mxu0 %v1204
        %3975 = vmatpush.msra.mxu0 %v1202
        %3976 = vmatpush.msra.mxu0 %v1200
        %3977 = vmatpush.msra.mxu0 %v1198
        %3978 = vmatpush.msra.mxu0 %v1196
        %3979 = vmatmul.f32.gmra.mxu0 %v3961
        %v3980 = vpop.f32.mrf.mxu0
        %v3981 = vadd.f32 %v165, %v3980
        %3982 = vdwg.mxu0
        %3983 = vmatpush.msra.mxu0 0.0
        %3984 = vmatpush.msra.mxu0 0.0
        %3985 = vmatpush.msra.mxu0 0.0
        %3986 = vmatpush.msra.mxu0 0.0
        %3987 = vmatpush.msra.mxu0 0.0
        %3988 = vmatpush.msra.mxu0 0.0
        %3989 = vmatpush.msra.mxu0 0.0
        %3990 = vmatpush.msra.mxu0 0.0
        %3991 = vmatpush.msra.mxu0 %v1211
        %3992 = vmatpush.msra.mxu0 %v1209
        %3993 = vmatpush.msra.mxu0 %v1207
        %3994 = vmatpush.msra.mxu0 %v1205
        %3995 = vmatpush.msra.mxu0 %v1203
        %3996 = vmatpush.msra.mxu0 %v1201
        %3997 = vmatpush.msra.mxu0 %v1199
        %3998 = vmatpush.msra.mxu0 %v1197
        %3999 = vmatmul.f32.gmra.mxu0 %v3961
        %v4000 = vpop.f32.mrf.mxu0
        %v4001 = vadd.f32 %v166, %v4000
        %4002 = vdwg.mxu0
        %v4003 = vxor.u32 %v4001, 2147483648
        %v4004 = vmul.f32 %v4003, 1.442695
        %v4005 = vpow.pop %v4004
        %v4006 = vadd.f32 %v4005, 1.0
        %v4007 = vrcp.pop %v4006
        %v4008 = vmul.f32 %v4006, %v4007
        %v4009 = vsub.f32 1.0, %v4008
        %v4010 = vmul.f32 %v4007, %v4009
        %v4011 = vadd.f32 %v4007, %v4010
        %vm4012 = vweird.f32 %v4006
        %vm4013 = vweird.f32 %v4007
        %vm4014 = vmor %vm4012, %vm4013
        %v4015 = vsel %vm4014, %v4007, %v4011
        %v4016 = vand.u32 2147483647, %v4006
        %vm4017 = vcmp.eq.f32.partialorder %v4016, 8.507059e+37
        %v4018 = vand.u32 %v4006, 2147483648
        %v4019 = vor.u32 1.1754944e-38, %v4018
        %v4020 = vsel %vm4017, %v4019, %v4015
        %v4021 = vmul.f32 1.0, %v4020
        %v4022 = vtanh.pop %v3981
        %v4023 = vmul.f32 %v4021, %v4022
        %v4024 = vld [vmem:[#allocation2 + $0xe0] sm:$0xff]
        %v4025 = vld [vmem:[#allocation2 + $0xe8] sm:$0xff]
        %v4026 = vld [vmem:[#allocation2 + $0xf0] sm:$0xff]
        %v4027 = vld [vmem:[#allocation2 + $0xf8] sm:$0xff]
        %4028 = vmatpush.msra.mxu0 0.0
        %4029 = vmatpush.msra.mxu0 0.0
        %4030 = vmatpush.msra.mxu0 0.0
        %4031 = vmatpush.msra.mxu0 0.0
        %4032 = vmatpush.msra.mxu0 0.0
        %4033 = vmatpush.msra.mxu0 0.0
        %4034 = vmatpush.msra.mxu0 0.0
        %4035 = vmatpush.msra.mxu0 0.0
        %4036 = vmatpush.msra.mxu0 %v742
        %4037 = vmatpush.msra.mxu0 %v738
        %4038 = vmatpush.msra.mxu0 %v734
        %4039 = vmatpush.msra.mxu0 %v730
        %4040 = vmatpush.msra.mxu0 %v726
        %4041 = vmatpush.msra.mxu0 %v722
        %4042 = vmatpush.msra.mxu0 %v718
        %4043 = vmatpush.msra.mxu0 %v714
        %4044 = vmatmul.f32.gmra.mxu0 %v3805
        %v4045 = vpop.f32.mrf.mxu0
        %v4046 = vadd.f32 0.0, %v4045
        %4047 = vdwg.mxu0
        %4048 = vmatpush.msra.mxu0 0.0
        %4049 = vmatpush.msra.mxu0 0.0
        %4050 = vmatpush.msra.mxu0 0.0
        %4051 = vmatpush.msra.mxu0 0.0
        %4052 = vmatpush.msra.mxu0 0.0
        %4053 = vmatpush.msra.mxu0 0.0
        %4054 = vmatpush.msra.mxu0 0.0
        %4055 = vmatpush.msra.mxu0 0.0
        %4056 = vmatpush.msra.mxu0 %v743
        %4057 = vmatpush.msra.mxu0 %v739
        %4058 = vmatpush.msra.mxu0 %v735
        %4059 = vmatpush.msra.mxu0 %v731
        %4060 = vmatpush.msra.mxu0 %v727
        %4061 = vmatpush.msra.mxu0 %v723
        %4062 = vmatpush.msra.mxu0 %v719
        %4063 = vmatpush.msra.mxu0 %v715
        %4064 = vmatmul.f32.gmra.mxu0 %v3805
        %v4065 = vpop.f32.mrf.mxu0
        %v4066 = vadd.f32 0.0, %v4065
        %4067 = vdwg.mxu0
        %4068 = vmatpush.msra.mxu0 0.0
        %4069 = vmatpush.msra.mxu0 0.0
        %4070 = vmatpush.msra.mxu0 0.0
        %4071 = vmatpush.msra.mxu0 0.0
        %4072 = vmatpush.msra.mxu0 0.0
        %4073 = vmatpush.msra.mxu0 0.0
        %4074 = vmatpush.msra.mxu0 0.0
        %4075 = vmatpush.msra.mxu0 0.0
        %4076 = vmatpush.msra.mxu0 %v744
        %4077 = vmatpush.msra.mxu0 %v740
        %4078 = vmatpush.msra.mxu0 %v736
        %4079 = vmatpush.msra.mxu0 %v732
        %4080 = vmatpush.msra.mxu0 %v728
        %4081 = vmatpush.msra.mxu0 %v724
        %4082 = vmatpush.msra.mxu0 %v720
        %4083 = vmatpush.msra.mxu0 %v716
        %4084 = vmatmul.f32.gmra.mxu0 %v3805
        %v4085 = vpop.f32.mrf.mxu0
        %v4086 = vadd.f32 0.0, %v4085
        %4087 = vdwg.mxu0
        %4088 = vmatpush.msra.mxu0 0.0
        %4089 = vmatpush.msra.mxu0 0.0
        %4090 = vmatpush.msra.mxu0 0.0
        %4091 = vmatpush.msra.mxu0 0.0
        %4092 = vmatpush.msra.mxu0 0.0
        %4093 = vmatpush.msra.mxu0 0.0
        %4094 = vmatpush.msra.mxu0 0.0
        %4095 = vmatpush.msra.mxu0 0.0
        %4096 = vmatpush.msra.mxu0 %v745
        %4097 = vmatpush.msra.mxu0 %v741
        %4098 = vmatpush.msra.mxu0 %v737
        %4099 = vmatpush.msra.mxu0 %v733
        %4100 = vmatpush.msra.mxu0 %v729
        %4101 = vmatpush.msra.mxu0 %v725
        %4102 = vmatpush.msra.mxu0 %v721
        %4103 = vmatpush.msra.mxu0 %v717
        %4104 = vmatmul.f32.gmra.mxu0 %v3805
        %v4105 = vpop.f32.mrf.mxu0
        %v4106 = vadd.f32 0.0, %v4105
        %4107 = vdwg.mxu0
        %v4108 = vadd.f32 %v4024, %v4046
        %v4109 = vadd.f32 %v4025, %v4066
        %v4110 = vadd.f32 %v4026, %v4086
        %v4111 = vadd.f32 %v4027, %v4106
        %v4113 = vsel %vm489, %v4023, 0
        %4115 = vmatpush.msra.mxu0 0.0
        %4116 = vmatpush.msra.mxu0 0.0
        %4117 = vmatpush.msra.mxu0 0.0
        %4118 = vmatpush.msra.mxu0 0.0
        %4119 = vmatpush.msra.mxu0 0.0
        %4120 = vmatpush.msra.mxu0 0.0
        %4121 = vmatpush.msra.mxu0 0.0
        %4122 = vmatpush.msra.mxu0 0.0
        %4123 = vmatpush.msra.mxu0 0.0
        %4124 = vmatpush.msra.mxu0 0.0
        %4125 = vmatpush.msra.mxu0 0.0
        %4126 = vmatpush.msra.mxu0 0.0
        %4127 = vmatpush.msra.mxu0 %v846
        %4128 = vmatpush.msra.mxu0 %v842
        %4129 = vmatpush.msra.mxu0 %v838
        %4130 = vmatpush.msra.mxu0 %v834
        %4131 = vmatmul.f32.gmra.mxu0 %v4113
        %v4132 = vpop.f32.mrf.mxu0
        %v4133 = vadd.f32 0.0, %v4132
        %4134 = vdwg.mxu0
        %4135 = vmatpush.msra.mxu0 0.0
        %4136 = vmatpush.msra.mxu0 0.0
        %4137 = vmatpush.msra.mxu0 0.0
        %4138 = vmatpush.msra.mxu0 0.0
        %4139 = vmatpush.msra.mxu0 0.0
        %4140 = vmatpush.msra.mxu0 0.0
        %4141 = vmatpush.msra.mxu0 0.0
        %4142 = vmatpush.msra.mxu0 0.0
        %4143 = vmatpush.msra.mxu0 0.0
        %4144 = vmatpush.msra.mxu0 0.0
        %4145 = vmatpush.msra.mxu0 0.0
        %4146 = vmatpush.msra.mxu0 0.0
        %4147 = vmatpush.msra.mxu0 %v847
        %4148 = vmatpush.msra.mxu0 %v843
        %4149 = vmatpush.msra.mxu0 %v839
        %4150 = vmatpush.msra.mxu0 %v835
        %4151 = vmatmul.f32.gmra.mxu0 %v4113
        %v4152 = vpop.f32.mrf.mxu0
        %v4153 = vadd.f32 0.0, %v4152
        %4154 = vdwg.mxu0
        %4155 = vmatpush.msra.mxu0 0.0
        %4156 = vmatpush.msra.mxu0 0.0
        %4157 = vmatpush.msra.mxu0 0.0
        %4158 = vmatpush.msra.mxu0 0.0
        %4159 = vmatpush.msra.mxu0 0.0
        %4160 = vmatpush.msra.mxu0 0.0
        %4161 = vmatpush.msra.mxu0 0.0
        %4162 = vmatpush.msra.mxu0 0.0
        %4163 = vmatpush.msra.mxu0 0.0
        %4164 = vmatpush.msra.mxu0 0.0
        %4165 = vmatpush.msra.mxu0 0.0
        %4166 = vmatpush.msra.mxu0 0.0
        %4167 = vmatpush.msra.mxu0 %v848
        %4168 = vmatpush.msra.mxu0 %v844
        %4169 = vmatpush.msra.mxu0 %v840
        %4170 = vmatpush.msra.mxu0 %v836
        %4171 = vmatmul.f32.gmra.mxu0 %v4113
        %v4172 = vpop.f32.mrf.mxu0
        %v4173 = vadd.f32 0.0, %v4172
        %4174 = vdwg.mxu0
        %4175 = vmatpush.msra.mxu0 0.0
        %4176 = vmatpush.msra.mxu0 0.0
        %4177 = vmatpush.msra.mxu0 0.0
        %4178 = vmatpush.msra.mxu0 0.0
        %4179 = vmatpush.msra.mxu0 0.0
        %4180 = vmatpush.msra.mxu0 0.0
        %4181 = vmatpush.msra.mxu0 0.0
        %4182 = vmatpush.msra.mxu0 0.0
        %4183 = vmatpush.msra.mxu0 0.0
        %4184 = vmatpush.msra.mxu0 0.0
        %4185 = vmatpush.msra.mxu0 0.0
        %4186 = vmatpush.msra.mxu0 0.0
        %4187 = vmatpush.msra.mxu0 %v849
        %4188 = vmatpush.msra.mxu0 %v845
        %4189 = vmatpush.msra.mxu0 %v841
        %4190 = vmatpush.msra.mxu0 %v837
        %4191 = vmatmul.f32.gmra.mxu0 %v4113
        %v4192 = vpop.f32.mrf.mxu0
        %v4193 = vadd.f32 0.0, %v4192
        %4194 = vdwg.mxu0
        %v4195 = vadd.f32 %v4108, %v4133
        %v4196 = vadd.f32 %v4109, %v4153
        %v4197 = vadd.f32 %v4110, %v4173
        %v4198 = vadd.f32 %v4111, %v4193
        %v4199 = vxor.u32 %v4195, 2147483648
        %v4200 = vmul.f32 %v4199, 1.442695
        %v4201 = vpow.pop %v4200
        %v4202 = vadd.f32 %v4201, 1.0
        %v4203 = vrcp.pop %v4202
        %v4204 = vmul.f32 %v4202, %v4203
        %v4205 = vsub.f32 1.0, %v4204
        %v4206 = vmul.f32 %v4203, %v4205
        %v4207 = vadd.f32 %v4203, %v4206
        %vm4208 = vweird.f32 %v4202
        %vm4209 = vweird.f32 %v4203
        %vm4210 = vmor %vm4208, %vm4209
        %v4211 = vsel %vm4210, %v4203, %v4207
        %v4212 = vand.u32 2147483647, %v4202
        %vm4213 = vcmp.eq.f32.partialorder %v4212, 8.507059e+37
        %v4214 = vand.u32 %v4202, 2147483648
        %v4215 = vor.u32 1.1754944e-38, %v4214
        %v4216 = vsel %vm4213, %v4215, %v4211
        %v4217 = vmul.f32 1.0, %v4216
        %v4218 = vxor.u32 %v4196, 2147483648
        %v4219 = vmul.f32 %v4218, 1.442695
        %v4220 = vpow.pop %v4219
        %v4221 = vadd.f32 %v4220, 1.0
        %v4222 = vrcp.pop %v4221
        %v4223 = vmul.f32 %v4221, %v4222
        %v4224 = vsub.f32 1.0, %v4223
        %v4225 = vmul.f32 %v4222, %v4224
        %v4226 = vadd.f32 %v4222, %v4225
        %vm4227 = vweird.f32 %v4221
        %vm4228 = vweird.f32 %v4222
        %vm4229 = vmor %vm4227, %vm4228
        %v4230 = vsel %vm4229, %v4222, %v4226
        %v4231 = vand.u32 2147483647, %v4221
        %vm4232 = vcmp.eq.f32.partialorder %v4231, 8.507059e+37
        %v4233 = vand.u32 %v4221, 2147483648
        %v4234 = vor.u32 1.1754944e-38, %v4233
        %v4235 = vsel %vm4232, %v4234, %v4230
        %v4236 = vmul.f32 1.0, %v4235
        %v4237 = vxor.u32 %v4197, 2147483648
        %v4238 = vmul.f32 %v4237, 1.442695
        %v4239 = vpow.pop %v4238
        %v4240 = vadd.f32 %v4239, 1.0
        %v4241 = vrcp.pop %v4240
        %v4242 = vmul.f32 %v4240, %v4241
        %v4243 = vsub.f32 1.0, %v4242
        %v4244 = vmul.f32 %v4241, %v4243
        %v4245 = vadd.f32 %v4241, %v4244
        %vm4246 = vweird.f32 %v4240
        %vm4247 = vweird.f32 %v4241
        %vm4248 = vmor %vm4246, %vm4247
        %v4249 = vsel %vm4248, %v4241, %v4245
        %v4250 = vand.u32 2147483647, %v4240
        %vm4251 = vcmp.eq.f32.partialorder %v4250, 8.507059e+37
        %v4252 = vand.u32 %v4240, 2147483648
        %v4253 = vor.u32 1.1754944e-38, %v4252
        %v4254 = vsel %vm4251, %v4253, %v4249
        %v4255 = vmul.f32 1.0, %v4254
        %v4256 = vtanh.pop %v4198
        %v4257 = vmul.f32 %v4236, %v3801
        %v4258 = vmul.f32 %v4217, %v4256
        %v4259 = vadd.f32 %v4257, %v4258
        %v4260 = vtanh.pop %v4259
        %v4261 = vmul.f32 %v4255, %v4260
        %v4263 = vsel %vm746, %v4261, 0
        %4265 = vmatpush.msra.mxu0 0.0
        %4266 = vmatpush.msra.mxu0 0.0
        %4267 = vmatpush.msra.mxu0 0.0
        %4268 = vmatpush.msra.mxu0 0.0
        %4269 = vmatpush.msra.mxu0 0.0
        %4270 = vmatpush.msra.mxu0 0.0
        %4271 = vmatpush.msra.mxu0 0.0
        %4272 = vmatpush.msra.mxu0 0.0
        %4273 = vmatpush.msra.mxu0 %v1027
        %4274 = vmatpush.msra.mxu0 %v1023
        %4275 = vmatpush.msra.mxu0 %v1019
        %4276 = vmatpush.msra.mxu0 %v1015
        %4277 = vmatpush.msra.mxu0 %v1011
        %4278 = vmatpush.msra.mxu0 %v1007
        %4279 = vmatpush.msra.mxu0 %v1003
        %4280 = vmatpush.msra.mxu0 %v999
        %4281 = vmatmul.f32.gmra.mxu0 %v4263
        %v4282 = vpop.f32.mrf.mxu0
        %v4283 = vadd.f32 0.0, %v4282
        %4284 = vdwg.mxu0
        %4285 = vmatpush.msra.mxu0 0.0
        %4286 = vmatpush.msra.mxu0 0.0
        %4287 = vmatpush.msra.mxu0 0.0
        %4288 = vmatpush.msra.mxu0 0.0
        %4289 = vmatpush.msra.mxu0 0.0
        %4290 = vmatpush.msra.mxu0 0.0
        %4291 = vmatpush.msra.mxu0 0.0
        %4292 = vmatpush.msra.mxu0 0.0
        %4293 = vmatpush.msra.mxu0 %v1028
        %4294 = vmatpush.msra.mxu0 %v1024
        %4295 = vmatpush.msra.mxu0 %v1020
        %4296 = vmatpush.msra.mxu0 %v1016
        %4297 = vmatpush.msra.mxu0 %v1012
        %4298 = vmatpush.msra.mxu0 %v1008
        %4299 = vmatpush.msra.mxu0 %v1004
        %4300 = vmatpush.msra.mxu0 %v1000
        %4301 = vmatmul.f32.gmra.mxu0 %v4263
        %v4302 = vpop.f32.mrf.mxu0
        %v4303 = vadd.f32 0.0, %v4302
        %4304 = vdwg.mxu0
        %4305 = vmatpush.msra.mxu0 0.0
        %4306 = vmatpush.msra.mxu0 0.0
        %4307 = vmatpush.msra.mxu0 0.0
        %4308 = vmatpush.msra.mxu0 0.0
        %4309 = vmatpush.msra.mxu0 0.0
        %4310 = vmatpush.msra.mxu0 0.0
        %4311 = vmatpush.msra.mxu0 0.0
        %4312 = vmatpush.msra.mxu0 0.0
        %4313 = vmatpush.msra.mxu0 %v1029
        %4314 = vmatpush.msra.mxu0 %v1025
        %4315 = vmatpush.msra.mxu0 %v1021
        %4316 = vmatpush.msra.mxu0 %v1017
        %4317 = vmatpush.msra.mxu0 %v1013
        %4318 = vmatpush.msra.mxu0 %v1009
        %4319 = vmatpush.msra.mxu0 %v1005
        %4320 = vmatpush.msra.mxu0 %v1001
        %4321 = vmatmul.f32.gmra.mxu0 %v4263
        %v4322 = vpop.f32.mrf.mxu0
        %v4323 = vadd.f32 0.0, %v4322
        %4324 = vdwg.mxu0
        %4325 = vmatpush.msra.mxu0 0.0
        %4326 = vmatpush.msra.mxu0 0.0
        %4327 = vmatpush.msra.mxu0 0.0
        %4328 = vmatpush.msra.mxu0 0.0
        %4329 = vmatpush.msra.mxu0 0.0
        %4330 = vmatpush.msra.mxu0 0.0
        %4331 = vmatpush.msra.mxu0 0.0
        %4332 = vmatpush.msra.mxu0 0.0
        %4333 = vmatpush.msra.mxu0 %v1030
        %4334 = vmatpush.msra.mxu0 %v1026
        %4335 = vmatpush.msra.mxu0 %v1022
        %4336 = vmatpush.msra.mxu0 %v1018
        %4337 = vmatpush.msra.mxu0 %v1014
        %4338 = vmatpush.msra.mxu0 %v1010
        %4339 = vmatpush.msra.mxu0 %v1006
        %4340 = vmatpush.msra.mxu0 %v1002
        %4341 = vmatmul.f32.gmra.mxu0 %v4263
        %v4342 = vpop.f32.mrf.mxu0
        %v4343 = vadd.f32 0.0, %v4342
        %4344 = vdwg.mxu0
        %v4345 = vtanh.pop %v4283
        %v4346 = vtanh.pop %v4303
        %v4347 = vtanh.pop %v4323
        %v4348 = vtanh.pop %v4343
        %v4349 = vadd.f32 %v4345, %v4346
        %v4350 = vadd.f32 %v4349, %v4347
        %v4351 = vadd.f32 %v4350, %v4348
        %v4352 = vmul.f32 %v4351, 0.25
        %v4353 = vmul.f32 %v4352, 1.442695
        %v4354 = vpow.pop %v4353
        %v4355 = vsel %vm489, %v4354, 0.0
        %4356 = vadd.xlane.f32.xlu0 %v4355
        %v4357 = vpop.xlane.xlu0 %4356
        %v4358 = vrcp.pop %v4357
        %4360 = vrot.lane.b32.xlu0 %v4354, 96
        %v4361 = vpop.permute.xlu0 %4360
        %v4363 = vsel %vm204, %v4361, 0.0
        %4364 = vadd.xlane.f32.xlu0 %v4363
        %v4365 = vpop.xlane.xlu0 %4364
        %v4366 = vrcp.pop %v4365
        %4367 = vrot.lane.b32.xlu0 %v4354, 80
        %v4368 = vpop.permute.xlu0 %4367
        %v4370 = vsel %vm204, %v4368, 0.0
        %4371 = vadd.xlane.f32.xlu0 %v4370
        %v4372 = vpop.xlane.xlu0 %4371
        %v4373 = vrcp.pop %v4372
        %4374 = vrot.lane.b32.xlu0 %v4354, 64
        %v4375 = vpop.permute.xlu0 %4374
        %v4377 = vsel %vm489, %v4375, 0.0
        %4378 = vadd.xlane.f32.xlu0 %v4377
        %v4379 = vpop.xlane.xlu0 %4378
        %v4380 = vrcp.pop %v4379
        %v4381 = vmul.f32 %v4358, 0.7
        %v4382 = vmul.f32 %v4354, %v4381
        %v4383 = vmul.f32 %v4380, 0.3
        %v4384 = vmul.f32 %v4354, %v4383
        %4386 = vrot.lane.b32.xlu0 %v4384, 64
        %v4387 = vpop.permute.xlu0 %4386
        %v4389 = vadd.f32 %v4382, %v4387
        %v4390 = vmul.f32 %v4354, %v4366
        %v4391 = vmul.f32 %v4354, %v4373
        %v4392 = vsel %vm489, %v4389, %v4390
        %v4393 = vsel %vm1162, %v4392, %v4391
        %v4394 = vmul.f32 %v4261, %v4393
        %v4396 = vsel %vm746, %v4394, 0
        %4398 = vmatpush.msra.mxu0 0.0
        %4399 = vmatpush.msra.mxu0 0.0
        %4400 = vmatpush.msra.mxu0 0.0
        %4401 = vmatpush.msra.mxu0 0.0
        %4402 = vmatpush.msra.mxu0 0.0
        %4403 = vmatpush.msra.mxu0 0.0
        %4404 = vmatpush.msra.mxu0 0.0
        %4405 = vmatpush.msra.mxu0 0.0
        %4406 = vmatpush.msra.mxu0 %v1172
        %4407 = vmatpush.msra.mxu0 %v1171
        %4408 = vmatpush.msra.mxu0 %v1170
        %4409 = vmatpush.msra.mxu0 %v1169
        %4410 = vmatpush.msra.mxu0 %v1168
        %4411 = vmatpush.msra.mxu0 %v1167
        %4412 = vmatpush.msra.mxu0 %v1166
        %4413 = vmatpush.msra.mxu0 %v1165
        %4414 = vmatmul.f32.gmra.mxu0 %v4396
        %v4415 = vpop.f32.mrf.mxu0
        %v4416 = vadd.f32 %v161, %v4415
        %4417 = vdwg.mxu0
        %v4419 = vsel %vm746, %v4416, 0
        %4421 = vmatpush.msra.mxu0 0.0
        %4422 = vmatpush.msra.mxu0 0.0
        %4423 = vmatpush.msra.mxu0 0.0
        %4424 = vmatpush.msra.mxu0 0.0
        %4425 = vmatpush.msra.mxu0 0.0
        %4426 = vmatpush.msra.mxu0 0.0
        %4427 = vmatpush.msra.mxu0 0.0
        %4428 = vmatpush.msra.mxu0 0.0
        %4429 = vmatpush.msra.mxu0 %v1210
        %4430 = vmatpush.msra.mxu0 %v1208
        %4431 = vmatpush.msra.mxu0 %v1206
        %4432 = vmatpush.msra.mxu0 %v1204
        %4433 = vmatpush.msra.mxu0 %v1202
        %4434 = vmatpush.msra.mxu0 %v1200
        %4435 = vmatpush.msra.mxu0 %v1198
        %4436 = vmatpush.msra.mxu0 %v1196
        %4437 = vmatmul.f32.gmra.mxu0 %v4419
        %v4438 = vpop.f32.mrf.mxu0
        %v4439 = vadd.f32 %v165, %v4438
        %4440 = vdwg.mxu0
        %4441 = vmatpush.msra.mxu0 0.0
        %4442 = vmatpush.msra.mxu0 0.0
        %4443 = vmatpush.msra.mxu0 0.0
        %4444 = vmatpush.msra.mxu0 0.0
        %4445 = vmatpush.msra.mxu0 0.0
        %4446 = vmatpush.msra.mxu0 0.0
        %4447 = vmatpush.msra.mxu0 0.0
        %4448 = vmatpush.msra.mxu0 0.0
        %4449 = vmatpush.msra.mxu0 %v1211
        %4450 = vmatpush.msra.mxu0 %v1209
        %4451 = vmatpush.msra.mxu0 %v1207
        %4452 = vmatpush.msra.mxu0 %v1205
        %4453 = vmatpush.msra.mxu0 %v1203
        %4454 = vmatpush.msra.mxu0 %v1201
        %4455 = vmatpush.msra.mxu0 %v1199
        %4456 = vmatpush.msra.mxu0 %v1197
        %4457 = vmatmul.f32.gmra.mxu0 %v4419
        %v4458 = vpop.f32.mrf.mxu0
        %v4459 = vadd.f32 %v166, %v4458
        %4460 = vdwg.mxu0
        %v4461 = vxor.u32 %v4459, 2147483648
        %v4462 = vmul.f32 %v4461, 1.442695
        %v4463 = vpow.pop %v4462
        %v4464 = vadd.f32 %v4463, 1.0
        %v4465 = vrcp.pop %v4464
        %v4466 = vmul.f32 %v4464, %v4465
        %v4467 = vsub.f32 1.0, %v4466
        %v4468 = vmul.f32 %v4465, %v4467
        %v4469 = vadd.f32 %v4465, %v4468
        %vm4470 = vweird.f32 %v4464
        %vm4471 = vweird.f32 %v4465
        %vm4472 = vmor %vm4470, %vm4471
        %v4473 = vsel %vm4472, %v4465, %v4469
        %v4474 = vand.u32 2147483647, %v4464
        %vm4475 = vcmp.eq.f32.partialorder %v4474, 8.507059e+37
        %v4476 = vand.u32 %v4464, 2147483648
        %v4477 = vor.u32 1.1754944e-38, %v4476
        %v4478 = vsel %vm4475, %v4477, %v4473
        %v4479 = vmul.f32 1.0, %v4478
        %v4480 = vtanh.pop %v4439
        %v4481 = vmul.f32 %v4479, %v4480
        %v4482 = vld [vmem:[#allocation3 + $0x484] ss:$0 sm:$0xff]
        %v4483 = vld [vmem:[#allocation3 + $0x485] ss:$0 sm:$0xff]
        %v4484 = vld [vmem:[#allocation3 + $0x400] sm:$0xff]
        %v4485 = vld [vmem:[#allocation3 + $0x420] sm:$0xff]
        %v4486 = vld [vmem:[#allocation3 + $0x440] sm:$0xff]
        %v4487 = vld [vmem:[#allocation3 + $0x460] sm:$0xff]
        %v4489 = vsel %vm489, %v4481, 0
        %4491 = vmatpush.msra.mxu0 0.0
        %4492 = vmatpush.msra.mxu0 0.0
        %4493 = vmatpush.msra.mxu0 0.0
        %4494 = vmatpush.msra.mxu0 0.0
        %4495 = vmatpush.msra.mxu0 0.0
        %4496 = vmatpush.msra.mxu0 0.0
        %4497 = vmatpush.msra.mxu0 0.0
        %4498 = vmatpush.msra.mxu0 0.0
        %4499 = vmatpush.msra.mxu0 0.0
        %4500 = vmatpush.msra.mxu0 0.0
        %4501 = vmatpush.msra.mxu0 0.0
        %4502 = vmatpush.msra.mxu0 0.0
        %4503 = vmatpush.msra.mxu0 %v4487
        %4504 = vmatpush.msra.mxu0 %v4486
        %4505 = vmatpush.msra.mxu0 %v4485
        %4506 = vmatpush.msra.mxu0 %v4484
        %4507 = vmatmul.f32.gmra.mxu0 %v4489
        %v4508 = vpop.f32.mrf.mxu0
        %v4509 = vadd.f32 %v4482, %v4508
        %4510 = vdwg.mxu0
        %v4511 = vmax.f32 %v4509, 0.0
        %v4512 = vld [vmem:[#allocation3 + $0x408] sm:$0xff]
        %v4513 = vld [vmem:[#allocation3 + $0x428] sm:$0xff]
        %v4515 = vsel %vm204, %v4511, 0
        %4517 = vmatpush.msra.mxu0 0.0
        %4518 = vmatpush.msra.mxu0 0.0
        %4519 = vmatpush.msra.mxu0 0.0
        %4520 = vmatpush.msra.mxu0 0.0
        %4521 = vmatpush.msra.mxu0 0.0
        %4522 = vmatpush.msra.mxu0 0.0
        %4523 = vmatpush.msra.mxu0 0.0
        %4524 = vmatpush.msra.mxu0 0.0
        %4525 = vmatpush.msra.mxu0 0.0
        %4526 = vmatpush.msra.mxu0 0.0
        %4527 = vmatpush.msra.mxu0 0.0
        %4528 = vmatpush.msra.mxu0 0.0
        %4529 = vmatpush.msra.mxu0 0.0
        %4530 = vmatpush.msra.mxu0 0.0
        %4531 = vmatpush.msra.mxu0 %v4513
        %4532 = vmatpush.msra.mxu0 %v4512
        %4533 = vmatmul.f32.gmra.mxu0 %v4515
        %v4534 = vpop.f32.mrf.mxu0
        %v4535 = vadd.f32 %v4483, %v4534
        %4536 = vdwg.mxu0
        %vm4537 = vcmask 7168
        %4538 = vst.msk [vmem:[%s160] sm:$0xff] %vm4537, %v4535
        %p4539 = scmp.lt.s32.totalorder %s14, 1
        %s4540 = scalar_select %p4539, %s14, 1
        %s4541 = smul.addr %s4540, 8
        %s4542 = scalar_lea.vmem %s2, %s4541
        // Predicated region
        $region33: #{tpu_custom_call.1} parent=27 // pred_check
          %p4543 = pneg %p79
        $region34: #{tpu_custom_call.1} parent=27 // pred_check_branch
          %4545 = sbr.rel (%p4543) target = $region36
        $region35: #{tpu_custom_call.1} parent=27 // pred_region
          _
        $region36: #{tpu_custom_call.1} parent=27 // pred_fallthru
          _
      $region28: #{tpu_custom_call.1} parent=5 // pred_fallthru
        _
      %p4546 = scmp.le.s32.totalorder 2, %s9
      // Predicated region
      $region37: #{tpu_custom_call.1} parent=5 // pred_check
        %p4547 = pneg %p4546
      $region38: #{tpu_custom_call.1} parent=5 // pred_check_branch
        %4549 = sbr.rel (%p4547) target = $region40
      $region39: #{tpu_custom_call.1} parent=5 // pred_region
        %s4550 = ssub.s32 %s9, 2
        // Predicated region
        $region41: #{tpu_custom_call.1} parent=39 // pred_check
          %p4551 = pneg %p85
        $region42: #{tpu_custom_call.1} parent=39 // pred_check_branch
          %4553 = sbr.rel (%p4551) target = $region44
        $region43: #{tpu_custom_call.1} parent=39 // pred_region
          %p4554 = scmp.lt.s32.totalorder %s15, 1
          %s4555 = scalar_select %p4554, %s15, 1
          %s4556 = smul.addr %s4555, 8
          %s4557 = scalar_lea.vmem %s2, %s4556
        $region44: #{tpu_custom_call.1} parent=39 // pred_fallthru
          _
      $region40: #{tpu_custom_call.1} parent=5 // pred_fallthru
        _
    $region6: #{tpu_custom_call.1} parent=1 // loop_footer
      %s13 = sadd.s32 1, %s9
    $region7: #{tpu_custom_call.1} parent=1 // loop_footer_branch
      %8 = sbr.rel target = $region3
    $region8: #{tpu_custom_call.1} parent=1 // loop_exit
      _
    %4558 = vsyncpa [#allocation4], 1
    %s4559 = scalar_lea.sflag [#allocation4], 1
    %4560 = vsyncpa %s4559, 1

</llo_original>
